<compile_context>
chip_gen: v7x
topology: tpu7x:2x2x1
jax: 0.10.0
libtpu: 0.0.40
codegen_flags: <defaults>
</compile_context>

<pallas_src>
import functools

import jax
import jax.numpy as jnp
from jax.experimental import pallas as pl
from jax.experimental.pallas import tpu as pltpu

_EPS = 1e-5


# ----------------------------------------------------------------------------
# In-kernel helpers
# ----------------------------------------------------------------------------

def _layer_norm(y, g, b, eps):
    mean = jnp.mean(y, axis=-1, keepdims=True)
    var = jnp.mean(jnp.square(y - mean), axis=-1, keepdims=True)
    return (y - mean) * jax.lax.rsqrt(var + eps) * g + b


# ----------------------------------------------------------------------------
# Fused attention block: QKV proj + per-head SDPA + out proj + residual + LN
# ----------------------------------------------------------------------------

def _attn_block_kernel(xq_ref, xkv_ref, wq_ref, bq_ref, wkv_ref, bkv_ref,
                       wo_ref, bo_ref, g_ref, beta_ref, o_ref,
                       *, nheads, causal, scale, eps):
    xq = xq_ref[0]           # (Sq, E)
    xkv = xkv_ref[0]         # (Sk, E)
    Sq, E = xq.shape
    Sk = xkv.shape[0]
    dh = E // nheads

    q = jnp.dot(xq, wq_ref[...], preferred_element_type=jnp.float32) + bq_ref[...]
    kv = jnp.dot(xkv, wkv_ref[...], preferred_element_type=jnp.float32) + bkv_ref[...]
    k = kv[:, :E]
    v = kv[:, E:]
    wo = wo_ref[...]

    if causal:
        row = jax.lax.broadcasted_iota(jnp.int32, (Sq, Sk), 0)
        col = jax.lax.broadcasted_iota(jnp.int32, (Sq, Sk), 1)
        allowed = col <= row

    # Per-head attention; head-merge + output projection folded into the loop:
    #   concat_h(o_h) @ Wo == sum_h o_h @ Wo[h*dh:(h+1)*dh, :]
    acc = jnp.zeros((Sq, E), jnp.float32)
    for h in range(nheads):
        qh = q[:, h * dh:(h + 1) * dh]
        kh = k[:, h * dh:(h + 1) * dh]
        vh = v[:, h * dh:(h + 1) * dh]
        s = jnp.dot(qh, kh.T, preferred_element_type=jnp.float32) * scale
        if causal:
            s = jnp.where(allowed, s, -jnp.inf)
        s = s - jnp.max(s, axis=-1, keepdims=True)
        p = jnp.exp(s)
        p = p * pl.reciprocal(jnp.sum(p, axis=-1, keepdims=True), approx=True)
        oh = jnp.dot(p, vh, preferred_element_type=jnp.float32)
        acc = acc + jnp.dot(oh, wo[h * dh:(h + 1) * dh, :],
                            preferred_element_type=jnp.float32)

    y = xq + acc + bo_ref[...]                       # residual + out-proj bias
    o_ref[0] = _layer_norm(y, g_ref[...], beta_ref[...], eps)


def attn_block(x_q, x_kv, attn_p, ln_p, *, nheads, causal):
    B, Sq, E = x_q.shape
    Sk = x_kv.shape[1]
    dh = E // nheads
    kern = functools.partial(_attn_block_kernel, nheads=nheads, causal=causal,
                             scale=1.0 / (dh ** 0.5), eps=_EPS)
    full = lambda i: (0, 0)
    return pl.pallas_call(
        kern,
        out_shape=jax.ShapeDtypeStruct((B, Sq, E), jnp.float32),
        grid=(B,),
        in_specs=[
            pl.BlockSpec((1, Sq, E), lambda i: (i, 0, 0)),
            pl.BlockSpec((1, Sk, E), lambda i: (i, 0, 0)),
            pl.BlockSpec((E, E), full),
            pl.BlockSpec((1, E), full),
            pl.BlockSpec((E, 2 * E), full),
            pl.BlockSpec((1, 2 * E), full),
            pl.BlockSpec((E, E), full),
            pl.BlockSpec((1, E), full),
            pl.BlockSpec((1, E), full),
            pl.BlockSpec((1, E), full),
        ],
        out_specs=pl.BlockSpec((1, Sq, E), lambda i: (i, 0, 0)),
        compiler_params=pltpu.CompilerParams(dimension_semantics=("parallel",)),
    )(x_q, x_kv, attn_p["wq"], attn_p["bq"], attn_p["wkv"], attn_p["bkv"],
      attn_p["wo"], attn_p["bo"], ln_p["g"], ln_p["b"])


# ----------------------------------------------------------------------------
# Fused FFN block: linear1 + ReLU + linear2 + residual + LN
# ----------------------------------------------------------------------------

def _ffn_block_kernel(x_ref, w1_ref, b1_ref, w2_ref, b2_ref, g_ref, beta_ref,
                      o_ref, *, eps):
    x = x_ref[0]                                     # (S, E)
    h = jnp.dot(x, w1_ref[...], preferred_element_type=jnp.float32) + b1_ref[...]
    h = jnp.maximum(h, 0.0)
    o = jnp.dot(h, w2_ref[...], preferred_element_type=jnp.float32) + b2_ref[...]
    o_ref[0] = _layer_norm(x + o, g_ref[...], beta_ref[...], eps)


def ffn_block(x, ffn_p, ln_p):
    B, S, E = x.shape
    F = ffn_p["w1"].shape[1]
    full = lambda i: (0, 0)
    return pl.pallas_call(
        functools.partial(_ffn_block_kernel, eps=_EPS),
        out_shape=jax.ShapeDtypeStruct((B, S, E), jnp.float32),
        grid=(B,),
        in_specs=[
            pl.BlockSpec((1, S, E), lambda i: (i, 0, 0)),
            pl.BlockSpec((E, F), full),
            pl.BlockSpec((1, F), full),
            pl.BlockSpec((F, E), full),
            pl.BlockSpec((1, E), full),
            pl.BlockSpec((1, E), full),
            pl.BlockSpec((1, E), full),
        ],
        out_specs=pl.BlockSpec((1, S, E), lambda i: (i, 0, 0)),
        compiler_params=pltpu.CompilerParams(dimension_semantics=("parallel",)),
    )(x, ffn_p["w1"], ffn_p["b1"], ffn_p["w2"], ffn_p["b2"], ln_p["g"], ln_p["b"])


# ----------------------------------------------------------------------------
# Final encoder LayerNorm; final decoder LayerNorm fused with output projection
# ----------------------------------------------------------------------------

def _ln_kernel(x_ref, g_ref, beta_ref, o_ref, *, eps):
    o_ref[0] = _layer_norm(x_ref[0], g_ref[...], beta_ref[...], eps)


def final_layer_norm(x, ln_p):
    B, S, E = x.shape
    full = lambda i: (0, 0)
    return pl.pallas_call(
        functools.partial(_ln_kernel, eps=_EPS),
        out_shape=jax.ShapeDtypeStruct((B, S, E), jnp.float32),
        grid=(B,),
        in_specs=[
            pl.BlockSpec((1, S, E), lambda i: (i, 0, 0)),
            pl.BlockSpec((1, E), full),
            pl.BlockSpec((1, E), full),
        ],
        out_specs=pl.BlockSpec((1, S, E), lambda i: (i, 0, 0)),
        compiler_params=pltpu.CompilerParams(dimension_semantics=("parallel",)),
    )(x, ln_p["g"], ln_p["b"])


def _ln_proj_kernel(x_ref, g_ref, beta_ref, w_ref, b_ref, o_ref, *, eps):
    xn = _layer_norm(x_ref[0], g_ref[...], beta_ref[...], eps)
    o_ref[0] = jnp.dot(xn, w_ref[...], preferred_element_type=jnp.float32) + b_ref[...]


def ln_output_proj(x, ln_p, w_out, b_out):
    B, S, E = x.shape
    V = w_out.shape[1]
    full = lambda i: (0, 0)
    return pl.pallas_call(
        functools.partial(_ln_proj_kernel, eps=_EPS),
        out_shape=jax.ShapeDtypeStruct((B, S, V), jnp.float32),
        grid=(B,),
        in_specs=[
            pl.BlockSpec((1, S, E), lambda i: (i, 0, 0)),
            pl.BlockSpec((1, E), full),
            pl.BlockSpec((1, E), full),
            pl.BlockSpec((E, V), full),
            pl.BlockSpec((1, V), full),
        ],
        out_specs=pl.BlockSpec((1, S, V), lambda i: (i, 0, 0)),
        compiler_params=pltpu.CompilerParams(dimension_semantics=("parallel",)),
    )(x, ln_p["g"], ln_p["b"], w_out, b_out)


# ----------------------------------------------------------------------------
# Full forward pass
# ----------------------------------------------------------------------------

def transformer_forward(params, X, Y, *, nheads):
    B, Sx = X.shape
    _, Sy = Y.shape

    # TODO(synk): embedding gather stays in plain JAX (glue), not in-kernel.
    x = params["src_emb"][X] + params["pos_emb"][:Sx][None, :, :]
    y = params["trg_emb"][Y] + params["pos_emb"][:Sy][None, :, :]

    # Encoder (post-norm) + final encoder norm.
    for lp in params["enc_layers"]:
        x = attn_block(x, x, lp["sa"], lp["ln1"], nheads=nheads, causal=False)
        x = ffn_block(x, lp["ffn"], lp["ln2"])
    memory = final_layer_norm(x, params["enc_norm"])

    # Decoder (post-norm); final decoder norm fused into the output projection.
    for lp in params["dec_layers"]:
        y = attn_block(y, y, lp["sa"], lp["ln1"], nheads=nheads, causal=True)
        y = attn_block(y, memory, lp["ca"], lp["ln2"], nheads=nheads, causal=False)
        y = ffn_block(y, lp["ffn"], lp["ln3"])

    logits = ln_output_proj(y, params["dec_norm"], params["w_out"], params["b_out"])
    return logits                                     # (B, Sy, src_vocab)


# ----------------------------------------------------------------------------
# Deterministic parameter init (shapes follow the module's __init__)
# ----------------------------------------------------------------------------

def init_params(key, src_vocab, trg_vocab, E, F, enc_layers, dec_layers, max_seq):
    keys = iter(jax.random.split(key, 512))

    def rnd(shape, scale=0.02):
        return (scale * jax.random.normal(next(keys), shape)).astype(jnp.float32)

    def attn_params():
        # K and V projections fused into one (E, 2E) weight / (1, 2E) bias.
        return dict(wq=rnd((E, E)), bq=rnd((1, E)),
                    wkv=rnd((E, 2 * E)), bkv=rnd((1, 2 * E)),
                    wo=rnd((E, E)), bo=rnd((1, E)))

    def ln_params():
        return dict(g=jnp.ones((1, E), jnp.float32), b=jnp.zeros((1, E), jnp.float32))

    def ffn_params():
        return dict(w1=rnd((E, F)), b1=rnd((1, F)), w2=rnd((F, E)), b2=rnd((1, E)))

    return dict(
        src_emb=rnd((src_vocab, E), 0.1),
        trg_emb=rnd((trg_vocab, E), 0.1),
        pos_emb=rnd((max_seq, E), 0.1),
        enc_layers=[dict(sa=attn_params(), ln1=ln_params(),
                         ffn=ffn_params(), ln2=ln_params())
                    for _ in range(enc_layers)],
        enc_norm=ln_params(),
        dec_layers=[dict(sa=attn_params(), ln1=ln_params(),
                         ca=attn_params(), ln2=ln_params(),
                         ffn=ffn_params(), ln3=ln_params())
                    for _ in range(dec_layers)],
        dec_norm=ln_params(),
        w_out=rnd((E, src_vocab)), b_out=rnd((1, src_vocab)),
    )


# ----------------------------------------------------------------------------
# Main
# ----------------------------------------------------------------------------

if __name__ == "__main__":
    SRC_VOCAB = 50
    TRG_VOCAB = 60
    E = 32           # encoder_embed_dim == decoder_embed_dim
    HEADS = 4        # encoder_attention_heads == decoder_attention_heads
    FFN = 64         # encoder_ffn_embed_dim == decoder_ffn_embed_dim
    ENC_LAYERS = 3
    DEC_LAYERS = 3
    MAX_SEQ = 64
    B, SX, SY = 2, 8, 8

    key = jax.random.PRNGKey(0)
    k_par, k_x, k_y = jax.random.split(key, 3)

    params = init_params(k_par, SRC_VOCAB, TRG_VOCAB, E, FFN,
                         ENC_LAYERS, DEC_LAYERS, MAX_SEQ)

    X = jax.random.randint(k_x, (B, SX), 0, SRC_VOCAB, dtype=jnp.int32)
    Y = jax.random.randint(k_y, (B, SY), 0, TRG_VOCAB, dtype=jnp.int32)

    fwd = jax.jit(functools.partial(transformer_forward, nheads=HEADS))
    logits = fwd(params, X, Y)
    jax.block_until_ready(logits)

    assert logits.shape == (B, SY, SRC_VOCAB), logits.shape
    assert bool(jnp.all(jnp.isfinite(logits)))
    print("KERNEL_OK")
</pallas_src>

<mosaic_0001>
module attributes {stable_mosaic.version = 11 : i64} {
  func.func @_attn_block_kernel(%arg0: i32, %arg1: memref<1x8x32xf32, #tpu.memory_space<vmem>>, %arg2: memref<1x8x32xf32, #tpu.memory_space<vmem>>, %arg3: memref<32x32xf32, #tpu.memory_space<vmem>>, %arg4: memref<1x32xf32, #tpu.memory_space<vmem>>, %arg5: memref<32x64xf32, #tpu.memory_space<vmem>>, %arg6: memref<1x64xf32, #tpu.memory_space<vmem>>, %arg7: memref<32x32xf32, #tpu.memory_space<vmem>>, %arg8: memref<1x32xf32, #tpu.memory_space<vmem>>, %arg9: memref<1x32xf32, #tpu.memory_space<vmem>>, %arg10: memref<1x32xf32, #tpu.memory_space<vmem>>, %arg11: memref<1x8x32xf32, #tpu.memory_space<vmem>>) attributes {dimension_semantics = [#tpu.dimension_semantics<parallel>], iteration_bounds = array<i64: 2>, scalar_prefetch = 0 : i64, scratch_operands = 0 : i64, tpu.core_type = #tpu.core_type<tc>, window_params = [{transform_indices = @transform_0, window_bounds = array<i64: 1, 8, 32>}, {transform_indices = @transform_1, window_bounds = array<i64: 1, 8, 32>}, {pipeline_mode = #tpu.pipeline_mode<synchronous>, transform_indices = @transform_2, window_bounds = array<i64: 32, 32>}, {pipeline_mode = #tpu.pipeline_mode<synchronous>, transform_indices = @transform_3, window_bounds = array<i64: 1, 32>}, {pipeline_mode = #tpu.pipeline_mode<synchronous>, transform_indices = @transform_4, window_bounds = array<i64: 32, 64>}, {pipeline_mode = #tpu.pipeline_mode<synchronous>, transform_indices = @transform_5, window_bounds = array<i64: 1, 64>}, {pipeline_mode = #tpu.pipeline_mode<synchronous>, transform_indices = @transform_6, window_bounds = array<i64: 32, 32>}, {pipeline_mode = #tpu.pipeline_mode<synchronous>, transform_indices = @transform_7, window_bounds = array<i64: 1, 32>}, {pipeline_mode = #tpu.pipeline_mode<synchronous>, transform_indices = @transform_8, window_bounds = array<i64: 1, 32>}, {pipeline_mode = #tpu.pipeline_mode<synchronous>, transform_indices = @transform_9, window_bounds = array<i64: 1, 32>}, {transform_indices = @transform_10, window_bounds = array<i64: 1, 8, 32>}]} {
    %c0 = arith.constant 0 : index
    %c0_0 = arith.constant 0 : index
    %c0_1 = arith.constant 0 : index
    %0 = vector.load %arg1[%c0, %c0_0, %c0_1] : memref<1x8x32xf32, #tpu.memory_space<vmem>>, vector<1x8x32xf32>
    %1 = vector.shape_cast %0 : vector<1x8x32xf32> to vector<8x32xf32>
    %c0_2 = arith.constant 0 : index
    %c0_3 = arith.constant 0 : index
    %c0_4 = arith.constant 0 : index
    %2 = vector.load %arg2[%c0_2, %c0_3, %c0_4] : memref<1x8x32xf32, #tpu.memory_space<vmem>>, vector<1x8x32xf32>
    %3 = vector.shape_cast %2 : vector<1x8x32xf32> to vector<8x32xf32>
    %c0_5 = arith.constant 0 : index
    %c0_6 = arith.constant 0 : index
    %4 = vector.load %arg3[%c0_5, %c0_6] : memref<32x32xf32, #tpu.memory_space<vmem>>, vector<32x32xf32>
    %cst = arith.constant dense<0.000000e+00> : vector<8x32xf32>
    %5 = tpu.matmul %1, %4, %cst {dimension_numbers = #tpu.dot_dimension_numbers<[1], [0], [0], [1], [0, 0, 1, 1], [], []>} : vector<8x32xf32>, vector<32x32xf32>, vector<8x32xf32> -> vector<8x32xf32>
    %c0_7 = arith.constant 0 : index
    %c0_8 = arith.constant 0 : index
    %6 = vector.load %arg4[%c0_7, %c0_8] : memref<1x32xf32, #tpu.memory_space<vmem>>, vector<1x32xf32>
    %7 = vector.broadcast %6 : vector<1x32xf32> to vector<8x32xf32>
    %8 = arith.addf %5, %7 : vector<8x32xf32>
    %c0_9 = arith.constant 0 : index
    %c0_10 = arith.constant 0 : index
    %9 = vector.load %arg5[%c0_9, %c0_10] : memref<32x64xf32, #tpu.memory_space<vmem>>, vector<32x64xf32>
    %cst_11 = arith.constant dense<0.000000e+00> : vector<8x64xf32>
    %10 = tpu.matmul %3, %9, %cst_11 {dimension_numbers = #tpu.dot_dimension_numbers<[1], [0], [0], [1], [0, 0, 1, 1], [], []>} : vector<8x32xf32>, vector<32x64xf32>, vector<8x64xf32> -> vector<8x64xf32>
    %c0_12 = arith.constant 0 : index
    %c0_13 = arith.constant 0 : index
    %11 = vector.load %arg6[%c0_12, %c0_13] : memref<1x64xf32, #tpu.memory_space<vmem>>, vector<1x64xf32>
    %12 = vector.broadcast %11 : vector<1x64xf32> to vector<8x64xf32>
    %13 = arith.addf %10, %12 : vector<8x64xf32>
    %14 = vector.extract_strided_slice %13 {offsets = [0, 0], sizes = [8, 32], strides = [1, 1]} : vector<8x64xf32> to vector<8x32xf32>
    %15 = vector.extract_strided_slice %13 {offsets = [0, 32], sizes = [8, 32], strides = [1, 1]} : vector<8x64xf32> to vector<8x32xf32>
    %c0_14 = arith.constant 0 : index
    %c0_15 = arith.constant 0 : index
    %16 = vector.load %arg7[%c0_14, %c0_15] : memref<32x32xf32, #tpu.memory_space<vmem>>, vector<32x32xf32>
    %17 = tpu.iota {dimensions = array<i32: 0>} : vector<8x8xi32>
    %18 = tpu.iota {dimensions = array<i32: 1>} : vector<8x8xi32>
    %19 = arith.cmpi sle, %18, %17 : vector<8x8xi32>
    %cst_16 = arith.constant 0.000000e+00 : f32
    %20 = vector.broadcast %cst_16 : f32 to vector<8x32xf32>
    %21 = vector.extract_strided_slice %8 {offsets = [0, 0], sizes = [8, 8], strides = [1, 1]} : vector<8x32xf32> to vector<8x8xf32>
    %22 = vector.extract_strided_slice %14 {offsets = [0, 0], sizes = [8, 8], strides = [1, 1]} : vector<8x32xf32> to vector<8x8xf32>
    %23 = vector.extract_strided_slice %15 {offsets = [0, 0], sizes = [8, 8], strides = [1, 1]} : vector<8x32xf32> to vector<8x8xf32>
    %24 = tpu.transpose %22, [1, 0] : vector<8x8xf32> -> vector<8x8xf32>
    %cst_17 = arith.constant dense<0.000000e+00> : vector<8x8xf32>
    %25 = tpu.matmul %21, %24, %cst_17 {dimension_numbers = #tpu.dot_dimension_numbers<[1], [0], [0], [1], [0, 0, 1, 1], [], []>} : vector<8x8xf32>, vector<8x8xf32>, vector<8x8xf32> -> vector<8x8xf32>
    %cst_18 = arith.constant 0.353553385 : f32
    %26 = vector.broadcast %cst_18 : f32 to vector<8x8xf32>
    %27 = arith.mulf %25, %26 : vector<8x8xf32>
    %cst_19 = arith.constant 0xFF800000 : f32
    %28 = vector.broadcast %cst_19 : f32 to vector<8x8xf32>
    %29 = arith.select %19, %27, %28 : vector<8x8xi1>, vector<8x8xf32>
    %cst_20 = arith.constant dense<0xFF800000> : vector<8xf32>
    %30 = vector.multi_reduction <maximumf>, %29, %cst_20 [1] : vector<8x8xf32> to vector<8xf32>
    %31 = vector.shape_cast %30 : vector<8xf32> to vector<8x1xf32>
    %32 = vector.broadcast %31 : vector<8x1xf32> to vector<8x8xf32>
    %33 = arith.subf %29, %32 : vector<8x8xf32>
    %34 = math.exp %33 : vector<8x8xf32>
    %cst_21 = arith.constant dense<0.000000e+00> : vector<8xf32>
    %35 = vector.multi_reduction <add>, %34, %cst_21 [1] : vector<8x8xf32> to vector<8xf32>
    %36 = vector.shape_cast %35 : vector<8xf32> to vector<8x1xf32>
    %37 = tpu.reciprocal %36 {approx = true} : vector<8x1xf32> -> vector<8x1xf32>
    %38 = vector.broadcast %37 : vector<8x1xf32> to vector<8x8xf32>
    %39 = arith.mulf %34, %38 : vector<8x8xf32>
    %cst_22 = arith.constant dense<0.000000e+00> : vector<8x8xf32>
    %40 = tpu.matmul %39, %23, %cst_22 {dimension_numbers = #tpu.dot_dimension_numbers<[1], [0], [0], [1], [0, 0, 1, 1], [], []>} : vector<8x8xf32>, vector<8x8xf32>, vector<8x8xf32> -> vector<8x8xf32>
    %41 = vector.extract_strided_slice %16 {offsets = [0, 0], sizes = [8, 32], strides = [1, 1]} : vector<32x32xf32> to vector<8x32xf32>
    %cst_23 = arith.constant dense<0.000000e+00> : vector<8x32xf32>
    %42 = tpu.matmul %40, %41, %cst_23 {dimension_numbers = #tpu.dot_dimension_numbers<[1], [0], [0], [1], [0, 0, 1, 1], [], []>} : vector<8x8xf32>, vector<8x32xf32>, vector<8x32xf32> -> vector<8x32xf32>
    %43 = arith.addf %20, %42 : vector<8x32xf32>
    %44 = vector.extract_strided_slice %8 {offsets = [0, 8], sizes = [8, 8], strides = [1, 1]} : vector<8x32xf32> to vector<8x8xf32>
    %45 = vector.extract_strided_slice %14 {offsets = [0, 8], sizes = [8, 8], strides = [1, 1]} : vector<8x32xf32> to vector<8x8xf32>
    %46 = vector.extract_strided_slice %15 {offsets = [0, 8], sizes = [8, 8], strides = [1, 1]} : vector<8x32xf32> to vector<8x8xf32>
    %47 = tpu.transpose %45, [1, 0] : vector<8x8xf32> -> vector<8x8xf32>
    %cst_24 = arith.constant dense<0.000000e+00> : vector<8x8xf32>
    %48 = tpu.matmul %44, %47, %cst_24 {dimension_numbers = #tpu.dot_dimension_numbers<[1], [0], [0], [1], [0, 0, 1, 1], [], []>} : vector<8x8xf32>, vector<8x8xf32>, vector<8x8xf32> -> vector<8x8xf32>
    %cst_25 = arith.constant 0.353553385 : f32
    %49 = vector.broadcast %cst_25 : f32 to vector<8x8xf32>
    %50 = arith.mulf %48, %49 : vector<8x8xf32>
    %cst_26 = arith.constant 0xFF800000 : f32
    %51 = vector.broadcast %cst_26 : f32 to vector<8x8xf32>
    %52 = arith.select %19, %50, %51 : vector<8x8xi1>, vector<8x8xf32>
    %cst_27 = arith.constant dense<0xFF800000> : vector<8xf32>
    %53 = vector.multi_reduction <maximumf>, %52, %cst_27 [1] : vector<8x8xf32> to vector<8xf32>
    %54 = vector.shape_cast %53 : vector<8xf32> to vector<8x1xf32>
    %55 = vector.broadcast %54 : vector<8x1xf32> to vector<8x8xf32>
    %56 = arith.subf %52, %55 : vector<8x8xf32>
    %57 = math.exp %56 : vector<8x8xf32>
    %cst_28 = arith.constant dense<0.000000e+00> : vector<8xf32>
    %58 = vector.multi_reduction <add>, %57, %cst_28 [1] : vector<8x8xf32> to vector<8xf32>
    %59 = vector.shape_cast %58 : vector<8xf32> to vector<8x1xf32>
    %60 = tpu.reciprocal %59 {approx = true} : vector<8x1xf32> -> vector<8x1xf32>
    %61 = vector.broadcast %60 : vector<8x1xf32> to vector<8x8xf32>
    %62 = arith.mulf %57, %61 : vector<8x8xf32>
    %cst_29 = arith.constant dense<0.000000e+00> : vector<8x8xf32>
    %63 = tpu.matmul %62, %46, %cst_29 {dimension_numbers = #tpu.dot_dimension_numbers<[1], [0], [0], [1], [0, 0, 1, 1], [], []>} : vector<8x8xf32>, vector<8x8xf32>, vector<8x8xf32> -> vector<8x8xf32>
    %64 = vector.extract_strided_slice %16 {offsets = [8, 0], sizes = [8, 32], strides = [1, 1]} : vector<32x32xf32> to vector<8x32xf32>
    %cst_30 = arith.constant dense<0.000000e+00> : vector<8x32xf32>
    %65 = tpu.matmul %63, %64, %cst_30 {dimension_numbers = #tpu.dot_dimension_numbers<[1], [0], [0], [1], [0, 0, 1, 1], [], []>} : vector<8x8xf32>, vector<8x32xf32>, vector<8x32xf32> -> vector<8x32xf32>
    %66 = arith.addf %43, %65 : vector<8x32xf32>
    %67 = vector.extract_strided_slice %8 {offsets = [0, 16], sizes = [8, 8], strides = [1, 1]} : vector<8x32xf32> to vector<8x8xf32>
    %68 = vector.extract_strided_slice %14 {offsets = [0, 16], sizes = [8, 8], strides = [1, 1]} : vector<8x32xf32> to vector<8x8xf32>
    %69 = vector.extract_strided_slice %15 {offsets = [0, 16], sizes = [8, 8], strides = [1, 1]} : vector<8x32xf32> to vector<8x8xf32>
    %70 = tpu.transpose %68, [1, 0] : vector<8x8xf32> -> vector<8x8xf32>
    %cst_31 = arith.constant dense<0.000000e+00> : vector<8x8xf32>
    %71 = tpu.matmul %67, %70, %cst_31 {dimension_numbers = #tpu.dot_dimension_numbers<[1], [0], [0], [1], [0, 0, 1, 1], [], []>} : vector<8x8xf32>, vector<8x8xf32>, vector<8x8xf32> -> vector<8x8xf32>
    %cst_32 = arith.constant 0.353553385 : f32
    %72 = vector.broadcast %cst_32 : f32 to vector<8x8xf32>
    %73 = arith.mulf %71, %72 : vector<8x8xf32>
    %cst_33 = arith.constant 0xFF800000 : f32
    %74 = vector.broadcast %cst_33 : f32 to vector<8x8xf32>
    %75 = arith.select %19, %73, %74 : vector<8x8xi1>, vector<8x8xf32>
    %cst_34 = arith.constant dense<0xFF800000> : vector<8xf32>
    %76 = vector.multi_reduction <maximumf>, %75, %cst_34 [1] : vector<8x8xf32> to vector<8xf32>
    %77 = vector.shape_cast %76 : vector<8xf32> to vector<8x1xf32>
    %78 = vector.broadcast %77 : vector<8x1xf32> to vector<8x8xf32>
    %79 = arith.subf %75, %78 : vector<8x8xf32>
    %80 = math.exp %79 : vector<8x8xf32>
    %cst_35 = arith.constant dense<0.000000e+00> : vector<8xf32>
    %81 = vector.multi_reduction <add>, %80, %cst_35 [1] : vector<8x8xf32> to vector<8xf32>
    %82 = vector.shape_cast %81 : vector<8xf32> to vector<8x1xf32>
    %83 = tpu.reciprocal %82 {approx = true} : vector<8x1xf32> -> vector<8x1xf32>
    %84 = vector.broadcast %83 : vector<8x1xf32> to vector<8x8xf32>
    %85 = arith.mulf %80, %84 : vector<8x8xf32>
    %cst_36 = arith.constant dense<0.000000e+00> : vector<8x8xf32>
    %86 = tpu.matmul %85, %69, %cst_36 {dimension_numbers = #tpu.dot_dimension_numbers<[1], [0], [0], [1], [0, 0, 1, 1], [], []>} : vector<8x8xf32>, vector<8x8xf32>, vector<8x8xf32> -> vector<8x8xf32>
    %87 = vector.extract_strided_slice %16 {offsets = [16, 0], sizes = [8, 32], strides = [1, 1]} : vector<32x32xf32> to vector<8x32xf32>
    %cst_37 = arith.constant dense<0.000000e+00> : vector<8x32xf32>
    %88 = tpu.matmul %86, %87, %cst_37 {dimension_numbers = #tpu.dot_dimension_numbers<[1], [0], [0], [1], [0, 0, 1, 1], [], []>} : vector<8x8xf32>, vector<8x32xf32>, vector<8x32xf32> -> vector<8x32xf32>
    %89 = arith.addf %66, %88 : vector<8x32xf32>
    %90 = vector.extract_strided_slice %8 {offsets = [0, 24], sizes = [8, 8], strides = [1, 1]} : vector<8x32xf32> to vector<8x8xf32>
    %91 = vector.extract_strided_slice %14 {offsets = [0, 24], sizes = [8, 8], strides = [1, 1]} : vector<8x32xf32> to vector<8x8xf32>
    %92 = vector.extract_strided_slice %15 {offsets = [0, 24], sizes = [8, 8], strides = [1, 1]} : vector<8x32xf32> to vector<8x8xf32>
    %93 = tpu.transpose %91, [1, 0] : vector<8x8xf32> -> vector<8x8xf32>
    %cst_38 = arith.constant dense<0.000000e+00> : vector<8x8xf32>
    %94 = tpu.matmul %90, %93, %cst_38 {dimension_numbers = #tpu.dot_dimension_numbers<[1], [0], [0], [1], [0, 0, 1, 1], [], []>} : vector<8x8xf32>, vector<8x8xf32>, vector<8x8xf32> -> vector<8x8xf32>
    %cst_39 = arith.constant 0.353553385 : f32
    %95 = vector.broadcast %cst_39 : f32 to vector<8x8xf32>
    %96 = arith.mulf %94, %95 : vector<8x8xf32>
    %cst_40 = arith.constant 0xFF800000 : f32
    %97 = vector.broadcast %cst_40 : f32 to vector<8x8xf32>
    %98 = arith.select %19, %96, %97 : vector<8x8xi1>, vector<8x8xf32>
    %cst_41 = arith.constant dense<0xFF800000> : vector<8xf32>
    %99 = vector.multi_reduction <maximumf>, %98, %cst_41 [1] : vector<8x8xf32> to vector<8xf32>
    %100 = vector.shape_cast %99 : vector<8xf32> to vector<8x1xf32>
    %101 = vector.broadcast %100 : vector<8x1xf32> to vector<8x8xf32>
    %102 = arith.subf %98, %101 : vector<8x8xf32>
    %103 = math.exp %102 : vector<8x8xf32>
    %cst_42 = arith.constant dense<0.000000e+00> : vector<8xf32>
    %104 = vector.multi_reduction <add>, %103, %cst_42 [1] : vector<8x8xf32> to vector<8xf32>
    %105 = vector.shape_cast %104 : vector<8xf32> to vector<8x1xf32>
    %106 = tpu.reciprocal %105 {approx = true} : vector<8x1xf32> -> vector<8x1xf32>
    %107 = vector.broadcast %106 : vector<8x1xf32> to vector<8x8xf32>
    %108 = arith.mulf %103, %107 : vector<8x8xf32>
    %cst_43 = arith.constant dense<0.000000e+00> : vector<8x8xf32>
    %109 = tpu.matmul %108, %92, %cst_43 {dimension_numbers = #tpu.dot_dimension_numbers<[1], [0], [0], [1], [0, 0, 1, 1], [], []>} : vector<8x8xf32>, vector<8x8xf32>, vector<8x8xf32> -> vector<8x8xf32>
    %110 = vector.extract_strided_slice %16 {offsets = [24, 0], sizes = [8, 32], strides = [1, 1]} : vector<32x32xf32> to vector<8x32xf32>
    %cst_44 = arith.constant dense<0.000000e+00> : vector<8x32xf32>
    %111 = tpu.matmul %109, %110, %cst_44 {dimension_numbers = #tpu.dot_dimension_numbers<[1], [0], [0], [1], [0, 0, 1, 1], [], []>} : vector<8x8xf32>, vector<8x32xf32>, vector<8x32xf32> -> vector<8x32xf32>
    %112 = arith.addf %89, %111 : vector<8x32xf32>
    %113 = arith.addf %1, %112 : vector<8x32xf32>
    %c0_45 = arith.constant 0 : index
    %c0_46 = arith.constant 0 : index
    %114 = vector.load %arg8[%c0_45, %c0_46] : memref<1x32xf32, #tpu.memory_space<vmem>>, vector<1x32xf32>
    %115 = vector.broadcast %114 : vector<1x32xf32> to vector<8x32xf32>
    %116 = arith.addf %113, %115 : vector<8x32xf32>
    %c0_47 = arith.constant 0 : index
    %c0_48 = arith.constant 0 : index
    %117 = vector.load %arg9[%c0_47, %c0_48] : memref<1x32xf32, #tpu.memory_space<vmem>>, vector<1x32xf32>
    %c0_49 = arith.constant 0 : index
    %c0_50 = arith.constant 0 : index
    %118 = vector.load %arg10[%c0_49, %c0_50] : memref<1x32xf32, #tpu.memory_space<vmem>>, vector<1x32xf32>
    %cst_51 = arith.constant dense<0.000000e+00> : vector<8xf32>
    %119 = vector.multi_reduction <add>, %116, %cst_51 [1] : vector<8x32xf32> to vector<8xf32>
    %120 = vector.shape_cast %119 : vector<8xf32> to vector<8x1xf32>
    %cst_52 = arith.constant 3.200000e+01 : f32
    %121 = vector.broadcast %cst_52 : f32 to vector<8x1xf32>
    %122 = arith.divf %120, %121 : vector<8x1xf32>
    %123 = vector.broadcast %122 : vector<8x1xf32> to vector<8x32xf32>
    %124 = arith.subf %116, %123 : vector<8x32xf32>
    %125 = arith.mulf %124, %124 : vector<8x32xf32>
    %cst_53 = arith.constant dense<0.000000e+00> : vector<8xf32>
    %126 = vector.multi_reduction <add>, %125, %cst_53 [1] : vector<8x32xf32> to vector<8xf32>
    %127 = vector.shape_cast %126 : vector<8xf32> to vector<8x1xf32>
    %cst_54 = arith.constant 3.200000e+01 : f32
    %128 = vector.broadcast %cst_54 : f32 to vector<8x1xf32>
    %129 = arith.divf %127, %128 : vector<8x1xf32>
    %130 = vector.broadcast %122 : vector<8x1xf32> to vector<8x32xf32>
    %131 = arith.subf %116, %130 : vector<8x32xf32>
    %cst_55 = arith.constant 9.99999974E-6 : f32
    %132 = vector.broadcast %cst_55 : f32 to vector<8x1xf32>
    %133 = arith.addf %129, %132 : vector<8x1xf32>
    %134 = math.rsqrt %133 : vector<8x1xf32>
    %135 = vector.broadcast %134 : vector<8x1xf32> to vector<8x32xf32>
    %136 = arith.mulf %131, %135 : vector<8x32xf32>
    %137 = vector.broadcast %117 : vector<1x32xf32> to vector<8x32xf32>
    %138 = arith.mulf %136, %137 : vector<8x32xf32>
    %139 = vector.broadcast %118 : vector<1x32xf32> to vector<8x32xf32>
    %140 = arith.addf %138, %139 : vector<8x32xf32>
    %c0_56 = arith.constant 0 : index
    %c0_57 = arith.constant 0 : index
    %c0_58 = arith.constant 0 : index
    %141 = vector.load %arg11[%c0_56, %c0_57, %c0_58] : memref<1x8x32xf32, #tpu.memory_space<vmem>>, vector<1x8x32xf32>
    %142 = vector.shape_cast %141 : vector<1x8x32xf32> to vector<8x32xf32>
    %143 = vector.shape_cast %140 : vector<8x32xf32> to vector<1x8x32xf32>
    tpu.vector_store %arg11[%c0_56, %c0_57, %c0_58], %143 {strides = array<i32>} : memref<1x8x32xf32, #tpu.memory_space<vmem>>, vector<1x8x32xf32>,
    return
  }
  func.func @transform_0(%arg0: i32) -> (i32, i32, i32) {
    %c0_i32 = arith.constant 0 : i32
    %c0_i32_0 = arith.constant 0 : i32
    %c0_i32_1 = arith.constant 0 : i32
    return %arg0, %c0_i32, %c0_i32_0 : i32, i32, i32
  }
  func.func @transform_1(%arg0: i32) -> (i32, i32, i32) {
    %c0_i32 = arith.constant 0 : i32
    %c0_i32_0 = arith.constant 0 : i32
    %c0_i32_1 = arith.constant 0 : i32
    return %arg0, %c0_i32, %c0_i32_0 : i32, i32, i32
  }
  func.func @transform_2(%arg0: i32) -> (i32, i32) {
    %c0_i32 = arith.constant 0 : i32
    %c0_i32_0 = arith.constant 0 : i32
    %c0_i32_1 = arith.constant 0 : i32
    return %c0_i32, %c0_i32_0 : i32, i32
  }
  func.func @transform_3(%arg0: i32) -> (i32, i32) {
    %c0_i32 = arith.constant 0 : i32
    %c0_i32_0 = arith.constant 0 : i32
    %c0_i32_1 = arith.constant 0 : i32
    return %c0_i32, %c0_i32_0 : i32, i32
  }
  func.func @transform_4(%arg0: i32) -> (i32, i32) {
    %c0_i32 = arith.constant 0 : i32
    %c0_i32_0 = arith.constant 0 : i32
    %c0_i32_1 = arith.constant 0 : i32
    return %c0_i32, %c0_i32_0 : i32, i32
  }
  func.func @transform_5(%arg0: i32) -> (i32, i32) {
    %c0_i32 = arith.constant 0 : i32
    %c0_i32_0 = arith.constant 0 : i32
    %c0_i32_1 = arith.constant 0 : i32
    return %c0_i32, %c0_i32_0 : i32, i32
  }
  func.func @transform_6(%arg0: i32) -> (i32, i32) {
    %c0_i32 = arith.constant 0 : i32
    %c0_i32_0 = arith.constant 0 : i32
    %c0_i32_1 = arith.constant 0 : i32
    return %c0_i32, %c0_i32_0 : i32, i32
  }
  func.func @transform_7(%arg0: i32) -> (i32, i32) {
    %c0_i32 = arith.constant 0 : i32
    %c0_i32_0 = arith.constant 0 : i32
    %c0_i32_1 = arith.constant 0 : i32
    return %c0_i32, %c0_i32_0 : i32, i32
  }
  func.func @transform_8(%arg0: i32) -> (i32, i32) {
    %c0_i32 = arith.constant 0 : i32
    %c0_i32_0 = arith.constant 0 : i32
    %c0_i32_1 = arith.constant 0 : i32
    return %c0_i32, %c0_i32_0 : i32, i32
  }
  func.func @transform_9(%arg0: i32) -> (i32, i32) {
    %c0_i32 = arith.constant 0 : i32
    %c0_i32_0 = arith.constant 0 : i32
    %c0_i32_1 = arith.constant 0 : i32
    return %c0_i32, %c0_i32_0 : i32, i32
  }
  func.func @transform_10(%arg0: i32) -> (i32, i32, i32) {
    %c0_i32 = arith.constant 0 : i32
    %c0_i32_0 = arith.constant 0 : i32
    %c0_i32_1 = arith.constant 0 : i32
    return %arg0, %c0_i32, %c0_i32_0 : i32, i32, i32
  }
}

module attributes {stable_mosaic.version = 11 : i64} {
  func.func @_ln_kernel(%arg0: i32, %arg1: memref<1x8x32xf32, #tpu.memory_space<vmem>>, %arg2: memref<1x32xf32, #tpu.memory_space<vmem>>, %arg3: memref<1x32xf32, #tpu.memory_space<vmem>>, %arg4: memref<1x8x32xf32, #tpu.memory_space<vmem>>) attributes {dimension_semantics = [#tpu.dimension_semantics<parallel>], iteration_bounds = array<i64: 2>, scalar_prefetch = 0 : i64, scratch_operands = 0 : i64, tpu.core_type = #tpu.core_type<tc>, window_params = [{transform_indices = @transform_0, window_bounds = array<i64: 1, 8, 32>}, {pipeline_mode = #tpu.pipeline_mode<synchronous>, transform_indices = @transform_1, window_bounds = array<i64: 1, 32>}, {pipeline_mode = #tpu.pipeline_mode<synchronous>, transform_indices = @transform_2, window_bounds = array<i64: 1, 32>}, {transform_indices = @transform_3, window_bounds = array<i64: 1, 8, 32>}]} {
    %c0 = arith.constant 0 : index
    %c0_0 = arith.constant 0 : index
    %c0_1 = arith.constant 0 : index
    %0 = vector.load %arg1[%c0, %c0_0, %c0_1] : memref<1x8x32xf32, #tpu.memory_space<vmem>>, vector<1x8x32xf32>
    %1 = vector.shape_cast %0 : vector<1x8x32xf32> to vector<8x32xf32>
    %c0_2 = arith.constant 0 : index
    %c0_3 = arith.constant 0 : index
    %2 = vector.load %arg2[%c0_2, %c0_3] : memref<1x32xf32, #tpu.memory_space<vmem>>, vector<1x32xf32>
    %c0_4 = arith.constant 0 : index
    %c0_5 = arith.constant 0 : index
    %3 = vector.load %arg3[%c0_4, %c0_5] : memref<1x32xf32, #tpu.memory_space<vmem>>, vector<1x32xf32>
    %cst = arith.constant dense<0.000000e+00> : vector<8xf32>
    %4 = vector.multi_reduction <add>, %1, %cst [1] : vector<8x32xf32> to vector<8xf32>
    %5 = vector.shape_cast %4 : vector<8xf32> to vector<8x1xf32>
    %cst_6 = arith.constant 3.200000e+01 : f32
    %6 = vector.broadcast %cst_6 : f32 to vector<8x1xf32>
    %7 = arith.divf %5, %6 : vector<8x1xf32>
    %8 = vector.broadcast %7 : vector<8x1xf32> to vector<8x32xf32>
    %9 = arith.subf %1, %8 : vector<8x32xf32>
    %10 = arith.mulf %9, %9 : vector<8x32xf32>
    %cst_7 = arith.constant dense<0.000000e+00> : vector<8xf32>
    %11 = vector.multi_reduction <add>, %10, %cst_7 [1] : vector<8x32xf32> to vector<8xf32>
    %12 = vector.shape_cast %11 : vector<8xf32> to vector<8x1xf32>
    %cst_8 = arith.constant 3.200000e+01 : f32
    %13 = vector.broadcast %cst_8 : f32 to vector<8x1xf32>
    %14 = arith.divf %12, %13 : vector<8x1xf32>
    %15 = vector.broadcast %7 : vector<8x1xf32> to vector<8x32xf32>
    %16 = arith.subf %1, %15 : vector<8x32xf32>
    %cst_9 = arith.constant 9.99999974E-6 : f32
    %17 = vector.broadcast %cst_9 : f32 to vector<8x1xf32>
    %18 = arith.addf %14, %17 : vector<8x1xf32>
    %19 = math.rsqrt %18 : vector<8x1xf32>
    %20 = vector.broadcast %19 : vector<8x1xf32> to vector<8x32xf32>
    %21 = arith.mulf %16, %20 : vector<8x32xf32>
    %22 = vector.broadcast %2 : vector<1x32xf32> to vector<8x32xf32>
    %23 = arith.mulf %21, %22 : vector<8x32xf32>
    %24 = vector.broadcast %3 : vector<1x32xf32> to vector<8x32xf32>
    %25 = arith.addf %23, %24 : vector<8x32xf32>
    %c0_10 = arith.constant 0 : index
    %c0_11 = arith.constant 0 : index
    %c0_12 = arith.constant 0 : index
    %26 = vector.load %arg4[%c0_10, %c0_11, %c0_12] : memref<1x8x32xf32, #tpu.memory_space<vmem>>, vector<1x8x32xf32>
    %27 = vector.shape_cast %26 : vector<1x8x32xf32> to vector<8x32xf32>
    %28 = vector.shape_cast %25 : vector<8x32xf32> to vector<1x8x32xf32>
    tpu.vector_store %arg4[%c0_10, %c0_11, %c0_12], %28 {strides = array<i32>} : memref<1x8x32xf32, #tpu.memory_space<vmem>>, vector<1x8x32xf32>,
    return
  }
  func.func @transform_0(%arg0: i32) -> (i32, i32, i32) {
    %c0_i32 = arith.constant 0 : i32
    %c0_i32_0 = arith.constant 0 : i32
    %c0_i32_1 = arith.constant 0 : i32
    return %arg0, %c0_i32, %c0_i32_0 : i32, i32, i32
  }
  func.func @transform_1(%arg0: i32) -> (i32, i32) {
    %c0_i32 = arith.constant 0 : i32
    %c0_i32_0 = arith.constant 0 : i32
    %c0_i32_1 = arith.constant 0 : i32
    return %c0_i32, %c0_i32_0 : i32, i32
  }
  func.func @transform_2(%arg0: i32) -> (i32, i32) {
    %c0_i32 = arith.constant 0 : i32
    %c0_i32_0 = arith.constant 0 : i32
    %c0_i32_1 = arith.constant 0 : i32
    return %c0_i32, %c0_i32_0 : i32, i32
  }
  func.func @transform_3(%arg0: i32) -> (i32, i32, i32) {
    %c0_i32 = arith.constant 0 : i32
    %c0_i32_0 = arith.constant 0 : i32
    %c0_i32_1 = arith.constant 0 : i32
    return %arg0, %c0_i32, %c0_i32_0 : i32, i32, i32
  }
}

module attributes {stable_mosaic.version = 11 : i64} {
  func.func @_ffn_block_kernel(%arg0: i32, %arg1: memref<1x8x32xf32, #tpu.memory_space<vmem>>, %arg2: memref<32x64xf32, #tpu.memory_space<vmem>>, %arg3: memref<1x64xf32, #tpu.memory_space<vmem>>, %arg4: memref<64x32xf32, #tpu.memory_space<vmem>>, %arg5: memref<1x32xf32, #tpu.memory_space<vmem>>, %arg6: memref<1x32xf32, #tpu.memory_space<vmem>>, %arg7: memref<1x32xf32, #tpu.memory_space<vmem>>, %arg8: memref<1x8x32xf32, #tpu.memory_space<vmem>>) attributes {dimension_semantics = [#tpu.dimension_semantics<parallel>], iteration_bounds = array<i64: 2>, scalar_prefetch = 0 : i64, scratch_operands = 0 : i64, tpu.core_type = #tpu.core_type<tc>, window_params = [{transform_indices = @transform_0, window_bounds = array<i64: 1, 8, 32>}, {pipeline_mode = #tpu.pipeline_mode<synchronous>, transform_indices = @transform_1, window_bounds = array<i64: 32, 64>}, {pipeline_mode = #tpu.pipeline_mode<synchronous>, transform_indices = @transform_2, window_bounds = array<i64: 1, 64>}, {pipeline_mode = #tpu.pipeline_mode<synchronous>, transform_indices = @transform_3, window_bounds = array<i64: 64, 32>}, {pipeline_mode = #tpu.pipeline_mode<synchronous>, transform_indices = @transform_4, window_bounds = array<i64: 1, 32>}, {pipeline_mode = #tpu.pipeline_mode<synchronous>, transform_indices = @transform_5, window_bounds = array<i64: 1, 32>}, {pipeline_mode = #tpu.pipeline_mode<synchronous>, transform_indices = @transform_6, window_bounds = array<i64: 1, 32>}, {transform_indices = @transform_7, window_bounds = array<i64: 1, 8, 32>}]} {
    %c0 = arith.constant 0 : index
    %c0_0 = arith.constant 0 : index
    %c0_1 = arith.constant 0 : index
    %0 = vector.load %arg1[%c0, %c0_0, %c0_1] : memref<1x8x32xf32, #tpu.memory_space<vmem>>, vector<1x8x32xf32>
    %1 = vector.shape_cast %0 : vector<1x8x32xf32> to vector<8x32xf32>
    %c0_2 = arith.constant 0 : index
    %c0_3 = arith.constant 0 : index
    %2 = vector.load %arg2[%c0_2, %c0_3] : memref<32x64xf32, #tpu.memory_space<vmem>>, vector<32x64xf32>
    %cst = arith.constant dense<0.000000e+00> : vector<8x64xf32>
    %3 = tpu.matmul %1, %2, %cst {dimension_numbers = #tpu.dot_dimension_numbers<[1], [0], [0], [1], [0, 0, 1, 1], [], []>} : vector<8x32xf32>, vector<32x64xf32>, vector<8x64xf32> -> vector<8x64xf32>
    %c0_4 = arith.constant 0 : index
    %c0_5 = arith.constant 0 : index
    %4 = vector.load %arg3[%c0_4, %c0_5] : memref<1x64xf32, #tpu.memory_space<vmem>>, vector<1x64xf32>
    %5 = vector.broadcast %4 : vector<1x64xf32> to vector<8x64xf32>
    %6 = arith.addf %3, %5 : vector<8x64xf32>
    %cst_6 = arith.constant 0.000000e+00 : f32
    %7 = vector.broadcast %cst_6 : f32 to vector<8x64xf32>
    %8 = arith.maximumf %6, %7 : vector<8x64xf32>
    %c0_7 = arith.constant 0 : index
    %c0_8 = arith.constant 0 : index
    %9 = vector.load %arg4[%c0_7, %c0_8] : memref<64x32xf32, #tpu.memory_space<vmem>>, vector<64x32xf32>
    %cst_9 = arith.constant dense<0.000000e+00> : vector<8x32xf32>
    %10 = tpu.matmul %8, %9, %cst_9 {dimension_numbers = #tpu.dot_dimension_numbers<[1], [0], [0], [1], [0, 0, 1, 1], [], []>} : vector<8x64xf32>, vector<64x32xf32>, vector<8x32xf32> -> vector<8x32xf32>
    %c0_10 = arith.constant 0 : index
    %c0_11 = arith.constant 0 : index
    %11 = vector.load %arg5[%c0_10, %c0_11] : memref<1x32xf32, #tpu.memory_space<vmem>>, vector<1x32xf32>
    %12 = vector.broadcast %11 : vector<1x32xf32> to vector<8x32xf32>
    %13 = arith.addf %10, %12 : vector<8x32xf32>
    %14 = arith.addf %1, %13 : vector<8x32xf32>
    %c0_12 = arith.constant 0 : index
    %c0_13 = arith.constant 0 : index
    %15 = vector.load %arg6[%c0_12, %c0_13] : memref<1x32xf32, #tpu.memory_space<vmem>>, vector<1x32xf32>
    %c0_14 = arith.constant 0 : index
    %c0_15 = arith.constant 0 : index
    %16 = vector.load %arg7[%c0_14, %c0_15] : memref<1x32xf32, #tpu.memory_space<vmem>>, vector<1x32xf32>
    %cst_16 = arith.constant dense<0.000000e+00> : vector<8xf32>
    %17 = vector.multi_reduction <add>, %14, %cst_16 [1] : vector<8x32xf32> to vector<8xf32>
    %18 = vector.shape_cast %17 : vector<8xf32> to vector<8x1xf32>
    %cst_17 = arith.constant 3.200000e+01 : f32
    %19 = vector.broadcast %cst_17 : f32 to vector<8x1xf32>
    %20 = arith.divf %18, %19 : vector<8x1xf32>
    %21 = vector.broadcast %20 : vector<8x1xf32> to vector<8x32xf32>
    %22 = arith.subf %14, %21 : vector<8x32xf32>
    %23 = arith.mulf %22, %22 : vector<8x32xf32>
    %cst_18 = arith.constant dense<0.000000e+00> : vector<8xf32>
    %24 = vector.multi_reduction <add>, %23, %cst_18 [1] : vector<8x32xf32> to vector<8xf32>
    %25 = vector.shape_cast %24 : vector<8xf32> to vector<8x1xf32>
    %cst_19 = arith.constant 3.200000e+01 : f32
    %26 = vector.broadcast %cst_19 : f32 to vector<8x1xf32>
    %27 = arith.divf %25, %26 : vector<8x1xf32>
    %28 = vector.broadcast %20 : vector<8x1xf32> to vector<8x32xf32>
    %29 = arith.subf %14, %28 : vector<8x32xf32>
    %cst_20 = arith.constant 9.99999974E-6 : f32
    %30 = vector.broadcast %cst_20 : f32 to vector<8x1xf32>
    %31 = arith.addf %27, %30 : vector<8x1xf32>
    %32 = math.rsqrt %31 : vector<8x1xf32>
    %33 = vector.broadcast %32 : vector<8x1xf32> to vector<8x32xf32>
    %34 = arith.mulf %29, %33 : vector<8x32xf32>
    %35 = vector.broadcast %15 : vector<1x32xf32> to vector<8x32xf32>
    %36 = arith.mulf %34, %35 : vector<8x32xf32>
    %37 = vector.broadcast %16 : vector<1x32xf32> to vector<8x32xf32>
    %38 = arith.addf %36, %37 : vector<8x32xf32>
    %c0_21 = arith.constant 0 : index
    %c0_22 = arith.constant 0 : index
    %c0_23 = arith.constant 0 : index
    %39 = vector.load %arg8[%c0_21, %c0_22, %c0_23] : memref<1x8x32xf32, #tpu.memory_space<vmem>>, vector<1x8x32xf32>
    %40 = vector.shape_cast %39 : vector<1x8x32xf32> to vector<8x32xf32>
    %41 = vector.shape_cast %38 : vector<8x32xf32> to vector<1x8x32xf32>
    tpu.vector_store %arg8[%c0_21, %c0_22, %c0_23], %41 {strides = array<i32>} : memref<1x8x32xf32, #tpu.memory_space<vmem>>, vector<1x8x32xf32>,
    return
  }
  func.func @transform_0(%arg0: i32) -> (i32, i32, i32) {
    %c0_i32 = arith.constant 0 : i32
    %c0_i32_0 = arith.constant 0 : i32
    %c0_i32_1 = arith.constant 0 : i32
    return %arg0, %c0_i32, %c0_i32_0 : i32, i32, i32
  }
  func.func @transform_1(%arg0: i32) -> (i32, i32) {
    %c0_i32 = arith.constant 0 : i32
    %c0_i32_0 = arith.constant 0 : i32
    %c0_i32_1 = arith.constant 0 : i32
    return %c0_i32, %c0_i32_0 : i32, i32
  }
  func.func @transform_2(%arg0: i32) -> (i32, i32) {
    %c0_i32 = arith.constant 0 : i32
    %c0_i32_0 = arith.constant 0 : i32
    %c0_i32_1 = arith.constant 0 : i32
    return %c0_i32, %c0_i32_0 : i32, i32
  }
  func.func @transform_3(%arg0: i32) -> (i32, i32) {
    %c0_i32 = arith.constant 0 : i32
    %c0_i32_0 = arith.constant 0 : i32
    %c0_i32_1 = arith.constant 0 : i32
    return %c0_i32, %c0_i32_0 : i32, i32
  }
  func.func @transform_4(%arg0: i32) -> (i32, i32) {
    %c0_i32 = arith.constant 0 : i32
    %c0_i32_0 = arith.constant 0 : i32
    %c0_i32_1 = arith.constant 0 : i32
    return %c0_i32, %c0_i32_0 : i32, i32
  }
  func.func @transform_5(%arg0: i32) -> (i32, i32) {
    %c0_i32 = arith.constant 0 : i32
    %c0_i32_0 = arith.constant 0 : i32
    %c0_i32_1 = arith.constant 0 : i32
    return %c0_i32, %c0_i32_0 : i32, i32
  }
  func.func @transform_6(%arg0: i32) -> (i32, i32) {
    %c0_i32 = arith.constant 0 : i32
    %c0_i32_0 = arith.constant 0 : i32
    %c0_i32_1 = arith.constant 0 : i32
    return %c0_i32, %c0_i32_0 : i32, i32
  }
  func.func @transform_7(%arg0: i32) -> (i32, i32, i32) {
    %c0_i32 = arith.constant 0 : i32
    %c0_i32_0 = arith.constant 0 : i32
    %c0_i32_1 = arith.constant 0 : i32
    return %arg0, %c0_i32, %c0_i32_0 : i32, i32, i32
  }
}

module attributes {stable_mosaic.version = 11 : i64} {
  func.func @_attn_block_kernel(%arg0: i32, %arg1: memref<1x8x32xf32, #tpu.memory_space<vmem>>, %arg2: memref<1x8x32xf32, #tpu.memory_space<vmem>>, %arg3: memref<32x32xf32, #tpu.memory_space<vmem>>, %arg4: memref<1x32xf32, #tpu.memory_space<vmem>>, %arg5: memref<32x64xf32, #tpu.memory_space<vmem>>, %arg6: memref<1x64xf32, #tpu.memory_space<vmem>>, %arg7: memref<32x32xf32, #tpu.memory_space<vmem>>, %arg8: memref<1x32xf32, #tpu.memory_space<vmem>>, %arg9: memref<1x32xf32, #tpu.memory_space<vmem>>, %arg10: memref<1x32xf32, #tpu.memory_space<vmem>>, %arg11: memref<1x8x32xf32, #tpu.memory_space<vmem>>) attributes {dimension_semantics = [#tpu.dimension_semantics<parallel>], iteration_bounds = array<i64: 2>, scalar_prefetch = 0 : i64, scratch_operands = 0 : i64, tpu.core_type = #tpu.core_type<tc>, window_params = [{transform_indices = @transform_0, window_bounds = array<i64: 1, 8, 32>}, {transform_indices = @transform_1, window_bounds = array<i64: 1, 8, 32>}, {pipeline_mode = #tpu.pipeline_mode<synchronous>, transform_indices = @transform_2, window_bounds = array<i64: 32, 32>}, {pipeline_mode = #tpu.pipeline_mode<synchronous>, transform_indices = @transform_3, window_bounds = array<i64: 1, 32>}, {pipeline_mode = #tpu.pipeline_mode<synchronous>, transform_indices = @transform_4, window_bounds = array<i64: 32, 64>}, {pipeline_mode = #tpu.pipeline_mode<synchronous>, transform_indices = @transform_5, window_bounds = array<i64: 1, 64>}, {pipeline_mode = #tpu.pipeline_mode<synchronous>, transform_indices = @transform_6, window_bounds = array<i64: 32, 32>}, {pipeline_mode = #tpu.pipeline_mode<synchronous>, transform_indices = @transform_7, window_bounds = array<i64: 1, 32>}, {pipeline_mode = #tpu.pipeline_mode<synchronous>, transform_indices = @transform_8, window_bounds = array<i64: 1, 32>}, {pipeline_mode = #tpu.pipeline_mode<synchronous>, transform_indices = @transform_9, window_bounds = array<i64: 1, 32>}, {transform_indices = @transform_10, window_bounds = array<i64: 1, 8, 32>}]} {
    %c0 = arith.constant 0 : index
    %c0_0 = arith.constant 0 : index
    %c0_1 = arith.constant 0 : index
    %0 = vector.load %arg1[%c0, %c0_0, %c0_1] : memref<1x8x32xf32, #tpu.memory_space<vmem>>, vector<1x8x32xf32>
    %1 = vector.shape_cast %0 : vector<1x8x32xf32> to vector<8x32xf32>
    %c0_2 = arith.constant 0 : index
    %c0_3 = arith.constant 0 : index
    %c0_4 = arith.constant 0 : index
    %2 = vector.load %arg2[%c0_2, %c0_3, %c0_4] : memref<1x8x32xf32, #tpu.memory_space<vmem>>, vector<1x8x32xf32>
    %3 = vector.shape_cast %2 : vector<1x8x32xf32> to vector<8x32xf32>
    %c0_5 = arith.constant 0 : index
    %c0_6 = arith.constant 0 : index
    %4 = vector.load %arg3[%c0_5, %c0_6] : memref<32x32xf32, #tpu.memory_space<vmem>>, vector<32x32xf32>
    %cst = arith.constant dense<0.000000e+00> : vector<8x32xf32>
    %5 = tpu.matmul %1, %4, %cst {dimension_numbers = #tpu.dot_dimension_numbers<[1], [0], [0], [1], [0, 0, 1, 1], [], []>} : vector<8x32xf32>, vector<32x32xf32>, vector<8x32xf32> -> vector<8x32xf32>
    %c0_7 = arith.constant 0 : index
    %c0_8 = arith.constant 0 : index
    %6 = vector.load %arg4[%c0_7, %c0_8] : memref<1x32xf32, #tpu.memory_space<vmem>>, vector<1x32xf32>
    %7 = vector.broadcast %6 : vector<1x32xf32> to vector<8x32xf32>
    %8 = arith.addf %5, %7 : vector<8x32xf32>
    %c0_9 = arith.constant 0 : index
    %c0_10 = arith.constant 0 : index
    %9 = vector.load %arg5[%c0_9, %c0_10] : memref<32x64xf32, #tpu.memory_space<vmem>>, vector<32x64xf32>
    %cst_11 = arith.constant dense<0.000000e+00> : vector<8x64xf32>
    %10 = tpu.matmul %3, %9, %cst_11 {dimension_numbers = #tpu.dot_dimension_numbers<[1], [0], [0], [1], [0, 0, 1, 1], [], []>} : vector<8x32xf32>, vector<32x64xf32>, vector<8x64xf32> -> vector<8x64xf32>
    %c0_12 = arith.constant 0 : index
    %c0_13 = arith.constant 0 : index
    %11 = vector.load %arg6[%c0_12, %c0_13] : memref<1x64xf32, #tpu.memory_space<vmem>>, vector<1x64xf32>
    %12 = vector.broadcast %11 : vector<1x64xf32> to vector<8x64xf32>
    %13 = arith.addf %10, %12 : vector<8x64xf32>
    %14 = vector.extract_strided_slice %13 {offsets = [0, 0], sizes = [8, 32], strides = [1, 1]} : vector<8x64xf32> to vector<8x32xf32>
    %15 = vector.extract_strided_slice %13 {offsets = [0, 32], sizes = [8, 32], strides = [1, 1]} : vector<8x64xf32> to vector<8x32xf32>
    %c0_14 = arith.constant 0 : index
    %c0_15 = arith.constant 0 : index
    %16 = vector.load %arg7[%c0_14, %c0_15] : memref<32x32xf32, #tpu.memory_space<vmem>>, vector<32x32xf32>
    %cst_16 = arith.constant 0.000000e+00 : f32
    %17 = vector.broadcast %cst_16 : f32 to vector<8x32xf32>
    %18 = vector.extract_strided_slice %8 {offsets = [0, 0], sizes = [8, 8], strides = [1, 1]} : vector<8x32xf32> to vector<8x8xf32>
    %19 = vector.extract_strided_slice %14 {offsets = [0, 0], sizes = [8, 8], strides = [1, 1]} : vector<8x32xf32> to vector<8x8xf32>
    %20 = vector.extract_strided_slice %15 {offsets = [0, 0], sizes = [8, 8], strides = [1, 1]} : vector<8x32xf32> to vector<8x8xf32>
    %21 = tpu.transpose %19, [1, 0] : vector<8x8xf32> -> vector<8x8xf32>
    %cst_17 = arith.constant dense<0.000000e+00> : vector<8x8xf32>
    %22 = tpu.matmul %18, %21, %cst_17 {dimension_numbers = #tpu.dot_dimension_numbers<[1], [0], [0], [1], [0, 0, 1, 1], [], []>} : vector<8x8xf32>, vector<8x8xf32>, vector<8x8xf32> -> vector<8x8xf32>
    %cst_18 = arith.constant 0.353553385 : f32
    %23 = vector.broadcast %cst_18 : f32 to vector<8x8xf32>
    %24 = arith.mulf %22, %23 : vector<8x8xf32>
    %cst_19 = arith.constant dense<0xFF800000> : vector<8xf32>
    %25 = vector.multi_reduction <maximumf>, %24, %cst_19 [1] : vector<8x8xf32> to vector<8xf32>
    %26 = vector.shape_cast %25 : vector<8xf32> to vector<8x1xf32>
    %27 = vector.broadcast %26 : vector<8x1xf32> to vector<8x8xf32>
    %28 = arith.subf %24, %27 : vector<8x8xf32>
    %29 = math.exp %28 : vector<8x8xf32>
    %cst_20 = arith.constant dense<0.000000e+00> : vector<8xf32>
    %30 = vector.multi_reduction <add>, %29, %cst_20 [1] : vector<8x8xf32> to vector<8xf32>
    %31 = vector.shape_cast %30 : vector<8xf32> to vector<8x1xf32>
    %32 = tpu.reciprocal %31 {approx = true} : vector<8x1xf32> -> vector<8x1xf32>
    %33 = vector.broadcast %32 : vector<8x1xf32> to vector<8x8xf32>
    %34 = arith.mulf %29, %33 : vector<8x8xf32>
    %cst_21 = arith.constant dense<0.000000e+00> : vector<8x8xf32>
    %35 = tpu.matmul %34, %20, %cst_21 {dimension_numbers = #tpu.dot_dimension_numbers<[1], [0], [0], [1], [0, 0, 1, 1], [], []>} : vector<8x8xf32>, vector<8x8xf32>, vector<8x8xf32> -> vector<8x8xf32>
    %36 = vector.extract_strided_slice %16 {offsets = [0, 0], sizes = [8, 32], strides = [1, 1]} : vector<32x32xf32> to vector<8x32xf32>
    %cst_22 = arith.constant dense<0.000000e+00> : vector<8x32xf32>
    %37 = tpu.matmul %35, %36, %cst_22 {dimension_numbers = #tpu.dot_dimension_numbers<[1], [0], [0], [1], [0, 0, 1, 1], [], []>} : vector<8x8xf32>, vector<8x32xf32>, vector<8x32xf32> -> vector<8x32xf32>
    %38 = arith.addf %17, %37 : vector<8x32xf32>
    %39 = vector.extract_strided_slice %8 {offsets = [0, 8], sizes = [8, 8], strides = [1, 1]} : vector<8x32xf32> to vector<8x8xf32>
    %40 = vector.extract_strided_slice %14 {offsets = [0, 8], sizes = [8, 8], strides = [1, 1]} : vector<8x32xf32> to vector<8x8xf32>
    %41 = vector.extract_strided_slice %15 {offsets = [0, 8], sizes = [8, 8], strides = [1, 1]} : vector<8x32xf32> to vector<8x8xf32>
    %42 = tpu.transpose %40, [1, 0] : vector<8x8xf32> -> vector<8x8xf32>
    %cst_23 = arith.constant dense<0.000000e+00> : vector<8x8xf32>
    %43 = tpu.matmul %39, %42, %cst_23 {dimension_numbers = #tpu.dot_dimension_numbers<[1], [0], [0], [1], [0, 0, 1, 1], [], []>} : vector<8x8xf32>, vector<8x8xf32>, vector<8x8xf32> -> vector<8x8xf32>
    %cst_24 = arith.constant 0.353553385 : f32
    %44 = vector.broadcast %cst_24 : f32 to vector<8x8xf32>
    %45 = arith.mulf %43, %44 : vector<8x8xf32>
    %cst_25 = arith.constant dense<0xFF800000> : vector<8xf32>
    %46 = vector.multi_reduction <maximumf>, %45, %cst_25 [1] : vector<8x8xf32> to vector<8xf32>
    %47 = vector.shape_cast %46 : vector<8xf32> to vector<8x1xf32>
    %48 = vector.broadcast %47 : vector<8x1xf32> to vector<8x8xf32>
    %49 = arith.subf %45, %48 : vector<8x8xf32>
    %50 = math.exp %49 : vector<8x8xf32>
    %cst_26 = arith.constant dense<0.000000e+00> : vector<8xf32>
    %51 = vector.multi_reduction <add>, %50, %cst_26 [1] : vector<8x8xf32> to vector<8xf32>
    %52 = vector.shape_cast %51 : vector<8xf32> to vector<8x1xf32>
    %53 = tpu.reciprocal %52 {approx = true} : vector<8x1xf32> -> vector<8x1xf32>
    %54 = vector.broadcast %53 : vector<8x1xf32> to vector<8x8xf32>
    %55 = arith.mulf %50, %54 : vector<8x8xf32>
    %cst_27 = arith.constant dense<0.000000e+00> : vector<8x8xf32>
    %56 = tpu.matmul %55, %41, %cst_27 {dimension_numbers = #tpu.dot_dimension_numbers<[1], [0], [0], [1], [0, 0, 1, 1], [], []>} : vector<8x8xf32>, vector<8x8xf32>, vector<8x8xf32> -> vector<8x8xf32>
    %57 = vector.extract_strided_slice %16 {offsets = [8, 0], sizes = [8, 32], strides = [1, 1]} : vector<32x32xf32> to vector<8x32xf32>
    %cst_28 = arith.constant dense<0.000000e+00> : vector<8x32xf32>
    %58 = tpu.matmul %56, %57, %cst_28 {dimension_numbers = #tpu.dot_dimension_numbers<[1], [0], [0], [1], [0, 0, 1, 1], [], []>} : vector<8x8xf32>, vector<8x32xf32>, vector<8x32xf32> -> vector<8x32xf32>
    %59 = arith.addf %38, %58 : vector<8x32xf32>
    %60 = vector.extract_strided_slice %8 {offsets = [0, 16], sizes = [8, 8], strides = [1, 1]} : vector<8x32xf32> to vector<8x8xf32>
    %61 = vector.extract_strided_slice %14 {offsets = [0, 16], sizes = [8, 8], strides = [1, 1]} : vector<8x32xf32> to vector<8x8xf32>
    %62 = vector.extract_strided_slice %15 {offsets = [0, 16], sizes = [8, 8], strides = [1, 1]} : vector<8x32xf32> to vector<8x8xf32>
    %63 = tpu.transpose %61, [1, 0] : vector<8x8xf32> -> vector<8x8xf32>
    %cst_29 = arith.constant dense<0.000000e+00> : vector<8x8xf32>
    %64 = tpu.matmul %60, %63, %cst_29 {dimension_numbers = #tpu.dot_dimension_numbers<[1], [0], [0], [1], [0, 0, 1, 1], [], []>} : vector<8x8xf32>, vector<8x8xf32>, vector<8x8xf32> -> vector<8x8xf32>
    %cst_30 = arith.constant 0.353553385 : f32
    %65 = vector.broadcast %cst_30 : f32 to vector<8x8xf32>
    %66 = arith.mulf %64, %65 : vector<8x8xf32>
    %cst_31 = arith.constant dense<0xFF800000> : vector<8xf32>
    %67 = vector.multi_reduction <maximumf>, %66, %cst_31 [1] : vector<8x8xf32> to vector<8xf32>
    %68 = vector.shape_cast %67 : vector<8xf32> to vector<8x1xf32>
    %69 = vector.broadcast %68 : vector<8x1xf32> to vector<8x8xf32>
    %70 = arith.subf %66, %69 : vector<8x8xf32>
    %71 = math.exp %70 : vector<8x8xf32>
    %cst_32 = arith.constant dense<0.000000e+00> : vector<8xf32>
    %72 = vector.multi_reduction <add>, %71, %cst_32 [1] : vector<8x8xf32> to vector<8xf32>
    %73 = vector.shape_cast %72 : vector<8xf32> to vector<8x1xf32>
    %74 = tpu.reciprocal %73 {approx = true} : vector<8x1xf32> -> vector<8x1xf32>
    %75 = vector.broadcast %74 : vector<8x1xf32> to vector<8x8xf32>
    %76 = arith.mulf %71, %75 : vector<8x8xf32>
    %cst_33 = arith.constant dense<0.000000e+00> : vector<8x8xf32>
    %77 = tpu.matmul %76, %62, %cst_33 {dimension_numbers = #tpu.dot_dimension_numbers<[1], [0], [0], [1], [0, 0, 1, 1], [], []>} : vector<8x8xf32>, vector<8x8xf32>, vector<8x8xf32> -> vector<8x8xf32>
    %78 = vector.extract_strided_slice %16 {offsets = [16, 0], sizes = [8, 32], strides = [1, 1]} : vector<32x32xf32> to vector<8x32xf32>
    %cst_34 = arith.constant dense<0.000000e+00> : vector<8x32xf32>
    %79 = tpu.matmul %77, %78, %cst_34 {dimension_numbers = #tpu.dot_dimension_numbers<[1], [0], [0], [1], [0, 0, 1, 1], [], []>} : vector<8x8xf32>, vector<8x32xf32>, vector<8x32xf32> -> vector<8x32xf32>
    %80 = arith.addf %59, %79 : vector<8x32xf32>
    %81 = vector.extract_strided_slice %8 {offsets = [0, 24], sizes = [8, 8], strides = [1, 1]} : vector<8x32xf32> to vector<8x8xf32>
    %82 = vector.extract_strided_slice %14 {offsets = [0, 24], sizes = [8, 8], strides = [1, 1]} : vector<8x32xf32> to vector<8x8xf32>
    %83 = vector.extract_strided_slice %15 {offsets = [0, 24], sizes = [8, 8], strides = [1, 1]} : vector<8x32xf32> to vector<8x8xf32>
    %84 = tpu.transpose %82, [1, 0] : vector<8x8xf32> -> vector<8x8xf32>
    %cst_35 = arith.constant dense<0.000000e+00> : vector<8x8xf32>
    %85 = tpu.matmul %81, %84, %cst_35 {dimension_numbers = #tpu.dot_dimension_numbers<[1], [0], [0], [1], [0, 0, 1, 1], [], []>} : vector<8x8xf32>, vector<8x8xf32>, vector<8x8xf32> -> vector<8x8xf32>
    %cst_36 = arith.constant 0.353553385 : f32
    %86 = vector.broadcast %cst_36 : f32 to vector<8x8xf32>
    %87 = arith.mulf %85, %86 : vector<8x8xf32>
    %cst_37 = arith.constant dense<0xFF800000> : vector<8xf32>
    %88 = vector.multi_reduction <maximumf>, %87, %cst_37 [1] : vector<8x8xf32> to vector<8xf32>
    %89 = vector.shape_cast %88 : vector<8xf32> to vector<8x1xf32>
    %90 = vector.broadcast %89 : vector<8x1xf32> to vector<8x8xf32>
    %91 = arith.subf %87, %90 : vector<8x8xf32>
    %92 = math.exp %91 : vector<8x8xf32>
    %cst_38 = arith.constant dense<0.000000e+00> : vector<8xf32>
    %93 = vector.multi_reduction <add>, %92, %cst_38 [1] : vector<8x8xf32> to vector<8xf32>
    %94 = vector.shape_cast %93 : vector<8xf32> to vector<8x1xf32>
    %95 = tpu.reciprocal %94 {approx = true} : vector<8x1xf32> -> vector<8x1xf32>
    %96 = vector.broadcast %95 : vector<8x1xf32> to vector<8x8xf32>
    %97 = arith.mulf %92, %96 : vector<8x8xf32>
    %cst_39 = arith.constant dense<0.000000e+00> : vector<8x8xf32>
    %98 = tpu.matmul %97, %83, %cst_39 {dimension_numbers = #tpu.dot_dimension_numbers<[1], [0], [0], [1], [0, 0, 1, 1], [], []>} : vector<8x8xf32>, vector<8x8xf32>, vector<8x8xf32> -> vector<8x8xf32>
    %99 = vector.extract_strided_slice %16 {offsets = [24, 0], sizes = [8, 32], strides = [1, 1]} : vector<32x32xf32> to vector<8x32xf32>
    %cst_40 = arith.constant dense<0.000000e+00> : vector<8x32xf32>
    %100 = tpu.matmul %98, %99, %cst_40 {dimension_numbers = #tpu.dot_dimension_numbers<[1], [0], [0], [1], [0, 0, 1, 1], [], []>} : vector<8x8xf32>, vector<8x32xf32>, vector<8x32xf32> -> vector<8x32xf32>
    %101 = arith.addf %80, %100 : vector<8x32xf32>
    %102 = arith.addf %1, %101 : vector<8x32xf32>
    %c0_41 = arith.constant 0 : index
    %c0_42 = arith.constant 0 : index
    %103 = vector.load %arg8[%c0_41, %c0_42] : memref<1x32xf32, #tpu.memory_space<vmem>>, vector<1x32xf32>
    %104 = vector.broadcast %103 : vector<1x32xf32> to vector<8x32xf32>
    %105 = arith.addf %102, %104 : vector<8x32xf32>
    %c0_43 = arith.constant 0 : index
    %c0_44 = arith.constant 0 : index
    %106 = vector.load %arg9[%c0_43, %c0_44] : memref<1x32xf32, #tpu.memory_space<vmem>>, vector<1x32xf32>
    %c0_45 = arith.constant 0 : index
    %c0_46 = arith.constant 0 : index
    %107 = vector.load %arg10[%c0_45, %c0_46] : memref<1x32xf32, #tpu.memory_space<vmem>>, vector<1x32xf32>
    %cst_47 = arith.constant dense<0.000000e+00> : vector<8xf32>
    %108 = vector.multi_reduction <add>, %105, %cst_47 [1] : vector<8x32xf32> to vector<8xf32>
    %109 = vector.shape_cast %108 : vector<8xf32> to vector<8x1xf32>
    %cst_48 = arith.constant 3.200000e+01 : f32
    %110 = vector.broadcast %cst_48 : f32 to vector<8x1xf32>
    %111 = arith.divf %109, %110 : vector<8x1xf32>
    %112 = vector.broadcast %111 : vector<8x1xf32> to vector<8x32xf32>
    %113 = arith.subf %105, %112 : vector<8x32xf32>
    %114 = arith.mulf %113, %113 : vector<8x32xf32>
    %cst_49 = arith.constant dense<0.000000e+00> : vector<8xf32>
    %115 = vector.multi_reduction <add>, %114, %cst_49 [1] : vector<8x32xf32> to vector<8xf32>
    %116 = vector.shape_cast %115 : vector<8xf32> to vector<8x1xf32>
    %cst_50 = arith.constant 3.200000e+01 : f32
    %117 = vector.broadcast %cst_50 : f32 to vector<8x1xf32>
    %118 = arith.divf %116, %117 : vector<8x1xf32>
    %119 = vector.broadcast %111 : vector<8x1xf32> to vector<8x32xf32>
    %120 = arith.subf %105, %119 : vector<8x32xf32>
    %cst_51 = arith.constant 9.99999974E-6 : f32
    %121 = vector.broadcast %cst_51 : f32 to vector<8x1xf32>
    %122 = arith.addf %118, %121 : vector<8x1xf32>
    %123 = math.rsqrt %122 : vector<8x1xf32>
    %124 = vector.broadcast %123 : vector<8x1xf32> to vector<8x32xf32>
    %125 = arith.mulf %120, %124 : vector<8x32xf32>
    %126 = vector.broadcast %106 : vector<1x32xf32> to vector<8x32xf32>
    %127 = arith.mulf %125, %126 : vector<8x32xf32>
    %128 = vector.broadcast %107 : vector<1x32xf32> to vector<8x32xf32>
    %129 = arith.addf %127, %128 : vector<8x32xf32>
    %c0_52 = arith.constant 0 : index
    %c0_53 = arith.constant 0 : index
    %c0_54 = arith.constant 0 : index
    %130 = vector.load %arg11[%c0_52, %c0_53, %c0_54] : memref<1x8x32xf32, #tpu.memory_space<vmem>>, vector<1x8x32xf32>
    %131 = vector.shape_cast %130 : vector<1x8x32xf32> to vector<8x32xf32>
    %132 = vector.shape_cast %129 : vector<8x32xf32> to vector<1x8x32xf32>
    tpu.vector_store %arg11[%c0_52, %c0_53, %c0_54], %132 {strides = array<i32>} : memref<1x8x32xf32, #tpu.memory_space<vmem>>, vector<1x8x32xf32>,
    return
  }
  func.func @transform_0(%arg0: i32) -> (i32, i32, i32) {
    %c0_i32 = arith.constant 0 : i32
    %c0_i32_0 = arith.constant 0 : i32
    %c0_i32_1 = arith.constant 0 : i32
    return %arg0, %c0_i32, %c0_i32_0 : i32, i32, i32
  }
  func.func @transform_1(%arg0: i32) -> (i32, i32, i32) {
    %c0_i32 = arith.constant 0 : i32
    %c0_i32_0 = arith.constant 0 : i32
    %c0_i32_1 = arith.constant 0 : i32
    return %arg0, %c0_i32, %c0_i32_0 : i32, i32, i32
  }
  func.func @transform_2(%arg0: i32) -> (i32, i32) {
    %c0_i32 = arith.constant 0 : i32
    %c0_i32_0 = arith.constant 0 : i32
    %c0_i32_1 = arith.constant 0 : i32
    return %c0_i32, %c0_i32_0 : i32, i32
  }
  func.func @transform_3(%arg0: i32) -> (i32, i32) {
    %c0_i32 = arith.constant 0 : i32
    %c0_i32_0 = arith.constant 0 : i32
    %c0_i32_1 = arith.constant 0 : i32
    return %c0_i32, %c0_i32_0 : i32, i32
  }
  func.func @transform_4(%arg0: i32) -> (i32, i32) {
    %c0_i32 = arith.constant 0 : i32
    %c0_i32_0 = arith.constant 0 : i32
    %c0_i32_1 = arith.constant 0 : i32
    return %c0_i32, %c0_i32_0 : i32, i32
  }
  func.func @transform_5(%arg0: i32) -> (i32, i32) {
    %c0_i32 = arith.constant 0 : i32
    %c0_i32_0 = arith.constant 0 : i32
    %c0_i32_1 = arith.constant 0 : i32
    return %c0_i32, %c0_i32_0 : i32, i32
  }
  func.func @transform_6(%arg0: i32) -> (i32, i32) {
    %c0_i32 = arith.constant 0 : i32
    %c0_i32_0 = arith.constant 0 : i32
    %c0_i32_1 = arith.constant 0 : i32
    return %c0_i32, %c0_i32_0 : i32, i32
  }
  func.func @transform_7(%arg0: i32) -> (i32, i32) {
    %c0_i32 = arith.constant 0 : i32
    %c0_i32_0 = arith.constant 0 : i32
    %c0_i32_1 = arith.constant 0 : i32
    return %c0_i32, %c0_i32_0 : i32, i32
  }
  func.func @transform_8(%arg0: i32) -> (i32, i32) {
    %c0_i32 = arith.constant 0 : i32
    %c0_i32_0 = arith.constant 0 : i32
    %c0_i32_1 = arith.constant 0 : i32
    return %c0_i32, %c0_i32_0 : i32, i32
  }
  func.func @transform_9(%arg0: i32) -> (i32, i32) {
    %c0_i32 = arith.constant 0 : i32
    %c0_i32_0 = arith.constant 0 : i32
    %c0_i32_1 = arith.constant 0 : i32
    return %c0_i32, %c0_i32_0 : i32, i32
  }
  func.func @transform_10(%arg0: i32) -> (i32, i32, i32) {
    %c0_i32 = arith.constant 0 : i32
    %c0_i32_0 = arith.constant 0 : i32
    %c0_i32_1 = arith.constant 0 : i32
    return %arg0, %c0_i32, %c0_i32_0 : i32, i32, i32
  }
}

module attributes {stable_mosaic.version = 11 : i64} {
  func.func @_ln_proj_kernel(%arg0: i32, %arg1: memref<1x8x32xf32, #tpu.memory_space<vmem>>, %arg2: memref<1x32xf32, #tpu.memory_space<vmem>>, %arg3: memref<1x32xf32, #tpu.memory_space<vmem>>, %arg4: memref<32x50xf32, #tpu.memory_space<vmem>>, %arg5: memref<1x50xf32, #tpu.memory_space<vmem>>, %arg6: memref<1x8x50xf32, #tpu.memory_space<vmem>>) attributes {dimension_semantics = [#tpu.dimension_semantics<parallel>], iteration_bounds = array<i64: 2>, scalar_prefetch = 0 : i64, scratch_operands = 0 : i64, tpu.core_type = #tpu.core_type<tc>, window_params = [{transform_indices = @transform_0, window_bounds = array<i64: 1, 8, 32>}, {pipeline_mode = #tpu.pipeline_mode<synchronous>, transform_indices = @transform_1, window_bounds = array<i64: 1, 32>}, {pipeline_mode = #tpu.pipeline_mode<synchronous>, transform_indices = @transform_2, window_bounds = array<i64: 1, 32>}, {pipeline_mode = #tpu.pipeline_mode<synchronous>, transform_indices = @transform_3, window_bounds = array<i64: 32, 50>}, {pipeline_mode = #tpu.pipeline_mode<synchronous>, transform_indices = @transform_4, window_bounds = array<i64: 1, 50>}, {transform_indices = @transform_5, window_bounds = array<i64: 1, 8, 50>}]} {
    %c0 = arith.constant 0 : index
    %c0_0 = arith.constant 0 : index
    %c0_1 = arith.constant 0 : index
    %0 = vector.load %arg1[%c0, %c0_0, %c0_1] : memref<1x8x32xf32, #tpu.memory_space<vmem>>, vector<1x8x32xf32>
    %1 = vector.shape_cast %0 : vector<1x8x32xf32> to vector<8x32xf32>
    %c0_2 = arith.constant 0 : index
    %c0_3 = arith.constant 0 : index
    %2 = vector.load %arg2[%c0_2, %c0_3] : memref<1x32xf32, #tpu.memory_space<vmem>>, vector<1x32xf32>
    %c0_4 = arith.constant 0 : index
    %c0_5 = arith.constant 0 : index
    %3 = vector.load %arg3[%c0_4, %c0_5] : memref<1x32xf32, #tpu.memory_space<vmem>>, vector<1x32xf32>
    %cst = arith.constant dense<0.000000e+00> : vector<8xf32>
    %4 = vector.multi_reduction <add>, %1, %cst [1] : vector<8x32xf32> to vector<8xf32>
    %5 = vector.shape_cast %4 : vector<8xf32> to vector<8x1xf32>
    %cst_6 = arith.constant 3.200000e+01 : f32
    %6 = vector.broadcast %cst_6 : f32 to vector<8x1xf32>
    %7 = arith.divf %5, %6 : vector<8x1xf32>
    %8 = vector.broadcast %7 : vector<8x1xf32> to vector<8x32xf32>
    %9 = arith.subf %1, %8 : vector<8x32xf32>
    %10 = arith.mulf %9, %9 : vector<8x32xf32>
    %cst_7 = arith.constant dense<0.000000e+00> : vector<8xf32>
    %11 = vector.multi_reduction <add>, %10, %cst_7 [1] : vector<8x32xf32> to vector<8xf32>
    %12 = vector.shape_cast %11 : vector<8xf32> to vector<8x1xf32>
    %cst_8 = arith.constant 3.200000e+01 : f32
    %13 = vector.broadcast %cst_8 : f32 to vector<8x1xf32>
    %14 = arith.divf %12, %13 : vector<8x1xf32>
    %15 = vector.broadcast %7 : vector<8x1xf32> to vector<8x32xf32>
    %16 = arith.subf %1, %15 : vector<8x32xf32>
    %cst_9 = arith.constant 9.99999974E-6 : f32
    %17 = vector.broadcast %cst_9 : f32 to vector<8x1xf32>
    %18 = arith.addf %14, %17 : vector<8x1xf32>
    %19 = math.rsqrt %18 : vector<8x1xf32>
    %20 = vector.broadcast %19 : vector<8x1xf32> to vector<8x32xf32>
    %21 = arith.mulf %16, %20 : vector<8x32xf32>
    %22 = vector.broadcast %2 : vector<1x32xf32> to vector<8x32xf32>
    %23 = arith.mulf %21, %22 : vector<8x32xf32>
    %24 = vector.broadcast %3 : vector<1x32xf32> to vector<8x32xf32>
    %25 = arith.addf %23, %24 : vector<8x32xf32>
    %c0_10 = arith.constant 0 : index
    %c0_11 = arith.constant 0 : index
    %26 = vector.load %arg4[%c0_10, %c0_11] : memref<32x50xf32, #tpu.memory_space<vmem>>, vector<32x50xf32>
    %cst_12 = arith.constant dense<0.000000e+00> : vector<8x50xf32>
    %27 = tpu.matmul %25, %26, %cst_12 {dimension_numbers = #tpu.dot_dimension_numbers<[1], [0], [0], [1], [0, 0, 1, 1], [], []>} : vector<8x32xf32>, vector<32x50xf32>, vector<8x50xf32> -> vector<8x50xf32>
    %c0_13 = arith.constant 0 : index
    %c0_14 = arith.constant 0 : index
    %28 = vector.load %arg5[%c0_13, %c0_14] : memref<1x50xf32, #tpu.memory_space<vmem>>, vector<1x50xf32>
    %29 = vector.broadcast %28 : vector<1x50xf32> to vector<8x50xf32>
    %30 = arith.addf %27, %29 : vector<8x50xf32>
    %c0_15 = arith.constant 0 : index
    %c0_16 = arith.constant 0 : index
    %c0_17 = arith.constant 0 : index
    %31 = vector.load %arg6[%c0_15, %c0_16, %c0_17] : memref<1x8x50xf32, #tpu.memory_space<vmem>>, vector<1x8x50xf32>
    %32 = vector.shape_cast %31 : vector<1x8x50xf32> to vector<8x50xf32>
    %33 = vector.shape_cast %30 : vector<8x50xf32> to vector<1x8x50xf32>
    tpu.vector_store %arg6[%c0_15, %c0_16, %c0_17], %33 {strides = array<i32>} : memref<1x8x50xf32, #tpu.memory_space<vmem>>, vector<1x8x50xf32>,
    return
  }
  func.func @transform_0(%arg0: i32) -> (i32, i32, i32) {
    %c0_i32 = arith.constant 0 : i32
    %c0_i32_0 = arith.constant 0 : i32
    %c0_i32_1 = arith.constant 0 : i32
    return %arg0, %c0_i32, %c0_i32_0 : i32, i32, i32
  }
  func.func @transform_1(%arg0: i32) -> (i32, i32) {
    %c0_i32 = arith.constant 0 : i32
    %c0_i32_0 = arith.constant 0 : i32
    %c0_i32_1 = arith.constant 0 : i32
    return %c0_i32, %c0_i32_0 : i32, i32
  }
  func.func @transform_2(%arg0: i32) -> (i32, i32) {
    %c0_i32 = arith.constant 0 : i32
    %c0_i32_0 = arith.constant 0 : i32
    %c0_i32_1 = arith.constant 0 : i32
    return %c0_i32, %c0_i32_0 : i32, i32
  }
  func.func @transform_3(%arg0: i32) -> (i32, i32) {
    %c0_i32 = arith.constant 0 : i32
    %c0_i32_0 = arith.constant 0 : i32
    %c0_i32_1 = arith.constant 0 : i32
    return %c0_i32, %c0_i32_0 : i32, i32
  }
  func.func @transform_4(%arg0: i32) -> (i32, i32) {
    %c0_i32 = arith.constant 0 : i32
    %c0_i32_0 = arith.constant 0 : i32
    %c0_i32_1 = arith.constant 0 : i32
    return %c0_i32, %c0_i32_0 : i32, i32
  }
  func.func @transform_5(%arg0: i32) -> (i32, i32, i32) {
    %c0_i32 = arith.constant 0 : i32
    %c0_i32_0 = arith.constant 0 : i32
    %c0_i32_1 = arith.constant 0 : i32
    return %arg0, %c0_i32, %c0_i32_0 : i32, i32, i32
  }
}

</mosaic_0001>

<llo_original>
// kernel: transformer_forward.23
$region0: #{transformer_forward.23}
  #allocation0 [shape = 'u32[]', space=smem, size = 0x4, offset = 0x4, fixed_abs, tag = 'smem constant byte address 0x4 - core index']
  #allocation1 [shape = 'u32[144,128]{1,0:T(1,128)}', space=vmem, size = 0x12000, scoped, tag = 'internal scratch']
  %s0 = inlined_call_operand.vmem [shape: f32[2,8,32], index: 0, kind: input, shape index: {}]
  %s1 = inlined_call_operand.vmem [shape: f32[1,32], index: 1, kind: input, shape index: {}]
  %s2 = inlined_call_operand.vmem [shape: f32[1,32], index: 2, kind: input, shape index: {}]
  %s3 = inlined_call_operand.vmem [shape: f32[2,8,32], index: 3, kind: output, shape index: {}]
  %s4 = sld [smem:[#allocation0]]
  $region45: #{transformer_forward.23} parent=0
    _
  %s6 = ssub.s32 1, %s4
  %s7 = scalar_select 0, %s6, %s4
  loop: start=0, step=1, limit=4
  $region2: #{transformer_forward.23} parent=0 // loop_pre_header
    _
  $region3: #{transformer_forward.23} parent=0 // loop_header
    %s9 = sphi 0, %s13
    %p10 = scmp.ge.s32.totalorder %s9, 4
    %s19 = sphi 0, %s21
    %s22 = sphi 0, %s19
    %s23 = sphi 0, %s22
    %s39 = sphi 0, %s23
    %s43 = sphi 0, %s43
    %s45 = sphi 0, %s43
    %s46 = sphi 0, %s45
    %s60 = sphi 0, %s46
    %s64 = sphi 0, %s64
    %s66 = sphi 0, %s64
    %s67 = sphi 0, %s66
    %s81 = sphi 0, %s67
    %s87 = sphi 0, %s89
    %s90 = sphi 0, %s87
    %s91 = sphi 0, %s90
    %s107 = sphi 0, %s91
  $region4: #{transformer_forward.23} parent=0 // loop_header_branch
    %12 = sbr.rel (%p10) target = $region8
  $region5: #{transformer_forward.23} parent=0 // loop_body
    %s14 = ssub.s32 %s9, 1
    %s15 = ssub.s32 %s9, 2
    %s16 = sadd.s32 %s9, 1
    %s17 = ssub.s32 %s9, %s16
    %p18 = scmp.eq.s32.totalorder %s17, 0
    %s20 = sadd.s32 %s19, 1
    %s21 = scalar_select %p18, %s19, %s20
    %p24 = pneg %p18
    %p25 = scmp.eq.s32.totalorder %s9, 1
    %p26 = por %p24, %p25
    %p27 = scmp.ne.s32.totalorder %s19, %s22
    %p28 = scmp.eq.s32.totalorder %s9, 0
    %p29 = por %p27, %p28
    %p30 = scmp.ne.s32.totalorder %s19, %s22
    %p31 = scmp.eq.s32.totalorder %s14, 1
    %p32 = por %p30, %p31
    %p33 = scmp.ne.s32.totalorder %s22, %s23
    %p34 = scmp.eq.s32.totalorder %s14, 0
    %p35 = por %p33, %p34
    %p36 = scmp.ne.s32.totalorder %s22, %s23
    %p37 = scmp.eq.s32.totalorder %s15, 1
    %p38 = por %p36, %p37
    %p40 = scmp.ne.s32.totalorder %s23, %s39
    %p41 = scmp.eq.s32.totalorder %s15, 0
    %p42 = por %p40, %p41
    %s44 = sadd.s32 %s43, 1
    %p47 = scmp.eq.s32.totalorder %s9, 1
    %p48 = scmp.ne.s32.totalorder %s43, %s45
    %p49 = scmp.eq.s32.totalorder %s9, 0
    %p50 = por %p48, %p49
    %p51 = scmp.ne.s32.totalorder %s43, %s45
    %p52 = scmp.eq.s32.totalorder %s14, 1
    %p53 = por %p51, %p52
    %p54 = scmp.ne.s32.totalorder %s45, %s46
    %p55 = scmp.eq.s32.totalorder %s14, 0
    %p56 = por %p54, %p55
    %p57 = scmp.ne.s32.totalorder %s45, %s46
    %p58 = scmp.eq.s32.totalorder %s15, 1
    %p59 = por %p57, %p58
    %p61 = scmp.ne.s32.totalorder %s46, %s60
    %p62 = scmp.eq.s32.totalorder %s15, 0
    %p63 = por %p61, %p62
    %s65 = sadd.s32 %s64, 1
    %p68 = scmp.eq.s32.totalorder %s9, 1
    %p69 = scmp.ne.s32.totalorder %s64, %s66
    %p70 = scmp.eq.s32.totalorder %s9, 0
    %p71 = por %p69, %p70
    %p72 = scmp.ne.s32.totalorder %s64, %s66
    %p73 = scmp.eq.s32.totalorder %s14, 1
    %p74 = por %p72, %p73
    %p75 = scmp.ne.s32.totalorder %s66, %s67
    %p76 = scmp.eq.s32.totalorder %s14, 0
    %p77 = por %p75, %p76
    %p78 = scmp.ne.s32.totalorder %s66, %s67
    %p79 = scmp.eq.s32.totalorder %s15, 1
    %p80 = por %p78, %p79
    %p82 = scmp.ne.s32.totalorder %s67, %s81
    %p83 = scmp.eq.s32.totalorder %s15, 0
    %p84 = por %p82, %p83
    %s85 = ssub.s32 %s9, %s16
    %p86 = scmp.eq.s32.totalorder %s85, 0
    %s88 = sadd.s32 %s87, 1
    %s89 = scalar_select %p86, %s87, %s88
    %p92 = pneg %p86
    %p93 = scmp.eq.s32.totalorder %s9, 1
    %p94 = por %p92, %p93
    %p95 = scmp.ne.s32.totalorder %s87, %s90
    %p96 = scmp.eq.s32.totalorder %s9, 0
    %p97 = por %p95, %p96
    %p98 = scmp.ne.s32.totalorder %s87, %s90
    %p99 = scmp.eq.s32.totalorder %s14, 1
    %p100 = por %p98, %p99
    %p101 = scmp.ne.s32.totalorder %s90, %s91
    %p102 = scmp.eq.s32.totalorder %s14, 0
    %p103 = por %p101, %p102
    %p104 = scmp.ne.s32.totalorder %s90, %s91
    %p105 = scmp.eq.s32.totalorder %s15, 1
    %p106 = por %p104, %p105
    %p108 = scmp.ne.s32.totalorder %s91, %s107
    %p109 = scmp.eq.s32.totalorder %s15, 0
    %p110 = por %p108, %p109
    %p111 = scmp.le.s32.totalorder 1, %s9
    %p112 = scmp.lt.s32.totalorder %s9, 3
    %p113 = pnand %p111, %p112
    %p114 = pneg %p113
    // Predicated region
    $region9: #{transformer_forward.23} parent=5 // pred_check
      _
    $region10: #{transformer_forward.23} parent=5 // pred_check_branch
      %116 = sbr.rel (%p113) target = $region12
    $region11: #{transformer_forward.23} parent=5 // pred_region
      %s117 = ssub.s32 %s9, 1
      // Predicated region
      $region13: #{transformer_forward.23} parent=11 // pred_check
        %p118 = pneg %p56
      $region14: #{transformer_forward.23} parent=11 // pred_check_branch
        %120 = sbr.rel (%p118) target = $region16
      $region15: #{transformer_forward.23} parent=11 // pred_region
        _
      $region16: #{transformer_forward.23} parent=11 // pred_fallthru
        _
      // Predicated region
      $region17: #{transformer_forward.23} parent=11 // pred_check
        %p121 = pneg %p77
      $region18: #{transformer_forward.23} parent=11 // pred_check_branch
        %123 = sbr.rel (%p121) target = $region20
      $region19: #{transformer_forward.23} parent=11 // pred_region
        _
      $region20: #{transformer_forward.23} parent=11 // pred_fallthru
        _
    $region12: #{transformer_forward.23} parent=5 // pred_fallthru
      _
    %p124 = scmp.lt.s32.totalorder %s9, 2
    // Predicated region
    $region21: #{transformer_forward.23} parent=5 // pred_check
      %p125 = pneg %p124
    $region22: #{transformer_forward.23} parent=5 // pred_check_branch
      %127 = sbr.rel (%p125) target = $region24
    $region23: #{transformer_forward.23} parent=5 // pred_region
      // Predicated region
      $region25: #{transformer_forward.23} parent=23 // pred_check
        %p128 = pneg %p29
      $region26: #{transformer_forward.23} parent=23 // pred_check_branch
        %130 = sbr.rel (%p128) target = $region28
      $region27: #{transformer_forward.23} parent=23 // pred_region
        %p131 = scmp.lt.s32.totalorder %s9, 1
        %s132 = scalar_select %p131, %s9, 1
        %s133 = smul.addr %s132, 8
        %s134 = scalar_lea.vmem %s0, %s133
      $region28: #{transformer_forward.23} parent=23 // pred_fallthru
        _
    $region24: #{transformer_forward.23} parent=5 // pred_fallthru
      _
    %p135 = scmp.le.s32.totalorder 1, %s9
    %p136 = scmp.lt.s32.totalorder %s9, 3
    %p137 = pnand %p135, %p136
    %p138 = pneg %p137
    // Predicated region
    $region29: #{transformer_forward.23} parent=5 // pred_check
      _
    $region30: #{transformer_forward.23} parent=5 // pred_check_branch
      %140 = sbr.rel (%p137) target = $region32
    $region31: #{transformer_forward.23} parent=5 // pred_region
      %s141 = ssub.s32 %s9, 1
      %p142 = scmp.lt.s32.totalorder %s14, 1
      %s143 = scalar_select %p142, %s14, 1
      %s144 = smul.addr %s143, 8
      %s145 = scalar_lea.vmem %s0, %s144
      %p146 = pneg %p35
      %p147 = pneg %p32
      %p148 = pneg %p56
      %p149 = pneg %p53
      %p150 = pneg %p77
      %p151 = pneg %p74
      %p152 = pneg %p103
      %p153 = pneg %p100
      %p154 = scmp.lt.s32.totalorder %s14, 1
      %s155 = scalar_select %p154, %s14, 1
      %s156 = smul.addr %s155, 8
      %s157 = scalar_lea.vmem %s3, %s156
      %p158 = scmp.lt.s32.totalorder %s14, 1
      %s159 = scalar_select %p158, %s14, 1
      %s160 = smul.addr %s159, 8
      %s161 = scalar_lea.vmem %s0, %s160
      %p162 = scmp.lt.s32.totalorder %s14, 1
      %s163 = scalar_select %p162, %s14, 1
      %s164 = smul.addr %s163, 8
      %s165 = scalar_lea.vmem %s3, %s164
      %v166 = vld [vmem:[%s161] sm:$0xff]
      %v167 = vld [vmem:[%s1] sm:$0x1]
      %v168 = vld [vmem:[%s2] sm:$0x1]
      %vm169 = vcmask 261120
      %v170 = vsel %vm169, %v166, 0.0
      %171 = vadd.xlane.f32.xlu0 %v170
      %v172 = vpop.xlane.xlu0 %171
      %v173 = vrcp.pop 32.0
      %v174 = vmul.f32 %v172, %v173
      %v175 = vsub.f32 %v166, %v174
      %v176 = vmul.f32 %v175, %v175
      %v177 = vsel %vm169, %v176, 0.0
      %178 = vadd.xlane.f32.xlu0 %v177
      %v179 = vpop.xlane.xlu0 %178
      %v180 = vmul.f32 %v179, %v173
      %v181 = vadd.f32 %v180, 1e-05
      %v182 = vrsqrt.pop %v181
      %v183 = vmul.f32 %v175, %v182
      %v185 = vlaneseq
      %v186 = vshrl.u32 %v185, 7
      %v187 = vsub.s32 0, %v186
      %v188 = vrot.slane %v167, %v187
      %v190 = vmul.f32 %v183, %v188
      %v192 = vlaneseq
      %v193 = vshrl.u32 %v192, 7
      %v194 = vsub.s32 0, %v193
      %v195 = vrot.slane %v168, %v194
      %v197 = vadd.f32 %v190, %v195
      %198 = vst.msk [vmem:[%s165] sm:$0xff] %vm169, %v197
      %p199 = scmp.lt.s32.totalorder %s14, 1
      %s200 = scalar_select %p199, %s14, 1
      %s201 = smul.addr %s200, 8
      %s202 = scalar_lea.vmem %s3, %s201
      // Predicated region
      $region33: #{transformer_forward.23} parent=31 // pred_check
        %p203 = pneg %p100
      $region34: #{transformer_forward.23} parent=31 // pred_check_branch
        %205 = sbr.rel (%p203) target = $region36
      $region35: #{transformer_forward.23} parent=31 // pred_region
        _
      $region36: #{transformer_forward.23} parent=31 // pred_fallthru
        _
    $region32: #{transformer_forward.23} parent=5 // pred_fallthru
      _
    %p206 = scmp.le.s32.totalorder 2, %s9
    // Predicated region
    $region37: #{transformer_forward.23} parent=5 // pred_check
      %p207 = pneg %p206
    $region38: #{transformer_forward.23} parent=5 // pred_check_branch
      %209 = sbr.rel (%p207) target = $region40
    $region39: #{transformer_forward.23} parent=5 // pred_region
      %s210 = ssub.s32 %s9, 2
      // Predicated region
      $region41: #{transformer_forward.23} parent=39 // pred_check
        %p211 = pneg %p106
      $region42: #{transformer_forward.23} parent=39 // pred_check_branch
        %213 = sbr.rel (%p211) target = $region44
      $region43: #{transformer_forward.23} parent=39 // pred_region
        %p214 = scmp.lt.s32.totalorder %s15, 1
        %s215 = scalar_select %p214, %s15, 1
        %s216 = smul.addr %s215, 8
        %s217 = scalar_lea.vmem %s3, %s216
      $region44: #{transformer_forward.23} parent=39 // pred_fallthru
        _
    $region40: #{transformer_forward.23} parent=5 // pred_fallthru
      _
  $region6: #{transformer_forward.23} parent=0 // loop_footer
    %s13 = sadd.s32 1, %s9
  $region7: #{transformer_forward.23} parent=0 // loop_footer_branch
    %8 = sbr.rel target = $region3
  $region8: #{transformer_forward.23} parent=0 // loop_exit
    _

// kernel: transformer_forward.18
$region0: #{transformer_forward.18}
  #allocation0 [shape = 'u32[]', space=smem, size = 0x4, offset = 0x4, fixed_abs, tag = 'smem constant byte address 0x4 - core index']
  #allocation1 [shape = 'u32[144,128]{1,0:T(1,128)}', space=vmem, size = 0x12000, scoped, tag = 'internal scratch']
  %s0 = inlined_call_operand.vmem [shape: f32[2,8,32], index: 0, kind: input, shape index: {}]
  %s1 = inlined_call_operand.vmem [shape: f32[32,64], index: 1, kind: input, shape index: {}]
  %s2 = inlined_call_operand.vmem [shape: f32[1,64], index: 2, kind: input, shape index: {}]
  %s3 = inlined_call_operand.vmem [shape: f32[64,32], index: 3, kind: input, shape index: {}]
  %s4 = inlined_call_operand.vmem [shape: f32[1,32], index: 4, kind: input, shape index: {}]
  %s5 = inlined_call_operand.vmem [shape: f32[1,32], index: 5, kind: input, shape index: {}]
  %s6 = inlined_call_operand.vmem [shape: f32[1,32], index: 6, kind: input, shape index: {}]
  %s7 = inlined_call_operand.vmem [shape: f32[2,8,32], index: 7, kind: output, shape index: {}]
  %s8 = sld [smem:[#allocation0]]
  $region61: #{transformer_forward.18} parent=0
    _
  %s10 = ssub.s32 1, %s8
  %s11 = scalar_select 0, %s10, %s8
  loop: start=0, step=1, limit=4
  $region2: #{transformer_forward.18} parent=0 // loop_pre_header
    _
  $region3: #{transformer_forward.18} parent=0 // loop_header
    %s13 = sphi 0, %s17
    %p14 = scmp.ge.s32.totalorder %s13, 4
    %s23 = sphi 0, %s25
    %s26 = sphi 0, %s23
    %s27 = sphi 0, %s26
    %s43 = sphi 0, %s27
    %s47 = sphi 0, %s47
    %s49 = sphi 0, %s47
    %s50 = sphi 0, %s49
    %s64 = sphi 0, %s50
    %s68 = sphi 0, %s68
    %s70 = sphi 0, %s68
    %s71 = sphi 0, %s70
    %s85 = sphi 0, %s71
    %s89 = sphi 0, %s89
    %s91 = sphi 0, %s89
    %s92 = sphi 0, %s91
    %s106 = sphi 0, %s92
    %s110 = sphi 0, %s110
    %s112 = sphi 0, %s110
    %s113 = sphi 0, %s112
    %s127 = sphi 0, %s113
    %s131 = sphi 0, %s131
    %s133 = sphi 0, %s131
    %s134 = sphi 0, %s133
    %s148 = sphi 0, %s134
    %s152 = sphi 0, %s152
    %s154 = sphi 0, %s152
    %s155 = sphi 0, %s154
    %s169 = sphi 0, %s155
    %s175 = sphi 0, %s177
    %s178 = sphi 0, %s175
    %s179 = sphi 0, %s178
    %s195 = sphi 0, %s179
  $region4: #{transformer_forward.18} parent=0 // loop_header_branch
    %16 = sbr.rel (%p14) target = $region8
  $region5: #{transformer_forward.18} parent=0 // loop_body
    %s18 = ssub.s32 %s13, 1
    %s19 = ssub.s32 %s13, 2
    %s20 = sadd.s32 %s13, 1
    %s21 = ssub.s32 %s13, %s20
    %p22 = scmp.eq.s32.totalorder %s21, 0
    %s24 = sadd.s32 %s23, 1
    %s25 = scalar_select %p22, %s23, %s24
    %p28 = pneg %p22
    %p29 = scmp.eq.s32.totalorder %s13, 1
    %p30 = por %p28, %p29
    %p31 = scmp.ne.s32.totalorder %s23, %s26
    %p32 = scmp.eq.s32.totalorder %s13, 0
    %p33 = por %p31, %p32
    %p34 = scmp.ne.s32.totalorder %s23, %s26
    %p35 = scmp.eq.s32.totalorder %s18, 1
    %p36 = por %p34, %p35
    %p37 = scmp.ne.s32.totalorder %s26, %s27
    %p38 = scmp.eq.s32.totalorder %s18, 0
    %p39 = por %p37, %p38
    %p40 = scmp.ne.s32.totalorder %s26, %s27
    %p41 = scmp.eq.s32.totalorder %s19, 1
    %p42 = por %p40, %p41
    %p44 = scmp.ne.s32.totalorder %s27, %s43
    %p45 = scmp.eq.s32.totalorder %s19, 0
    %p46 = por %p44, %p45
    %s48 = sadd.s32 %s47, 1
    %p51 = scmp.eq.s32.totalorder %s13, 1
    %p52 = scmp.ne.s32.totalorder %s47, %s49
    %p53 = scmp.eq.s32.totalorder %s13, 0
    %p54 = por %p52, %p53
    %p55 = scmp.ne.s32.totalorder %s47, %s49
    %p56 = scmp.eq.s32.totalorder %s18, 1
    %p57 = por %p55, %p56
    %p58 = scmp.ne.s32.totalorder %s49, %s50
    %p59 = scmp.eq.s32.totalorder %s18, 0
    %p60 = por %p58, %p59
    %p61 = scmp.ne.s32.totalorder %s49, %s50
    %p62 = scmp.eq.s32.totalorder %s19, 1
    %p63 = por %p61, %p62
    %p65 = scmp.ne.s32.totalorder %s50, %s64
    %p66 = scmp.eq.s32.totalorder %s19, 0
    %p67 = por %p65, %p66
    %s69 = sadd.s32 %s68, 1
    %p72 = scmp.eq.s32.totalorder %s13, 1
    %p73 = scmp.ne.s32.totalorder %s68, %s70
    %p74 = scmp.eq.s32.totalorder %s13, 0
    %p75 = por %p73, %p74
    %p76 = scmp.ne.s32.totalorder %s68, %s70
    %p77 = scmp.eq.s32.totalorder %s18, 1
    %p78 = por %p76, %p77
    %p79 = scmp.ne.s32.totalorder %s70, %s71
    %p80 = scmp.eq.s32.totalorder %s18, 0
    %p81 = por %p79, %p80
    %p82 = scmp.ne.s32.totalorder %s70, %s71
    %p83 = scmp.eq.s32.totalorder %s19, 1
    %p84 = por %p82, %p83
    %p86 = scmp.ne.s32.totalorder %s71, %s85
    %p87 = scmp.eq.s32.totalorder %s19, 0
    %p88 = por %p86, %p87
    %s90 = sadd.s32 %s89, 1
    %p93 = scmp.eq.s32.totalorder %s13, 1
    %p94 = scmp.ne.s32.totalorder %s89, %s91
    %p95 = scmp.eq.s32.totalorder %s13, 0
    %p96 = por %p94, %p95
    %p97 = scmp.ne.s32.totalorder %s89, %s91
    %p98 = scmp.eq.s32.totalorder %s18, 1
    %p99 = por %p97, %p98
    %p100 = scmp.ne.s32.totalorder %s91, %s92
    %p101 = scmp.eq.s32.totalorder %s18, 0
    %p102 = por %p100, %p101
    %p103 = scmp.ne.s32.totalorder %s91, %s92
    %p104 = scmp.eq.s32.totalorder %s19, 1
    %p105 = por %p103, %p104
    %p107 = scmp.ne.s32.totalorder %s92, %s106
    %p108 = scmp.eq.s32.totalorder %s19, 0
    %p109 = por %p107, %p108
    %s111 = sadd.s32 %s110, 1
    %p114 = scmp.eq.s32.totalorder %s13, 1
    %p115 = scmp.ne.s32.totalorder %s110, %s112
    %p116 = scmp.eq.s32.totalorder %s13, 0
    %p117 = por %p115, %p116
    %p118 = scmp.ne.s32.totalorder %s110, %s112
    %p119 = scmp.eq.s32.totalorder %s18, 1
    %p120 = por %p118, %p119
    %p121 = scmp.ne.s32.totalorder %s112, %s113
    %p122 = scmp.eq.s32.totalorder %s18, 0
    %p123 = por %p121, %p122
    %p124 = scmp.ne.s32.totalorder %s112, %s113
    %p125 = scmp.eq.s32.totalorder %s19, 1
    %p126 = por %p124, %p125
    %p128 = scmp.ne.s32.totalorder %s113, %s127
    %p129 = scmp.eq.s32.totalorder %s19, 0
    %p130 = por %p128, %p129
    %s132 = sadd.s32 %s131, 1
    %p135 = scmp.eq.s32.totalorder %s13, 1
    %p136 = scmp.ne.s32.totalorder %s131, %s133
    %p137 = scmp.eq.s32.totalorder %s13, 0
    %p138 = por %p136, %p137
    %p139 = scmp.ne.s32.totalorder %s131, %s133
    %p140 = scmp.eq.s32.totalorder %s18, 1
    %p141 = por %p139, %p140
    %p142 = scmp.ne.s32.totalorder %s133, %s134
    %p143 = scmp.eq.s32.totalorder %s18, 0
    %p144 = por %p142, %p143
    %p145 = scmp.ne.s32.totalorder %s133, %s134
    %p146 = scmp.eq.s32.totalorder %s19, 1
    %p147 = por %p145, %p146
    %p149 = scmp.ne.s32.totalorder %s134, %s148
    %p150 = scmp.eq.s32.totalorder %s19, 0
    %p151 = por %p149, %p150
    %s153 = sadd.s32 %s152, 1
    %p156 = scmp.eq.s32.totalorder %s13, 1
    %p157 = scmp.ne.s32.totalorder %s152, %s154
    %p158 = scmp.eq.s32.totalorder %s13, 0
    %p159 = por %p157, %p158
    %p160 = scmp.ne.s32.totalorder %s152, %s154
    %p161 = scmp.eq.s32.totalorder %s18, 1
    %p162 = por %p160, %p161
    %p163 = scmp.ne.s32.totalorder %s154, %s155
    %p164 = scmp.eq.s32.totalorder %s18, 0
    %p165 = por %p163, %p164
    %p166 = scmp.ne.s32.totalorder %s154, %s155
    %p167 = scmp.eq.s32.totalorder %s19, 1
    %p168 = por %p166, %p167
    %p170 = scmp.ne.s32.totalorder %s155, %s169
    %p171 = scmp.eq.s32.totalorder %s19, 0
    %p172 = por %p170, %p171
    %s173 = ssub.s32 %s13, %s20
    %p174 = scmp.eq.s32.totalorder %s173, 0
    %s176 = sadd.s32 %s175, 1
    %s177 = scalar_select %p174, %s175, %s176
    %p180 = pneg %p174
    %p181 = scmp.eq.s32.totalorder %s13, 1
    %p182 = por %p180, %p181
    %p183 = scmp.ne.s32.totalorder %s175, %s178
    %p184 = scmp.eq.s32.totalorder %s13, 0
    %p185 = por %p183, %p184
    %p186 = scmp.ne.s32.totalorder %s175, %s178
    %p187 = scmp.eq.s32.totalorder %s18, 1
    %p188 = por %p186, %p187
    %p189 = scmp.ne.s32.totalorder %s178, %s179
    %p190 = scmp.eq.s32.totalorder %s18, 0
    %p191 = por %p189, %p190
    %p192 = scmp.ne.s32.totalorder %s178, %s179
    %p193 = scmp.eq.s32.totalorder %s19, 1
    %p194 = por %p192, %p193
    %p196 = scmp.ne.s32.totalorder %s179, %s195
    %p197 = scmp.eq.s32.totalorder %s19, 0
    %p198 = por %p196, %p197
    %p199 = scmp.le.s32.totalorder 1, %s13
    %p200 = scmp.lt.s32.totalorder %s13, 3
    %p201 = pnand %p199, %p200
    %p202 = pneg %p201
    // Predicated region
    $region9: #{transformer_forward.18} parent=5 // pred_check
      _
    $region10: #{transformer_forward.18} parent=5 // pred_check_branch
      %204 = sbr.rel (%p201) target = $region12
    $region11: #{transformer_forward.18} parent=5 // pred_region
      %s205 = ssub.s32 %s13, 1
      // Predicated region
      $region13: #{transformer_forward.18} parent=11 // pred_check
        %p206 = pneg %p60
      $region14: #{transformer_forward.18} parent=11 // pred_check_branch
        %208 = sbr.rel (%p206) target = $region16
      $region15: #{transformer_forward.18} parent=11 // pred_region
        _
      $region16: #{transformer_forward.18} parent=11 // pred_fallthru
        _
      // Predicated region
      $region17: #{transformer_forward.18} parent=11 // pred_check
        %p209 = pneg %p81
      $region18: #{transformer_forward.18} parent=11 // pred_check_branch
        %211 = sbr.rel (%p209) target = $region20
      $region19: #{transformer_forward.18} parent=11 // pred_region
        _
      $region20: #{transformer_forward.18} parent=11 // pred_fallthru
        _
      // Predicated region
      $region21: #{transformer_forward.18} parent=11 // pred_check
        %p212 = pneg %p102
      $region22: #{transformer_forward.18} parent=11 // pred_check_branch
        %214 = sbr.rel (%p212) target = $region24
      $region23: #{transformer_forward.18} parent=11 // pred_region
        _
      $region24: #{transformer_forward.18} parent=11 // pred_fallthru
        _
      // Predicated region
      $region25: #{transformer_forward.18} parent=11 // pred_check
        %p215 = pneg %p123
      $region26: #{transformer_forward.18} parent=11 // pred_check_branch
        %217 = sbr.rel (%p215) target = $region28
      $region27: #{transformer_forward.18} parent=11 // pred_region
        _
      $region28: #{transformer_forward.18} parent=11 // pred_fallthru
        _
      // Predicated region
      $region29: #{transformer_forward.18} parent=11 // pred_check
        %p218 = pneg %p144
      $region30: #{transformer_forward.18} parent=11 // pred_check_branch
        %220 = sbr.rel (%p218) target = $region32
      $region31: #{transformer_forward.18} parent=11 // pred_region
        _
      $region32: #{transformer_forward.18} parent=11 // pred_fallthru
        _
      // Predicated region
      $region33: #{transformer_forward.18} parent=11 // pred_check
        %p221 = pneg %p165
      $region34: #{transformer_forward.18} parent=11 // pred_check_branch
        %223 = sbr.rel (%p221) target = $region36
      $region35: #{transformer_forward.18} parent=11 // pred_region
        _
      $region36: #{transformer_forward.18} parent=11 // pred_fallthru
        _
    $region12: #{transformer_forward.18} parent=5 // pred_fallthru
      _
    %p224 = scmp.lt.s32.totalorder %s13, 2
    // Predicated region
    $region37: #{transformer_forward.18} parent=5 // pred_check
      %p225 = pneg %p224
    $region38: #{transformer_forward.18} parent=5 // pred_check_branch
      %227 = sbr.rel (%p225) target = $region40
    $region39: #{transformer_forward.18} parent=5 // pred_region
      // Predicated region
      $region41: #{transformer_forward.18} parent=39 // pred_check
        %p228 = pneg %p33
      $region42: #{transformer_forward.18} parent=39 // pred_check_branch
        %230 = sbr.rel (%p228) target = $region44
      $region43: #{transformer_forward.18} parent=39 // pred_region
        %p231 = scmp.lt.s32.totalorder %s13, 1
        %s232 = scalar_select %p231, %s13, 1
        %s233 = smul.addr %s232, 8
        %s234 = scalar_lea.vmem %s0, %s233
      $region44: #{transformer_forward.18} parent=39 // pred_fallthru
        _
    $region40: #{transformer_forward.18} parent=5 // pred_fallthru
      _
    %p235 = scmp.le.s32.totalorder 1, %s13
    %p236 = scmp.lt.s32.totalorder %s13, 3
    %p237 = pnand %p235, %p236
    %p238 = pneg %p237
    // Predicated region
    $region45: #{transformer_forward.18} parent=5 // pred_check
      _
    $region46: #{transformer_forward.18} parent=5 // pred_check_branch
      %240 = sbr.rel (%p237) target = $region48
    $region47: #{transformer_forward.18} parent=5 // pred_region
      %s241 = ssub.s32 %s13, 1
      %p242 = scmp.lt.s32.totalorder %s18, 1
      %s243 = scalar_select %p242, %s18, 1
      %s244 = smul.addr %s243, 8
      %s245 = scalar_lea.vmem %s0, %s244
      %p246 = pneg %p39
      %p247 = pneg %p36
      %p248 = pneg %p60
      %p249 = pneg %p57
      %p250 = pneg %p81
      %p251 = pneg %p78
      %p252 = pneg %p102
      %p253 = pneg %p99
      %p254 = pneg %p123
      %p255 = pneg %p120
      %p256 = pneg %p144
      %p257 = pneg %p141
      %p258 = pneg %p165
      %p259 = pneg %p162
      %p260 = pneg %p191
      %p261 = pneg %p188
      %p262 = scmp.lt.s32.totalorder %s18, 1
      %s263 = scalar_select %p262, %s18, 1
      %s264 = smul.addr %s263, 8
      %s265 = scalar_lea.vmem %s7, %s264
      %p266 = scmp.lt.s32.totalorder %s18, 1
      %s267 = scalar_select %p266, %s18, 1
      %s268 = smul.addr %s267, 8
      %s269 = scalar_lea.vmem %s0, %s268
      %p270 = scmp.lt.s32.totalorder %s18, 1
      %s271 = scalar_select %p270, %s18, 1
      %s272 = smul.addr %s271, 8
      %s273 = scalar_lea.vmem %s7, %s272
      %v274 = vld [vmem:[%s269] sm:$0xff]
      %v275 = vld [vmem:[%s1] sm:$0xff]
      %v276 = vld [vmem:[%s1 + $0x8] sm:$0xff]
      %v277 = vld [vmem:[%s1 + $0x10] sm:$0xff]
      %v278 = vld [vmem:[%s1 + $0x18] sm:$0xff]
      %v279 = vld [vmem:[%s2] sm:$0x1]
      %v281 = vlaneseq
      %v282 = vshrl.u32 %v281, 7
      %v283 = vsub.s32 0, %v282
      %v284 = vrot.slane %v279, %v283
      %vm286 = vcmask 261120
      %v288 = vsel %vm286, %v274, 0
      %290 = vmatprep.subr.mxu0 0.0
      %291 = vmatpush1.msra.mxu0 %v275
      %292 = vmatprep.subr.mxu0 0.0
      %293 = vmatpush1.msra.mxu0 %v276
      %294 = vmatprep.subr.mxu0 0.0
      %295 = vmatpush1.msra.mxu0 %v277
      %296 = vmatprep.subr.mxu0 0.0
      %297 = vmatpush1.msra.mxu0 %v278
      %298 = vmatprep.subr.mxu0 0.0
      %299 = vmatpush1.msra.mxu0 0.0
      %300 = vmatprep.subr.mxu0 0.0
      %301 = vmatpush1.msra.mxu0 0.0
      %302 = vmatprep.subr.mxu0 0.0
      %303 = vmatpush1.msra.mxu0 0.0
      %304 = vmatprep.subr.mxu0 0.0
      %305 = vmatpush1.msra.mxu0 0.0
      %306 = vmatprep.subr.mxu0 0.0
      %307 = vmatpush1.msra.mxu0 0.0
      %308 = vmatprep.subr.mxu0 0.0
      %309 = vmatpush1.msra.mxu0 0.0
      %310 = vmatprep.subr.mxu0 0.0
      %311 = vmatpush1.msra.mxu0 0.0
      %312 = vmatprep.subr.mxu0 0.0
      %313 = vmatpush1.msra.mxu0 0.0
      %314 = vmatprep.subr.mxu0 0.0
      %315 = vmatpush1.msra.mxu0 0.0
      %316 = vmatprep.subr.mxu0 0.0
      %317 = vmatpush1.msra.mxu0 0.0
      %318 = vmatprep.subr.mxu0 0.0
      %319 = vmatpush1.msra.mxu0 0.0
      %320 = vmatprep.subr.mxu0 0.0
      %321 = vmatpush1.msra.mxu0 0.0
      %322 = vmatprep.subr.mxu0 0.0
      %323 = vmatpush1.msra.mxu0 0.0
      %324 = vmatprep.subr.mxu0 0.0
      %325 = vmatpush1.msra.mxu0 0.0
      %326 = vmatprep.subr.mxu0 0.0
      %327 = vmatpush1.msra.mxu0 0.0
      %328 = vmatprep.subr.mxu0 0.0
      %329 = vmatpush1.msra.mxu0 0.0
      %330 = vmatprep.subr.mxu0 0.0
      %331 = vmatpush1.msra.mxu0 0.0
      %332 = vmatprep.subr.mxu0 0.0
      %333 = vmatpush1.msra.mxu0 0.0
      %334 = vmatprep.subr.mxu0 0.0
      %335 = vmatpush1.msra.mxu0 0.0
      %336 = vmatprep.subr.mxu0 0.0
      %337 = vmatpush1.msra.mxu0 0.0
      %338 = vmatprep.subr.mxu0 0.0
      %339 = vmatpush1.msra.mxu0 0.0
      %340 = vmatprep.subr.mxu0 0.0
      %341 = vmatpush1.msra.mxu0 0.0
      %342 = vmatprep.subr.mxu0 0.0
      %343 = vmatpush1.msra.mxu0 0.0
      %344 = vmatprep.subr.mxu0 0.0
      %345 = vmatpush1.msra.mxu0 0.0
      %346 = vmatprep.subr.mxu0 0.0
      %347 = vmatpush1.msra.mxu0 0.0
      %348 = vmatprep.subr.mxu0 0.0
      %349 = vmatpush1.msra.mxu0 0.0
      %350 = vmatprep.subr.mxu0 0.0
      %351 = vmatpush1.msra.mxu0 0.0
      %352 = vmatprep.subr.mxu0 0.0
      %353 = vmatpush1.msra.mxu0 0.0
      %354 = vmatprep.mubr.f32.mxu0 0.0
      %355 = vmatmul.mubr.f32.gmra.mrb[0].mxu0 %v288
      %v356 = vpop.f32.mrb[0].mxu0
      %v357 = vadd.f32 %v284, %v356
      %v358 = vpop.f32.mrb[0].mxu0
      %359 = vdwg.mxu0
      %v360 = vmax.f32 %v357, 0.0
      %v361 = vld [vmem:[%s3] sm:$0xff]
      %v362 = vld [vmem:[%s3 + $0x8] sm:$0xff]
      %v363 = vld [vmem:[%s3 + $0x10] sm:$0xff]
      %v364 = vld [vmem:[%s3 + $0x18] sm:$0xff]
      %v365 = vld [vmem:[%s3 + $0x20] sm:$0xff]
      %v366 = vld [vmem:[%s3 + $0x28] sm:$0xff]
      %v367 = vld [vmem:[%s3 + $0x30] sm:$0xff]
      %v368 = vld [vmem:[%s3 + $0x38] sm:$0xff]
      %v369 = vld [vmem:[%s4] sm:$0x1]
      %v371 = vlaneseq
      %v372 = vshrl.u32 %v371, 7
      %v373 = vsub.s32 0, %v372
      %v374 = vrot.slane %v369, %v373
      %vm376 = vcmask 523264
      %v378 = vsel %vm376, %v360, 0
      %380 = vmatprep.subr.mxu0 0.0
      %381 = vmatpush1.msra.mxu0 %v361
      %382 = vmatprep.subr.mxu0 0.0
      %383 = vmatpush1.msra.mxu0 %v362
      %384 = vmatprep.subr.mxu0 0.0
      %385 = vmatpush1.msra.mxu0 %v363
      %386 = vmatprep.subr.mxu0 0.0
      %387 = vmatpush1.msra.mxu0 %v364
      %388 = vmatprep.subr.mxu0 0.0
      %389 = vmatpush1.msra.mxu0 %v365
      %390 = vmatprep.subr.mxu0 0.0
      %391 = vmatpush1.msra.mxu0 %v366
      %392 = vmatprep.subr.mxu0 0.0
      %393 = vmatpush1.msra.mxu0 %v367
      %394 = vmatprep.subr.mxu0 0.0
      %395 = vmatpush1.msra.mxu0 %v368
      %396 = vmatprep.subr.mxu0 0.0
      %397 = vmatpush1.msra.mxu0 0.0
      %398 = vmatprep.subr.mxu0 0.0
      %399 = vmatpush1.msra.mxu0 0.0
      %400 = vmatprep.subr.mxu0 0.0
      %401 = vmatpush1.msra.mxu0 0.0
      %402 = vmatprep.subr.mxu0 0.0
      %403 = vmatpush1.msra.mxu0 0.0
      %404 = vmatprep.subr.mxu0 0.0
      %405 = vmatpush1.msra.mxu0 0.0
      %406 = vmatprep.subr.mxu0 0.0
      %407 = vmatpush1.msra.mxu0 0.0
      %408 = vmatprep.subr.mxu0 0.0
      %409 = vmatpush1.msra.mxu0 0.0
      %410 = vmatprep.subr.mxu0 0.0
      %411 = vmatpush1.msra.mxu0 0.0
      %412 = vmatprep.subr.mxu0 0.0
      %413 = vmatpush1.msra.mxu0 0.0
      %414 = vmatprep.subr.mxu0 0.0
      %415 = vmatpush1.msra.mxu0 0.0
      %416 = vmatprep.subr.mxu0 0.0
      %417 = vmatpush1.msra.mxu0 0.0
      %418 = vmatprep.subr.mxu0 0.0
      %419 = vmatpush1.msra.mxu0 0.0
      %420 = vmatprep.subr.mxu0 0.0
      %421 = vmatpush1.msra.mxu0 0.0
      %422 = vmatprep.subr.mxu0 0.0
      %423 = vmatpush1.msra.mxu0 0.0
      %424 = vmatprep.subr.mxu0 0.0
      %425 = vmatpush1.msra.mxu0 0.0
      %426 = vmatprep.subr.mxu0 0.0
      %427 = vmatpush1.msra.mxu0 0.0
      %428 = vmatprep.subr.mxu0 0.0
      %429 = vmatpush1.msra.mxu0 0.0
      %430 = vmatprep.subr.mxu0 0.0
      %431 = vmatpush1.msra.mxu0 0.0
      %432 = vmatprep.subr.mxu0 0.0
      %433 = vmatpush1.msra.mxu0 0.0
      %434 = vmatprep.subr.mxu0 0.0
      %435 = vmatpush1.msra.mxu0 0.0
      %436 = vmatprep.subr.mxu0 0.0
      %437 = vmatpush1.msra.mxu0 0.0
      %438 = vmatprep.subr.mxu0 0.0
      %439 = vmatpush1.msra.mxu0 0.0
      %440 = vmatprep.subr.mxu0 0.0
      %441 = vmatpush1.msra.mxu0 0.0
      %442 = vmatprep.subr.mxu0 0.0
      %443 = vmatpush1.msra.mxu0 0.0
      %444 = vmatprep.mubr.f32.mxu0 0.0
      %445 = vmatmul.mubr.f32.gmra.mrb[0].mxu0 %v378
      %v446 = vpop.f32.mrb[0].mxu0
      %v447 = vadd.f32 %v374, %v446
      %v448 = vpop.f32.mrb[0].mxu0
      %449 = vdwg.mxu0
      %v450 = vadd.f32 %v274, %v447
      %v451 = vld [vmem:[%s5] sm:$0x1]
      %v452 = vld [vmem:[%s6] sm:$0x1]
      %v453 = vsel %vm286, %v450, 0.0
      %454 = vadd.xlane.f32.xlu0 %v453
      %v455 = vpop.xlane.xlu0 %454
      %v456 = vrcp.pop 32.0
      %v457 = vmul.f32 %v455, %v456
      %v458 = vsub.f32 %v450, %v457
      %v459 = vmul.f32 %v458, %v458
      %v460 = vsel %vm286, %v459, 0.0
      %461 = vadd.xlane.f32.xlu0 %v460
      %v462 = vpop.xlane.xlu0 %461
      %v463 = vmul.f32 %v462, %v456
      %v464 = vadd.f32 %v463, 1e-05
      %v465 = vrsqrt.pop %v464
      %v466 = vmul.f32 %v458, %v465
      %v468 = vlaneseq
      %v469 = vshrl.u32 %v468, 7
      %v470 = vsub.s32 0, %v469
      %v471 = vrot.slane %v451, %v470
      %v473 = vmul.f32 %v466, %v471
      %v475 = vlaneseq
      %v476 = vshrl.u32 %v475, 7
      %v477 = vsub.s32 0, %v476
      %v478 = vrot.slane %v452, %v477
      %v480 = vadd.f32 %v473, %v478
      %481 = vst.msk [vmem:[%s273] sm:$0xff] %vm286, %v480
      %p482 = scmp.lt.s32.totalorder %s18, 1
      %s483 = scalar_select %p482, %s18, 1
      %s484 = smul.addr %s483, 8
      %s485 = scalar_lea.vmem %s7, %s484
      // Predicated region
      $region49: #{transformer_forward.18} parent=47 // pred_check
        %p486 = pneg %p188
      $region50: #{transformer_forward.18} parent=47 // pred_check_branch
        %488 = sbr.rel (%p486) target = $region52
      $region51: #{transformer_forward.18} parent=47 // pred_region
        _
      $region52: #{transformer_forward.18} parent=47 // pred_fallthru
        _
    $region48: #{transformer_forward.18} parent=5 // pred_fallthru
      _
    %p489 = scmp.le.s32.totalorder 2, %s13
    // Predicated region
    $region53: #{transformer_forward.18} parent=5 // pred_check
      %p490 = pneg %p489
    $region54: #{transformer_forward.18} parent=5 // pred_check_branch
      %492 = sbr.rel (%p490) target = $region56
    $region55: #{transformer_forward.18} parent=5 // pred_region
      %s493 = ssub.s32 %s13, 2
      // Predicated region
      $region57: #{transformer_forward.18} parent=55 // pred_check
        %p494 = pneg %p194
      $region58: #{transformer_forward.18} parent=55 // pred_check_branch
        %496 = sbr.rel (%p494) target = $region60
      $region59: #{transformer_forward.18} parent=55 // pred_region
        %p497 = scmp.lt.s32.totalorder %s19, 1
        %s498 = scalar_select %p497, %s19, 1
        %s499 = smul.addr %s498, 8
        %s500 = scalar_lea.vmem %s7, %s499
      $region60: #{transformer_forward.18} parent=55 // pred_fallthru
        _
    $region56: #{transformer_forward.18} parent=5 // pred_fallthru
      _
  $region6: #{transformer_forward.18} parent=0 // loop_footer
    %s17 = sadd.s32 1, %s13
  $region7: #{transformer_forward.18} parent=0 // loop_footer_branch
    %12 = sbr.rel target = $region3
  $region8: #{transformer_forward.18} parent=0 // loop_exit
    _

// kernel: transformer_forward.17
$region0: #{transformer_forward.17}
  #allocation0 [shape = 'u32[]', space=smem, size = 0x4, offset = 0x4, fixed_abs, tag = 'smem constant byte address 0x4 - core index']
  #allocation1 [shape = 'u32[144,128]{1,0:T(1,128)}', space=vmem, size = 0x12000, scoped, tag = 'internal scratch']
  %s0 = inlined_call_operand.vmem [shape: f32[2,8,32], index: 0, kind: input, shape index: {}, may-alias: {0,1}]
  %s1 = inlined_call_operand.vmem [shape: f32[2,8,32], index: 1, kind: input, shape index: {}, may-alias: {0,1}]
  %s2 = inlined_call_operand.vmem [shape: f32[32,32], index: 2, kind: input, shape index: {}]
  %s3 = inlined_call_operand.vmem [shape: f32[1,32], index: 3, kind: input, shape index: {}]
  %s4 = inlined_call_operand.vmem [shape: f32[32,64], index: 4, kind: input, shape index: {}]
  %s5 = inlined_call_operand.vmem [shape: f32[1,64], index: 5, kind: input, shape index: {}]
  %s6 = inlined_call_operand.vmem [shape: f32[32,32], index: 6, kind: input, shape index: {}]
  %s7 = inlined_call_operand.vmem [shape: f32[1,32], index: 7, kind: input, shape index: {}]
  %s8 = inlined_call_operand.vmem [shape: f32[1,32], index: 8, kind: input, shape index: {}]
  %s9 = inlined_call_operand.vmem [shape: f32[1,32], index: 9, kind: input, shape index: {}]
  %s10 = inlined_call_operand.vmem [shape: f32[2,8,32], index: 10, kind: output, shape index: {}]
  %s11 = sld [smem:[#allocation0]]
  $region73: #{transformer_forward.17} parent=0
    _
  %s13 = ssub.s32 1, %s11
  %s14 = scalar_select 0, %s13, %s11
  loop: start=0, step=1, limit=4
  $region2: #{transformer_forward.17} parent=0 // loop_pre_header
    _
  $region3: #{transformer_forward.17} parent=0 // loop_header
    %s16 = sphi 0, %s20
    %p17 = scmp.ge.s32.totalorder %s16, 4
    %s26 = sphi 0, %s28
    %s29 = sphi 0, %s26
    %s30 = sphi 0, %s29
    %s46 = sphi 0, %s30
    %s52 = sphi 0, %s54
    %s55 = sphi 0, %s52
    %s56 = sphi 0, %s55
    %s72 = sphi 0, %s56
    %s76 = sphi 0, %s76
    %s78 = sphi 0, %s76
    %s79 = sphi 0, %s78
    %s93 = sphi 0, %s79
    %s97 = sphi 0, %s97
    %s99 = sphi 0, %s97
    %s100 = sphi 0, %s99
    %s114 = sphi 0, %s100
    %s118 = sphi 0, %s118
    %s120 = sphi 0, %s118
    %s121 = sphi 0, %s120
    %s135 = sphi 0, %s121
    %s139 = sphi 0, %s139
    %s141 = sphi 0, %s139
    %s142 = sphi 0, %s141
    %s156 = sphi 0, %s142
    %s160 = sphi 0, %s160
    %s162 = sphi 0, %s160
    %s163 = sphi 0, %s162
    %s177 = sphi 0, %s163
    %s181 = sphi 0, %s181
    %s183 = sphi 0, %s181
    %s184 = sphi 0, %s183
    %s198 = sphi 0, %s184
    %s202 = sphi 0, %s202
    %s204 = sphi 0, %s202
    %s205 = sphi 0, %s204
    %s219 = sphi 0, %s205
    %s223 = sphi 0, %s223
    %s225 = sphi 0, %s223
    %s226 = sphi 0, %s225
    %s240 = sphi 0, %s226
    %s246 = sphi 0, %s248
    %s249 = sphi 0, %s246
    %s250 = sphi 0, %s249
    %s266 = sphi 0, %s250
  $region4: #{transformer_forward.17} parent=0 // loop_header_branch
    %19 = sbr.rel (%p17) target = $region8
  $region5: #{transformer_forward.17} parent=0 // loop_body
    %s21 = ssub.s32 %s16, 1
    %s22 = ssub.s32 %s16, 2
    %s23 = sadd.s32 %s16, 1
    %s24 = ssub.s32 %s16, %s23
    %p25 = scmp.eq.s32.totalorder %s24, 0
    %s27 = sadd.s32 %s26, 1
    %s28 = scalar_select %p25, %s26, %s27
    %p31 = pneg %p25
    %p32 = scmp.eq.s32.totalorder %s16, 1
    %p33 = por %p31, %p32
    %p34 = scmp.ne.s32.totalorder %s26, %s29
    %p35 = scmp.eq.s32.totalorder %s16, 0
    %p36 = por %p34, %p35
    %p37 = scmp.ne.s32.totalorder %s26, %s29
    %p38 = scmp.eq.s32.totalorder %s21, 1
    %p39 = por %p37, %p38
    %p40 = scmp.ne.s32.totalorder %s29, %s30
    %p41 = scmp.eq.s32.totalorder %s21, 0
    %p42 = por %p40, %p41
    %p43 = scmp.ne.s32.totalorder %s29, %s30
    %p44 = scmp.eq.s32.totalorder %s22, 1
    %p45 = por %p43, %p44
    %p47 = scmp.ne.s32.totalorder %s30, %s46
    %p48 = scmp.eq.s32.totalorder %s22, 0
    %p49 = por %p47, %p48
    %s50 = ssub.s32 %s16, %s23
    %p51 = scmp.eq.s32.totalorder %s50, 0
    %s53 = sadd.s32 %s52, 1
    %s54 = scalar_select %p51, %s52, %s53
    %p57 = pneg %p51
    %p58 = scmp.eq.s32.totalorder %s16, 1
    %p59 = por %p57, %p58
    %p60 = scmp.ne.s32.totalorder %s52, %s55
    %p61 = scmp.eq.s32.totalorder %s16, 0
    %p62 = por %p60, %p61
    %p63 = scmp.ne.s32.totalorder %s52, %s55
    %p64 = scmp.eq.s32.totalorder %s21, 1
    %p65 = por %p63, %p64
    %p66 = scmp.ne.s32.totalorder %s55, %s56
    %p67 = scmp.eq.s32.totalorder %s21, 0
    %p68 = por %p66, %p67
    %p69 = scmp.ne.s32.totalorder %s55, %s56
    %p70 = scmp.eq.s32.totalorder %s22, 1
    %p71 = por %p69, %p70
    %p73 = scmp.ne.s32.totalorder %s56, %s72
    %p74 = scmp.eq.s32.totalorder %s22, 0
    %p75 = por %p73, %p74
    %s77 = sadd.s32 %s76, 1
    %p80 = scmp.eq.s32.totalorder %s16, 1
    %p81 = scmp.ne.s32.totalorder %s76, %s78
    %p82 = scmp.eq.s32.totalorder %s16, 0
    %p83 = por %p81, %p82
    %p84 = scmp.ne.s32.totalorder %s76, %s78
    %p85 = scmp.eq.s32.totalorder %s21, 1
    %p86 = por %p84, %p85
    %p87 = scmp.ne.s32.totalorder %s78, %s79
    %p88 = scmp.eq.s32.totalorder %s21, 0
    %p89 = por %p87, %p88
    %p90 = scmp.ne.s32.totalorder %s78, %s79
    %p91 = scmp.eq.s32.totalorder %s22, 1
    %p92 = por %p90, %p91
    %p94 = scmp.ne.s32.totalorder %s79, %s93
    %p95 = scmp.eq.s32.totalorder %s22, 0
    %p96 = por %p94, %p95
    %s98 = sadd.s32 %s97, 1
    %p101 = scmp.eq.s32.totalorder %s16, 1
    %p102 = scmp.ne.s32.totalorder %s97, %s99
    %p103 = scmp.eq.s32.totalorder %s16, 0
    %p104 = por %p102, %p103
    %p105 = scmp.ne.s32.totalorder %s97, %s99
    %p106 = scmp.eq.s32.totalorder %s21, 1
    %p107 = por %p105, %p106
    %p108 = scmp.ne.s32.totalorder %s99, %s100
    %p109 = scmp.eq.s32.totalorder %s21, 0
    %p110 = por %p108, %p109
    %p111 = scmp.ne.s32.totalorder %s99, %s100
    %p112 = scmp.eq.s32.totalorder %s22, 1
    %p113 = por %p111, %p112
    %p115 = scmp.ne.s32.totalorder %s100, %s114
    %p116 = scmp.eq.s32.totalorder %s22, 0
    %p117 = por %p115, %p116
    %s119 = sadd.s32 %s118, 1
    %p122 = scmp.eq.s32.totalorder %s16, 1
    %p123 = scmp.ne.s32.totalorder %s118, %s120
    %p124 = scmp.eq.s32.totalorder %s16, 0
    %p125 = por %p123, %p124
    %p126 = scmp.ne.s32.totalorder %s118, %s120
    %p127 = scmp.eq.s32.totalorder %s21, 1
    %p128 = por %p126, %p127
    %p129 = scmp.ne.s32.totalorder %s120, %s121
    %p130 = scmp.eq.s32.totalorder %s21, 0
    %p131 = por %p129, %p130
    %p132 = scmp.ne.s32.totalorder %s120, %s121
    %p133 = scmp.eq.s32.totalorder %s22, 1
    %p134 = por %p132, %p133
    %p136 = scmp.ne.s32.totalorder %s121, %s135
    %p137 = scmp.eq.s32.totalorder %s22, 0
    %p138 = por %p136, %p137
    %s140 = sadd.s32 %s139, 1
    %p143 = scmp.eq.s32.totalorder %s16, 1
    %p144 = scmp.ne.s32.totalorder %s139, %s141
    %p145 = scmp.eq.s32.totalorder %s16, 0
    %p146 = por %p144, %p145
    %p147 = scmp.ne.s32.totalorder %s139, %s141
    %p148 = scmp.eq.s32.totalorder %s21, 1
    %p149 = por %p147, %p148
    %p150 = scmp.ne.s32.totalorder %s141, %s142
    %p151 = scmp.eq.s32.totalorder %s21, 0
    %p152 = por %p150, %p151
    %p153 = scmp.ne.s32.totalorder %s141, %s142
    %p154 = scmp.eq.s32.totalorder %s22, 1
    %p155 = por %p153, %p154
    %p157 = scmp.ne.s32.totalorder %s142, %s156
    %p158 = scmp.eq.s32.totalorder %s22, 0
    %p159 = por %p157, %p158
    %s161 = sadd.s32 %s160, 1
    %p164 = scmp.eq.s32.totalorder %s16, 1
    %p165 = scmp.ne.s32.totalorder %s160, %s162
    %p166 = scmp.eq.s32.totalorder %s16, 0
    %p167 = por %p165, %p166
    %p168 = scmp.ne.s32.totalorder %s160, %s162
    %p169 = scmp.eq.s32.totalorder %s21, 1
    %p170 = por %p168, %p169
    %p171 = scmp.ne.s32.totalorder %s162, %s163
    %p172 = scmp.eq.s32.totalorder %s21, 0
    %p173 = por %p171, %p172
    %p174 = scmp.ne.s32.totalorder %s162, %s163
    %p175 = scmp.eq.s32.totalorder %s22, 1
    %p176 = por %p174, %p175
    %p178 = scmp.ne.s32.totalorder %s163, %s177
    %p179 = scmp.eq.s32.totalorder %s22, 0
    %p180 = por %p178, %p179
    %s182 = sadd.s32 %s181, 1
    %p185 = scmp.eq.s32.totalorder %s16, 1
    %p186 = scmp.ne.s32.totalorder %s181, %s183
    %p187 = scmp.eq.s32.totalorder %s16, 0
    %p188 = por %p186, %p187
    %p189 = scmp.ne.s32.totalorder %s181, %s183
    %p190 = scmp.eq.s32.totalorder %s21, 1
    %p191 = por %p189, %p190
    %p192 = scmp.ne.s32.totalorder %s183, %s184
    %p193 = scmp.eq.s32.totalorder %s21, 0
    %p194 = por %p192, %p193
    %p195 = scmp.ne.s32.totalorder %s183, %s184
    %p196 = scmp.eq.s32.totalorder %s22, 1
    %p197 = por %p195, %p196
    %p199 = scmp.ne.s32.totalorder %s184, %s198
    %p200 = scmp.eq.s32.totalorder %s22, 0
    %p201 = por %p199, %p200
    %s203 = sadd.s32 %s202, 1
    %p206 = scmp.eq.s32.totalorder %s16, 1
    %p207 = scmp.ne.s32.totalorder %s202, %s204
    %p208 = scmp.eq.s32.totalorder %s16, 0
    %p209 = por %p207, %p208
    %p210 = scmp.ne.s32.totalorder %s202, %s204
    %p211 = scmp.eq.s32.totalorder %s21, 1
    %p212 = por %p210, %p211
    %p213 = scmp.ne.s32.totalorder %s204, %s205
    %p214 = scmp.eq.s32.totalorder %s21, 0
    %p215 = por %p213, %p214
    %p216 = scmp.ne.s32.totalorder %s204, %s205
    %p217 = scmp.eq.s32.totalorder %s22, 1
    %p218 = por %p216, %p217
    %p220 = scmp.ne.s32.totalorder %s205, %s219
    %p221 = scmp.eq.s32.totalorder %s22, 0
    %p222 = por %p220, %p221
    %s224 = sadd.s32 %s223, 1
    %p227 = scmp.eq.s32.totalorder %s16, 1
    %p228 = scmp.ne.s32.totalorder %s223, %s225
    %p229 = scmp.eq.s32.totalorder %s16, 0
    %p230 = por %p228, %p229
    %p231 = scmp.ne.s32.totalorder %s223, %s225
    %p232 = scmp.eq.s32.totalorder %s21, 1
    %p233 = por %p231, %p232
    %p234 = scmp.ne.s32.totalorder %s225, %s226
    %p235 = scmp.eq.s32.totalorder %s21, 0
    %p236 = por %p234, %p235
    %p237 = scmp.ne.s32.totalorder %s225, %s226
    %p238 = scmp.eq.s32.totalorder %s22, 1
    %p239 = por %p237, %p238
    %p241 = scmp.ne.s32.totalorder %s226, %s240
    %p242 = scmp.eq.s32.totalorder %s22, 0
    %p243 = por %p241, %p242
    %s244 = ssub.s32 %s16, %s23
    %p245 = scmp.eq.s32.totalorder %s244, 0
    %s247 = sadd.s32 %s246, 1
    %s248 = scalar_select %p245, %s246, %s247
    %p251 = pneg %p245
    %p252 = scmp.eq.s32.totalorder %s16, 1
    %p253 = por %p251, %p252
    %p254 = scmp.ne.s32.totalorder %s246, %s249
    %p255 = scmp.eq.s32.totalorder %s16, 0
    %p256 = por %p254, %p255
    %p257 = scmp.ne.s32.totalorder %s246, %s249
    %p258 = scmp.eq.s32.totalorder %s21, 1
    %p259 = por %p257, %p258
    %p260 = scmp.ne.s32.totalorder %s249, %s250
    %p261 = scmp.eq.s32.totalorder %s21, 0
    %p262 = por %p260, %p261
    %p263 = scmp.ne.s32.totalorder %s249, %s250
    %p264 = scmp.eq.s32.totalorder %s22, 1
    %p265 = por %p263, %p264
    %p267 = scmp.ne.s32.totalorder %s250, %s266
    %p268 = scmp.eq.s32.totalorder %s22, 0
    %p269 = por %p267, %p268
    %p270 = scmp.le.s32.totalorder 1, %s16
    %p271 = scmp.lt.s32.totalorder %s16, 3
    %p272 = pnand %p270, %p271
    %p273 = pneg %p272
    // Predicated region
    $region9: #{transformer_forward.17} parent=5 // pred_check
      _
    $region10: #{transformer_forward.17} parent=5 // pred_check_branch
      %275 = sbr.rel (%p272) target = $region12
    $region11: #{transformer_forward.17} parent=5 // pred_region
      %s276 = ssub.s32 %s16, 1
      // Predicated region
      $region13: #{transformer_forward.17} parent=11 // pred_check
        %p277 = pneg %p89
      $region14: #{transformer_forward.17} parent=11 // pred_check_branch
        %279 = sbr.rel (%p277) target = $region16
      $region15: #{transformer_forward.17} parent=11 // pred_region
        _
      $region16: #{transformer_forward.17} parent=11 // pred_fallthru
        _
      // Predicated region
      $region17: #{transformer_forward.17} parent=11 // pred_check
        %p280 = pneg %p110
      $region18: #{transformer_forward.17} parent=11 // pred_check_branch
        %282 = sbr.rel (%p280) target = $region20
      $region19: #{transformer_forward.17} parent=11 // pred_region
        _
      $region20: #{transformer_forward.17} parent=11 // pred_fallthru
        _
      // Predicated region
      $region21: #{transformer_forward.17} parent=11 // pred_check
        %p283 = pneg %p131
      $region22: #{transformer_forward.17} parent=11 // pred_check_branch
        %285 = sbr.rel (%p283) target = $region24
      $region23: #{transformer_forward.17} parent=11 // pred_region
        _
      $region24: #{transformer_forward.17} parent=11 // pred_fallthru
        _
      // Predicated region
      $region25: #{transformer_forward.17} parent=11 // pred_check
        %p286 = pneg %p152
      $region26: #{transformer_forward.17} parent=11 // pred_check_branch
        %288 = sbr.rel (%p286) target = $region28
      $region27: #{transformer_forward.17} parent=11 // pred_region
        _
      $region28: #{transformer_forward.17} parent=11 // pred_fallthru
        _
      // Predicated region
      $region29: #{transformer_forward.17} parent=11 // pred_check
        %p289 = pneg %p173
      $region30: #{transformer_forward.17} parent=11 // pred_check_branch
        %291 = sbr.rel (%p289) target = $region32
      $region31: #{transformer_forward.17} parent=11 // pred_region
        _
      $region32: #{transformer_forward.17} parent=11 // pred_fallthru
        _
      // Predicated region
      $region33: #{transformer_forward.17} parent=11 // pred_check
        %p292 = pneg %p194
      $region34: #{transformer_forward.17} parent=11 // pred_check_branch
        %294 = sbr.rel (%p292) target = $region36
      $region35: #{transformer_forward.17} parent=11 // pred_region
        _
      $region36: #{transformer_forward.17} parent=11 // pred_fallthru
        _
      // Predicated region
      $region37: #{transformer_forward.17} parent=11 // pred_check
        %p295 = pneg %p215
      $region38: #{transformer_forward.17} parent=11 // pred_check_branch
        %297 = sbr.rel (%p295) target = $region40
      $region39: #{transformer_forward.17} parent=11 // pred_region
        _
      $region40: #{transformer_forward.17} parent=11 // pred_fallthru
        _
      // Predicated region
      $region41: #{transformer_forward.17} parent=11 // pred_check
        %p298 = pneg %p236
      $region42: #{transformer_forward.17} parent=11 // pred_check_branch
        %300 = sbr.rel (%p298) target = $region44
      $region43: #{transformer_forward.17} parent=11 // pred_region
        _
      $region44: #{transformer_forward.17} parent=11 // pred_fallthru
        _
    $region12: #{transformer_forward.17} parent=5 // pred_fallthru
      _
    %p301 = scmp.lt.s32.totalorder %s16, 2
    // Predicated region
    $region45: #{transformer_forward.17} parent=5 // pred_check
      %p302 = pneg %p301
    $region46: #{transformer_forward.17} parent=5 // pred_check_branch
      %304 = sbr.rel (%p302) target = $region48
    $region47: #{transformer_forward.17} parent=5 // pred_region
      // Predicated region
      $region49: #{transformer_forward.17} parent=47 // pred_check
        %p305 = pneg %p36
      $region50: #{transformer_forward.17} parent=47 // pred_check_branch
        %307 = sbr.rel (%p305) target = $region52
      $region51: #{transformer_forward.17} parent=47 // pred_region
        %p308 = scmp.lt.s32.totalorder %s16, 1
        %s309 = scalar_select %p308, %s16, 1
        %s310 = smul.addr %s309, 8
        %s311 = scalar_lea.vmem %s0, %s310
      $region52: #{transformer_forward.17} parent=47 // pred_fallthru
        _
      // Predicated region
      $region53: #{transformer_forward.17} parent=47 // pred_check
        %p312 = pneg %p62
      $region54: #{transformer_forward.17} parent=47 // pred_check_branch
        %314 = sbr.rel (%p312) target = $region56
      $region55: #{transformer_forward.17} parent=47 // pred_region
        %p315 = scmp.lt.s32.totalorder %s16, 1
        %s316 = scalar_select %p315, %s16, 1
        %s317 = smul.addr %s316, 8
        %s318 = scalar_lea.vmem %s1, %s317
      $region56: #{transformer_forward.17} parent=47 // pred_fallthru
        _
    $region48: #{transformer_forward.17} parent=5 // pred_fallthru
      _
    %p319 = scmp.le.s32.totalorder 1, %s16
    %p320 = scmp.lt.s32.totalorder %s16, 3
    %p321 = pnand %p319, %p320
    %p322 = pneg %p321
    // Predicated region
    $region57: #{transformer_forward.17} parent=5 // pred_check
      _
    $region58: #{transformer_forward.17} parent=5 // pred_check_branch
      %324 = sbr.rel (%p321) target = $region60
    $region59: #{transformer_forward.17} parent=5 // pred_region
      %s325 = ssub.s32 %s16, 1
      %p326 = scmp.lt.s32.totalorder %s21, 1
      %s327 = scalar_select %p326, %s21, 1
      %s328 = smul.addr %s327, 8
      %s329 = scalar_lea.vmem %s0, %s328
      %p330 = pneg %p42
      %p331 = pneg %p39
      %p332 = scmp.lt.s32.totalorder %s21, 1
      %s333 = scalar_select %p332, %s21, 1
      %s334 = smul.addr %s333, 8
      %s335 = scalar_lea.vmem %s1, %s334
      %p336 = pneg %p68
      %p337 = pneg %p65
      %p338 = pneg %p89
      %p339 = pneg %p86
      %p340 = pneg %p110
      %p341 = pneg %p107
      %p342 = pneg %p131
      %p343 = pneg %p128
      %p344 = pneg %p152
      %p345 = pneg %p149
      %p346 = pneg %p173
      %p347 = pneg %p170
      %p348 = pneg %p194
      %p349 = pneg %p191
      %p350 = pneg %p215
      %p351 = pneg %p212
      %p352 = pneg %p236
      %p353 = pneg %p233
      %p354 = pneg %p262
      %p355 = pneg %p259
      %p356 = scmp.lt.s32.totalorder %s21, 1
      %s357 = scalar_select %p356, %s21, 1
      %s358 = smul.addr %s357, 8
      %s359 = scalar_lea.vmem %s10, %s358
      %p360 = scmp.lt.s32.totalorder %s21, 1
      %s361 = scalar_select %p360, %s21, 1
      %s362 = smul.addr %s361, 8
      %s363 = scalar_lea.vmem %s0, %s362
      %p364 = scmp.lt.s32.totalorder %s21, 1
      %s365 = scalar_select %p364, %s21, 1
      %s366 = smul.addr %s365, 8
      %s367 = scalar_lea.vmem %s1, %s366
      %p368 = scmp.lt.s32.totalorder %s21, 1
      %s369 = scalar_select %p368, %s21, 1
      %s370 = smul.addr %s369, 8
      %s371 = scalar_lea.vmem %s10, %s370
      %v372 = vld [vmem:[%s363] sm:$0xff]
      %v373 = vld [vmem:[%s367] sm:$0xff]
      %v374 = vld [vmem:[%s2] sm:$0xff]
      %v375 = vld [vmem:[%s2 + $0x8] sm:$0xff]
      %v376 = vld [vmem:[%s2 + $0x10] sm:$0xff]
      %v377 = vld [vmem:[%s2 + $0x18] sm:$0xff]
      %v378 = vld [vmem:[%s3] sm:$0x1]
      %v380 = vlaneseq
      %v381 = vshrl.u32 %v380, 7
      %v382 = vsub.s32 0, %v381
      %v383 = vrot.slane %v378, %v382
      %vm385 = vcmask 261120
      %v387 = vsel %vm385, %v372, 0
      %389 = vmatprep.subr.mxu0 0.0
      %390 = vmatpush1.msra.mxu0 %v374
      %391 = vmatprep.subr.mxu0 0.0
      %392 = vmatpush1.msra.mxu0 %v375
      %393 = vmatprep.subr.mxu0 0.0
      %394 = vmatpush1.msra.mxu0 %v376
      %395 = vmatprep.subr.mxu0 0.0
      %396 = vmatpush1.msra.mxu0 %v377
      %397 = vmatprep.subr.mxu0 0.0
      %398 = vmatpush1.msra.mxu0 0.0
      %399 = vmatprep.subr.mxu0 0.0
      %400 = vmatpush1.msra.mxu0 0.0
      %401 = vmatprep.subr.mxu0 0.0
      %402 = vmatpush1.msra.mxu0 0.0
      %403 = vmatprep.subr.mxu0 0.0
      %404 = vmatpush1.msra.mxu0 0.0
      %405 = vmatprep.subr.mxu0 0.0
      %406 = vmatpush1.msra.mxu0 0.0
      %407 = vmatprep.subr.mxu0 0.0
      %408 = vmatpush1.msra.mxu0 0.0
      %409 = vmatprep.subr.mxu0 0.0
      %410 = vmatpush1.msra.mxu0 0.0
      %411 = vmatprep.subr.mxu0 0.0
      %412 = vmatpush1.msra.mxu0 0.0
      %413 = vmatprep.subr.mxu0 0.0
      %414 = vmatpush1.msra.mxu0 0.0
      %415 = vmatprep.subr.mxu0 0.0
      %416 = vmatpush1.msra.mxu0 0.0
      %417 = vmatprep.subr.mxu0 0.0
      %418 = vmatpush1.msra.mxu0 0.0
      %419 = vmatprep.subr.mxu0 0.0
      %420 = vmatpush1.msra.mxu0 0.0
      %421 = vmatprep.subr.mxu0 0.0
      %422 = vmatpush1.msra.mxu0 0.0
      %423 = vmatprep.subr.mxu0 0.0
      %424 = vmatpush1.msra.mxu0 0.0
      %425 = vmatprep.subr.mxu0 0.0
      %426 = vmatpush1.msra.mxu0 0.0
      %427 = vmatprep.subr.mxu0 0.0
      %428 = vmatpush1.msra.mxu0 0.0
      %429 = vmatprep.subr.mxu0 0.0
      %430 = vmatpush1.msra.mxu0 0.0
      %431 = vmatprep.subr.mxu0 0.0
      %432 = vmatpush1.msra.mxu0 0.0
      %433 = vmatprep.subr.mxu0 0.0
      %434 = vmatpush1.msra.mxu0 0.0
      %435 = vmatprep.subr.mxu0 0.0
      %436 = vmatpush1.msra.mxu0 0.0
      %437 = vmatprep.subr.mxu0 0.0
      %438 = vmatpush1.msra.mxu0 0.0
      %439 = vmatprep.subr.mxu0 0.0
      %440 = vmatpush1.msra.mxu0 0.0
      %441 = vmatprep.subr.mxu0 0.0
      %442 = vmatpush1.msra.mxu0 0.0
      %443 = vmatprep.subr.mxu0 0.0
      %444 = vmatpush1.msra.mxu0 0.0
      %445 = vmatprep.subr.mxu0 0.0
      %446 = vmatpush1.msra.mxu0 0.0
      %447 = vmatprep.subr.mxu0 0.0
      %448 = vmatpush1.msra.mxu0 0.0
      %449 = vmatprep.subr.mxu0 0.0
      %450 = vmatpush1.msra.mxu0 0.0
      %451 = vmatprep.subr.mxu0 0.0
      %452 = vmatpush1.msra.mxu0 0.0
      %453 = vmatprep.mubr.f32.mxu0 0.0
      %454 = vmatmul.mubr.f32.gmra.mrb[0].mxu0 %v387
      %v455 = vpop.f32.mrb[0].mxu0
      %v456 = vadd.f32 %v383, %v455
      %v457 = vpop.f32.mrb[0].mxu0
      %458 = vdwg.mxu0
      %v459 = vld [vmem:[%s4] sm:$0xff]
      %v460 = vld [vmem:[%s4 + $0x8] sm:$0xff]
      %v461 = vld [vmem:[%s4 + $0x10] sm:$0xff]
      %v462 = vld [vmem:[%s4 + $0x18] sm:$0xff]
      %v463 = vld [vmem:[%s5] sm:$0x1]
      %v465 = vlaneseq
      %v466 = vshrl.u32 %v465, 7
      %v467 = vsub.s32 0, %v466
      %v468 = vrot.slane %v463, %v467
      %v471 = vsel %vm385, %v373, 0
      %473 = vmatprep.subr.mxu0 0.0
      %474 = vmatpush1.msra.mxu0 %v459
      %475 = vmatprep.subr.mxu0 0.0
      %476 = vmatpush1.msra.mxu0 %v460
      %477 = vmatprep.subr.mxu0 0.0
      %478 = vmatpush1.msra.mxu0 %v461
      %479 = vmatprep.subr.mxu0 0.0
      %480 = vmatpush1.msra.mxu0 %v462
      %481 = vmatprep.subr.mxu0 0.0
      %482 = vmatpush1.msra.mxu0 0.0
      %483 = vmatprep.subr.mxu0 0.0
      %484 = vmatpush1.msra.mxu0 0.0
      %485 = vmatprep.subr.mxu0 0.0
      %486 = vmatpush1.msra.mxu0 0.0
      %487 = vmatprep.subr.mxu0 0.0
      %488 = vmatpush1.msra.mxu0 0.0
      %489 = vmatprep.subr.mxu0 0.0
      %490 = vmatpush1.msra.mxu0 0.0
      %491 = vmatprep.subr.mxu0 0.0
      %492 = vmatpush1.msra.mxu0 0.0
      %493 = vmatprep.subr.mxu0 0.0
      %494 = vmatpush1.msra.mxu0 0.0
      %495 = vmatprep.subr.mxu0 0.0
      %496 = vmatpush1.msra.mxu0 0.0
      %497 = vmatprep.subr.mxu0 0.0
      %498 = vmatpush1.msra.mxu0 0.0
      %499 = vmatprep.subr.mxu0 0.0
      %500 = vmatpush1.msra.mxu0 0.0
      %501 = vmatprep.subr.mxu0 0.0
      %502 = vmatpush1.msra.mxu0 0.0
      %503 = vmatprep.subr.mxu0 0.0
      %504 = vmatpush1.msra.mxu0 0.0
      %505 = vmatprep.subr.mxu0 0.0
      %506 = vmatpush1.msra.mxu0 0.0
      %507 = vmatprep.subr.mxu0 0.0
      %508 = vmatpush1.msra.mxu0 0.0
      %509 = vmatprep.subr.mxu0 0.0
      %510 = vmatpush1.msra.mxu0 0.0
      %511 = vmatprep.subr.mxu0 0.0
      %512 = vmatpush1.msra.mxu0 0.0
      %513 = vmatprep.subr.mxu0 0.0
      %514 = vmatpush1.msra.mxu0 0.0
      %515 = vmatprep.subr.mxu0 0.0
      %516 = vmatpush1.msra.mxu0 0.0
      %517 = vmatprep.subr.mxu0 0.0
      %518 = vmatpush1.msra.mxu0 0.0
      %519 = vmatprep.subr.mxu0 0.0
      %520 = vmatpush1.msra.mxu0 0.0
      %521 = vmatprep.subr.mxu0 0.0
      %522 = vmatpush1.msra.mxu0 0.0
      %523 = vmatprep.subr.mxu0 0.0
      %524 = vmatpush1.msra.mxu0 0.0
      %525 = vmatprep.subr.mxu0 0.0
      %526 = vmatpush1.msra.mxu0 0.0
      %527 = vmatprep.subr.mxu0 0.0
      %528 = vmatpush1.msra.mxu0 0.0
      %529 = vmatprep.subr.mxu0 0.0
      %530 = vmatpush1.msra.mxu0 0.0
      %531 = vmatprep.subr.mxu0 0.0
      %532 = vmatpush1.msra.mxu0 0.0
      %533 = vmatprep.subr.mxu0 0.0
      %534 = vmatpush1.msra.mxu0 0.0
      %535 = vmatprep.subr.mxu0 0.0
      %536 = vmatpush1.msra.mxu0 0.0
      %537 = vmatprep.mubr.f32.mxu0 0.0
      %538 = vmatmul.mubr.f32.gmra.mrb[0].mxu0 %v471
      %v539 = vpop.f32.mrb[0].mxu0
      %v540 = vadd.f32 %v468, %v539
      %v541 = vpop.f32.mrb[0].mxu0
      %542 = vdwg.mxu0
      %v543 = vld [vmem:[%s6] sm:$0xff]
      %v544 = vld [vmem:[%s6 + $0x8] sm:$0xff]
      %v545 = vld [vmem:[%s6 + $0x10] sm:$0xff]
      %v546 = vld [vmem:[%s6 + $0x18] sm:$0xff]
      %vm547 = vcmask 64512
      %v549 = vsel %vm547, %v456, 0
      %v552 = vsel %vm547, %v540, 0
      %554 = vmatprep.subr.mxu0 0.0
      %555 = vmatpush1.xpose.msra.mxu0 %v552
      %556 = vmatprep.subr.mxu0 0.0
      %557 = vmatpush1.xpose.msra.mxu0 0.0
      %558 = vmatprep.subr.mxu0 0.0
      %559 = vmatpush1.xpose.msra.mxu0 0.0
      %560 = vmatprep.subr.mxu0 0.0
      %561 = vmatpush1.xpose.msra.mxu0 0.0
      %562 = vmatprep.subr.mxu0 0.0
      %563 = vmatpush1.xpose.msra.mxu0 0.0
      %564 = vmatprep.subr.mxu0 0.0
      %565 = vmatpush1.xpose.msra.mxu0 0.0
      %566 = vmatprep.subr.mxu0 0.0
      %567 = vmatpush1.xpose.msra.mxu0 0.0
      %568 = vmatprep.subr.mxu0 0.0
      %569 = vmatpush1.xpose.msra.mxu0 0.0
      %570 = vmatprep.subr.mxu0 0.0
      %571 = vmatpush1.xpose.msra.mxu0 0.0
      %572 = vmatprep.subr.mxu0 0.0
      %573 = vmatpush1.xpose.msra.mxu0 0.0
      %574 = vmatprep.subr.mxu0 0.0
      %575 = vmatpush1.xpose.msra.mxu0 0.0
      %576 = vmatprep.subr.mxu0 0.0
      %577 = vmatpush1.xpose.msra.mxu0 0.0
      %578 = vmatprep.subr.mxu0 0.0
      %579 = vmatpush1.xpose.msra.mxu0 0.0
      %580 = vmatprep.subr.mxu0 0.0
      %581 = vmatpush1.xpose.msra.mxu0 0.0
      %582 = vmatprep.subr.mxu0 0.0
      %583 = vmatpush1.xpose.msra.mxu0 0.0
      %584 = vmatprep.subr.mxu0 0.0
      %585 = vmatpush1.xpose.msra.mxu0 0.0
      %586 = vmatprep.subr.mxu0 0.0
      %587 = vmatpush1.xpose.msra.mxu0 0.0
      %588 = vmatprep.subr.mxu0 0.0
      %589 = vmatpush1.xpose.msra.mxu0 0.0
      %590 = vmatprep.subr.mxu0 0.0
      %591 = vmatpush1.xpose.msra.mxu0 0.0
      %592 = vmatprep.subr.mxu0 0.0
      %593 = vmatpush1.xpose.msra.mxu0 0.0
      %594 = vmatprep.subr.mxu0 0.0
      %595 = vmatpush1.xpose.msra.mxu0 0.0
      %596 = vmatprep.subr.mxu0 0.0
      %597 = vmatpush1.xpose.msra.mxu0 0.0
      %598 = vmatprep.subr.mxu0 0.0
      %599 = vmatpush1.xpose.msra.mxu0 0.0
      %600 = vmatprep.subr.mxu0 0.0
      %601 = vmatpush1.xpose.msra.mxu0 0.0
      %602 = vmatprep.subr.mxu0 0.0
      %603 = vmatpush1.xpose.msra.mxu0 0.0
      %604 = vmatprep.subr.mxu0 0.0
      %605 = vmatpush1.xpose.msra.mxu0 0.0
      %606 = vmatprep.subr.mxu0 0.0
      %607 = vmatpush1.xpose.msra.mxu0 0.0
      %608 = vmatprep.subr.mxu0 0.0
      %609 = vmatpush1.xpose.msra.mxu0 0.0
      %610 = vmatprep.subr.mxu0 0.0
      %611 = vmatpush1.xpose.msra.mxu0 0.0
      %612 = vmatprep.subr.mxu0 0.0
      %613 = vmatpush1.xpose.msra.mxu0 0.0
      %614 = vmatprep.subr.mxu0 0.0
      %615 = vmatpush1.xpose.msra.mxu0 0.0
      %616 = vmatprep.subr.mxu0 0.0
      %617 = vmatpush1.xpose.msra.mxu0 0.0
      %618 = vmatprep.mubr.f32.mxu0 0.0
      %619 = vmatmul.mubr.f32.gmra.mrb[0].mxu0 %v549
      %v620 = vpop.f32.mrb[0].mxu0
      %v621 = vadd.f32 0.0, %v620
      %v622 = vpop.f32.mrb[0].mxu0
      %623 = vdwg.mxu0
      %v624 = vmul.f32 %v621, 0.35355338
      %v625 = vsel %vm547, %v624, -inf
      %626 = vmax.xlane.f32.xlu0 %v625
      %v627 = vpop.xlane.xlu0 %626
      %v628 = vsub.f32 %v624, %v627
      %v629 = vmul.f32 %v628, 1.442695
      %v630 = vpow.pop %v629
      %v631 = vsel %vm547, %v630, 0.0
      %632 = vadd.xlane.f32.xlu0 %v631
      %v633 = vpop.xlane.xlu0 %632
      %v634 = vrcp.pop %v633
      %v635 = vmul.f32 %v630, %v634
      %636 = vrot.lane.b32.xlu0 %v540, 96
      %v637 = vpop.permute.xlu0 %636
      %v640 = vsel %vm547, %v635, 0
      %642 = vmatprep.subr.mxu0 0.0
      %643 = vmatpush1.msra.mxu0 %v637
      %644 = vmatprep.subr.mxu0 0.0
      %645 = vmatpush1.msra.mxu0 0.0
      %646 = vmatprep.subr.mxu0 0.0
      %647 = vmatpush1.msra.mxu0 0.0
      %648 = vmatprep.subr.mxu0 0.0
      %649 = vmatpush1.msra.mxu0 0.0
      %650 = vmatprep.subr.mxu0 0.0
      %651 = vmatpush1.msra.mxu0 0.0
      %652 = vmatprep.subr.mxu0 0.0
      %653 = vmatpush1.msra.mxu0 0.0
      %654 = vmatprep.subr.mxu0 0.0
      %655 = vmatpush1.msra.mxu0 0.0
      %656 = vmatprep.subr.mxu0 0.0
      %657 = vmatpush1.msra.mxu0 0.0
      %658 = vmatprep.subr.mxu0 0.0
      %659 = vmatpush1.msra.mxu0 0.0
      %660 = vmatprep.subr.mxu0 0.0
      %661 = vmatpush1.msra.mxu0 0.0
      %662 = vmatprep.subr.mxu0 0.0
      %663 = vmatpush1.msra.mxu0 0.0
      %664 = vmatprep.subr.mxu0 0.0
      %665 = vmatpush1.msra.mxu0 0.0
      %666 = vmatprep.subr.mxu0 0.0
      %667 = vmatpush1.msra.mxu0 0.0
      %668 = vmatprep.subr.mxu0 0.0
      %669 = vmatpush1.msra.mxu0 0.0
      %670 = vmatprep.subr.mxu0 0.0
      %671 = vmatpush1.msra.mxu0 0.0
      %672 = vmatprep.subr.mxu0 0.0
      %673 = vmatpush1.msra.mxu0 0.0
      %674 = vmatprep.subr.mxu0 0.0
      %675 = vmatpush1.msra.mxu0 0.0
      %676 = vmatprep.subr.mxu0 0.0
      %677 = vmatpush1.msra.mxu0 0.0
      %678 = vmatprep.subr.mxu0 0.0
      %679 = vmatpush1.msra.mxu0 0.0
      %680 = vmatprep.subr.mxu0 0.0
      %681 = vmatpush1.msra.mxu0 0.0
      %682 = vmatprep.subr.mxu0 0.0
      %683 = vmatpush1.msra.mxu0 0.0
      %684 = vmatprep.subr.mxu0 0.0
      %685 = vmatpush1.msra.mxu0 0.0
      %686 = vmatprep.subr.mxu0 0.0
      %687 = vmatpush1.msra.mxu0 0.0
      %688 = vmatprep.subr.mxu0 0.0
      %689 = vmatpush1.msra.mxu0 0.0
      %690 = vmatprep.subr.mxu0 0.0
      %691 = vmatpush1.msra.mxu0 0.0
      %692 = vmatprep.subr.mxu0 0.0
      %693 = vmatpush1.msra.mxu0 0.0
      %694 = vmatprep.subr.mxu0 0.0
      %695 = vmatpush1.msra.mxu0 0.0
      %696 = vmatprep.subr.mxu0 0.0
      %697 = vmatpush1.msra.mxu0 0.0
      %698 = vmatprep.subr.mxu0 0.0
      %699 = vmatpush1.msra.mxu0 0.0
      %700 = vmatprep.subr.mxu0 0.0
      %701 = vmatpush1.msra.mxu0 0.0
      %702 = vmatprep.subr.mxu0 0.0
      %703 = vmatpush1.msra.mxu0 0.0
      %704 = vmatprep.subr.mxu0 0.0
      %705 = vmatpush1.msra.mxu0 0.0
      %706 = vmatprep.mubr.f32.mxu0 0.0
      %707 = vmatmul.mubr.f32.gmra.mrb[0].mxu0 %v640
      %v708 = vpop.f32.mrb[0].mxu0
      %v709 = vadd.f32 0.0, %v708
      %v710 = vpop.f32.mrb[0].mxu0
      %711 = vdwg.mxu0
      %712 = vrot.lane.b32.xlu0 %v456, 120
      %v713 = vpop.permute.xlu0 %712
      %714 = vrot.lane.b32.xlu0 %v540, 120
      %v715 = vpop.permute.xlu0 %714
      %v716 = vsel %vm547, %v713, 0
      %v718 = vsel %vm547, %v715, 0
      %720 = vmatprep.subr.mxu0 0.0
      %721 = vmatpush1.xpose.msra.mxu0 %v718
      %722 = vmatprep.subr.mxu0 0.0
      %723 = vmatpush1.xpose.msra.mxu0 0.0
      %724 = vmatprep.subr.mxu0 0.0
      %725 = vmatpush1.xpose.msra.mxu0 0.0
      %726 = vmatprep.subr.mxu0 0.0
      %727 = vmatpush1.xpose.msra.mxu0 0.0
      %728 = vmatprep.subr.mxu0 0.0
      %729 = vmatpush1.xpose.msra.mxu0 0.0
      %730 = vmatprep.subr.mxu0 0.0
      %731 = vmatpush1.xpose.msra.mxu0 0.0
      %732 = vmatprep.subr.mxu0 0.0
      %733 = vmatpush1.xpose.msra.mxu0 0.0
      %734 = vmatprep.subr.mxu0 0.0
      %735 = vmatpush1.xpose.msra.mxu0 0.0
      %736 = vmatprep.subr.mxu0 0.0
      %737 = vmatpush1.xpose.msra.mxu0 0.0
      %738 = vmatprep.subr.mxu0 0.0
      %739 = vmatpush1.xpose.msra.mxu0 0.0
      %740 = vmatprep.subr.mxu0 0.0
      %741 = vmatpush1.xpose.msra.mxu0 0.0
      %742 = vmatprep.subr.mxu0 0.0
      %743 = vmatpush1.xpose.msra.mxu0 0.0
      %744 = vmatprep.subr.mxu0 0.0
      %745 = vmatpush1.xpose.msra.mxu0 0.0
      %746 = vmatprep.subr.mxu0 0.0
      %747 = vmatpush1.xpose.msra.mxu0 0.0
      %748 = vmatprep.subr.mxu0 0.0
      %749 = vmatpush1.xpose.msra.mxu0 0.0
      %750 = vmatprep.subr.mxu0 0.0
      %751 = vmatpush1.xpose.msra.mxu0 0.0
      %752 = vmatprep.subr.mxu0 0.0
      %753 = vmatpush1.xpose.msra.mxu0 0.0
      %754 = vmatprep.subr.mxu0 0.0
      %755 = vmatpush1.xpose.msra.mxu0 0.0
      %756 = vmatprep.subr.mxu0 0.0
      %757 = vmatpush1.xpose.msra.mxu0 0.0
      %758 = vmatprep.subr.mxu0 0.0
      %759 = vmatpush1.xpose.msra.mxu0 0.0
      %760 = vmatprep.subr.mxu0 0.0
      %761 = vmatpush1.xpose.msra.mxu0 0.0
      %762 = vmatprep.subr.mxu0 0.0
      %763 = vmatpush1.xpose.msra.mxu0 0.0
      %764 = vmatprep.subr.mxu0 0.0
      %765 = vmatpush1.xpose.msra.mxu0 0.0
      %766 = vmatprep.subr.mxu0 0.0
      %767 = vmatpush1.xpose.msra.mxu0 0.0
      %768 = vmatprep.subr.mxu0 0.0
      %769 = vmatpush1.xpose.msra.mxu0 0.0
      %770 = vmatprep.subr.mxu0 0.0
      %771 = vmatpush1.xpose.msra.mxu0 0.0
      %772 = vmatprep.subr.mxu0 0.0
      %773 = vmatpush1.xpose.msra.mxu0 0.0
      %774 = vmatprep.subr.mxu0 0.0
      %775 = vmatpush1.xpose.msra.mxu0 0.0
      %776 = vmatprep.subr.mxu0 0.0
      %777 = vmatpush1.xpose.msra.mxu0 0.0
      %778 = vmatprep.subr.mxu0 0.0
      %779 = vmatpush1.xpose.msra.mxu0 0.0
      %780 = vmatprep.subr.mxu0 0.0
      %781 = vmatpush1.xpose.msra.mxu0 0.0
      %782 = vmatprep.subr.mxu0 0.0
      %783 = vmatpush1.xpose.msra.mxu0 0.0
      %784 = vmatprep.mubr.f32.mxu0 0.0
      %785 = vmatmul.mubr.f32.gmra.mrb[0].mxu0 %v716
      %v786 = vpop.f32.mrb[0].mxu0
      %v787 = vadd.f32 0.0, %v786
      %v788 = vpop.f32.mrb[0].mxu0
      %789 = vdwg.mxu0
      %v790 = vmul.f32 %v787, 0.35355338
      %v791 = vsel %vm547, %v790, -inf
      %792 = vmax.xlane.f32.xlu0 %v791
      %v793 = vpop.xlane.xlu0 %792
      %v794 = vsub.f32 %v790, %v793
      %v795 = vmul.f32 %v794, 1.442695
      %v796 = vpow.pop %v795
      %v797 = vsel %vm547, %v796, 0.0
      %798 = vadd.xlane.f32.xlu0 %v797
      %v799 = vpop.xlane.xlu0 %798
      %v800 = vrcp.pop %v799
      %v801 = vmul.f32 %v796, %v800
      %802 = vrot.lane.b32.xlu0 %v540, 88
      %v803 = vpop.permute.xlu0 %802
      %v806 = vsel %vm547, %v801, 0
      %808 = vmatprep.subr.mxu0 0.0
      %809 = vmatpush1.msra.mxu0 %v803
      %810 = vmatprep.subr.mxu0 0.0
      %811 = vmatpush1.msra.mxu0 0.0
      %812 = vmatprep.subr.mxu0 0.0
      %813 = vmatpush1.msra.mxu0 0.0
      %814 = vmatprep.subr.mxu0 0.0
      %815 = vmatpush1.msra.mxu0 0.0
      %816 = vmatprep.subr.mxu0 0.0
      %817 = vmatpush1.msra.mxu0 0.0
      %818 = vmatprep.subr.mxu0 0.0
      %819 = vmatpush1.msra.mxu0 0.0
      %820 = vmatprep.subr.mxu0 0.0
      %821 = vmatpush1.msra.mxu0 0.0
      %822 = vmatprep.subr.mxu0 0.0
      %823 = vmatpush1.msra.mxu0 0.0
      %824 = vmatprep.subr.mxu0 0.0
      %825 = vmatpush1.msra.mxu0 0.0
      %826 = vmatprep.subr.mxu0 0.0
      %827 = vmatpush1.msra.mxu0 0.0
      %828 = vmatprep.subr.mxu0 0.0
      %829 = vmatpush1.msra.mxu0 0.0
      %830 = vmatprep.subr.mxu0 0.0
      %831 = vmatpush1.msra.mxu0 0.0
      %832 = vmatprep.subr.mxu0 0.0
      %833 = vmatpush1.msra.mxu0 0.0
      %834 = vmatprep.subr.mxu0 0.0
      %835 = vmatpush1.msra.mxu0 0.0
      %836 = vmatprep.subr.mxu0 0.0
      %837 = vmatpush1.msra.mxu0 0.0
      %838 = vmatprep.subr.mxu0 0.0
      %839 = vmatpush1.msra.mxu0 0.0
      %840 = vmatprep.subr.mxu0 0.0
      %841 = vmatpush1.msra.mxu0 0.0
      %842 = vmatprep.subr.mxu0 0.0
      %843 = vmatpush1.msra.mxu0 0.0
      %844 = vmatprep.subr.mxu0 0.0
      %845 = vmatpush1.msra.mxu0 0.0
      %846 = vmatprep.subr.mxu0 0.0
      %847 = vmatpush1.msra.mxu0 0.0
      %848 = vmatprep.subr.mxu0 0.0
      %849 = vmatpush1.msra.mxu0 0.0
      %850 = vmatprep.subr.mxu0 0.0
      %851 = vmatpush1.msra.mxu0 0.0
      %852 = vmatprep.subr.mxu0 0.0
      %853 = vmatpush1.msra.mxu0 0.0
      %854 = vmatprep.subr.mxu0 0.0
      %855 = vmatpush1.msra.mxu0 0.0
      %856 = vmatprep.subr.mxu0 0.0
      %857 = vmatpush1.msra.mxu0 0.0
      %858 = vmatprep.subr.mxu0 0.0
      %859 = vmatpush1.msra.mxu0 0.0
      %860 = vmatprep.subr.mxu0 0.0
      %861 = vmatpush1.msra.mxu0 0.0
      %862 = vmatprep.subr.mxu0 0.0
      %863 = vmatpush1.msra.mxu0 0.0
      %864 = vmatprep.subr.mxu0 0.0
      %865 = vmatpush1.msra.mxu0 0.0
      %866 = vmatprep.subr.mxu0 0.0
      %867 = vmatpush1.msra.mxu0 0.0
      %868 = vmatprep.subr.mxu0 0.0
      %869 = vmatpush1.msra.mxu0 0.0
      %870 = vmatprep.subr.mxu0 0.0
      %871 = vmatpush1.msra.mxu0 0.0
      %872 = vmatprep.mubr.f32.mxu0 0.0
      %873 = vmatmul.mubr.f32.gmra.mrb[0].mxu0 %v806
      %v874 = vpop.f32.mrb[0].mxu0
      %v875 = vadd.f32 0.0, %v874
      %v876 = vpop.f32.mrb[0].mxu0
      %877 = vdwg.mxu0
      %v879 = vsel %vm547, %v875, 0
      %881 = vmatprep.subr.mxu0 0.0
      %882 = vmatpush1.msra.mxu0 %v544
      %883 = vmatprep.subr.mxu0 0.0
      %884 = vmatpush1.msra.mxu0 0.0
      %885 = vmatprep.subr.mxu0 0.0
      %886 = vmatpush1.msra.mxu0 0.0
      %887 = vmatprep.subr.mxu0 0.0
      %888 = vmatpush1.msra.mxu0 0.0
      %889 = vmatprep.subr.mxu0 0.0
      %890 = vmatpush1.msra.mxu0 0.0
      %891 = vmatprep.subr.mxu0 0.0
      %892 = vmatpush1.msra.mxu0 0.0
      %893 = vmatprep.subr.mxu0 0.0
      %894 = vmatpush1.msra.mxu0 0.0
      %895 = vmatprep.subr.mxu0 0.0
      %896 = vmatpush1.msra.mxu0 0.0
      %897 = vmatprep.subr.mxu0 0.0
      %898 = vmatpush1.msra.mxu0 0.0
      %899 = vmatprep.subr.mxu0 0.0
      %900 = vmatpush1.msra.mxu0 0.0
      %901 = vmatprep.subr.mxu0 0.0
      %902 = vmatpush1.msra.mxu0 0.0
      %903 = vmatprep.subr.mxu0 0.0
      %904 = vmatpush1.msra.mxu0 0.0
      %905 = vmatprep.subr.mxu0 0.0
      %906 = vmatpush1.msra.mxu0 0.0
      %907 = vmatprep.subr.mxu0 0.0
      %908 = vmatpush1.msra.mxu0 0.0
      %909 = vmatprep.subr.mxu0 0.0
      %910 = vmatpush1.msra.mxu0 0.0
      %911 = vmatprep.subr.mxu0 0.0
      %912 = vmatpush1.msra.mxu0 0.0
      %913 = vmatprep.subr.mxu0 0.0
      %914 = vmatpush1.msra.mxu0 0.0
      %915 = vmatprep.subr.mxu0 0.0
      %916 = vmatpush1.msra.mxu0 0.0
      %917 = vmatprep.subr.mxu0 0.0
      %918 = vmatpush1.msra.mxu0 0.0
      %919 = vmatprep.subr.mxu0 0.0
      %920 = vmatpush1.msra.mxu0 0.0
      %921 = vmatprep.subr.mxu0 0.0
      %922 = vmatpush1.msra.mxu0 0.0
      %923 = vmatprep.subr.mxu0 0.0
      %924 = vmatpush1.msra.mxu0 0.0
      %925 = vmatprep.subr.mxu0 0.0
      %926 = vmatpush1.msra.mxu0 0.0
      %927 = vmatprep.subr.mxu0 0.0
      %928 = vmatpush1.msra.mxu0 0.0
      %929 = vmatprep.subr.mxu0 0.0
      %930 = vmatpush1.msra.mxu0 0.0
      %931 = vmatprep.subr.mxu0 0.0
      %932 = vmatpush1.msra.mxu0 0.0
      %933 = vmatprep.subr.mxu0 0.0
      %934 = vmatpush1.msra.mxu0 0.0
      %935 = vmatprep.subr.mxu0 0.0
      %936 = vmatpush1.msra.mxu0 0.0
      %937 = vmatprep.subr.mxu0 0.0
      %938 = vmatpush1.msra.mxu0 0.0
      %939 = vmatprep.subr.mxu0 0.0
      %940 = vmatpush1.msra.mxu0 0.0
      %941 = vmatprep.subr.mxu0 0.0
      %942 = vmatpush1.msra.mxu0 0.0
      %943 = vmatprep.subr.mxu0 0.0
      %944 = vmatpush1.msra.mxu0 0.0
      %945 = vmatprep.mubr.f32.mxu0 0.0
      %946 = vmatmul.mubr.f32.gmra.mrb[0].mxu0 %v879
      %v947 = vpop.f32.mrb[0].mxu0
      %v948 = vadd.f32 0.0, %v947
      %v949 = vpop.f32.mrb[0].mxu0
      %950 = vdwg.mxu0
      %v952 = vsel %vm547, %v709, 0
      %954 = vmatprep.subr.mxu0 0.0
      %955 = vmatpush1.msra.mxu0 %v543
      %956 = vmatprep.subr.mxu0 0.0
      %957 = vmatpush1.msra.mxu0 0.0
      %958 = vmatprep.subr.mxu0 0.0
      %959 = vmatpush1.msra.mxu0 0.0
      %960 = vmatprep.subr.mxu0 0.0
      %961 = vmatpush1.msra.mxu0 0.0
      %962 = vmatprep.subr.mxu0 0.0
      %963 = vmatpush1.msra.mxu0 0.0
      %964 = vmatprep.subr.mxu0 0.0
      %965 = vmatpush1.msra.mxu0 0.0
      %966 = vmatprep.subr.mxu0 0.0
      %967 = vmatpush1.msra.mxu0 0.0
      %968 = vmatprep.subr.mxu0 0.0
      %969 = vmatpush1.msra.mxu0 0.0
      %970 = vmatprep.subr.mxu0 0.0
      %971 = vmatpush1.msra.mxu0 0.0
      %972 = vmatprep.subr.mxu0 0.0
      %973 = vmatpush1.msra.mxu0 0.0
      %974 = vmatprep.subr.mxu0 0.0
      %975 = vmatpush1.msra.mxu0 0.0
      %976 = vmatprep.subr.mxu0 0.0
      %977 = vmatpush1.msra.mxu0 0.0
      %978 = vmatprep.subr.mxu0 0.0
      %979 = vmatpush1.msra.mxu0 0.0
      %980 = vmatprep.subr.mxu0 0.0
      %981 = vmatpush1.msra.mxu0 0.0
      %982 = vmatprep.subr.mxu0 0.0
      %983 = vmatpush1.msra.mxu0 0.0
      %984 = vmatprep.subr.mxu0 0.0
      %985 = vmatpush1.msra.mxu0 0.0
      %986 = vmatprep.subr.mxu0 0.0
      %987 = vmatpush1.msra.mxu0 0.0
      %988 = vmatprep.subr.mxu0 0.0
      %989 = vmatpush1.msra.mxu0 0.0
      %990 = vmatprep.subr.mxu0 0.0
      %991 = vmatpush1.msra.mxu0 0.0
      %992 = vmatprep.subr.mxu0 0.0
      %993 = vmatpush1.msra.mxu0 0.0
      %994 = vmatprep.subr.mxu0 0.0
      %995 = vmatpush1.msra.mxu0 0.0
      %996 = vmatprep.subr.mxu0 0.0
      %997 = vmatpush1.msra.mxu0 0.0
      %998 = vmatprep.subr.mxu0 0.0
      %999 = vmatpush1.msra.mxu0 0.0
      %1000 = vmatprep.subr.mxu0 0.0
      %1001 = vmatpush1.msra.mxu0 0.0
      %1002 = vmatprep.subr.mxu0 0.0
      %1003 = vmatpush1.msra.mxu0 0.0
      %1004 = vmatprep.subr.mxu0 0.0
      %1005 = vmatpush1.msra.mxu0 0.0
      %1006 = vmatprep.subr.mxu0 0.0
      %1007 = vmatpush1.msra.mxu0 0.0
      %1008 = vmatprep.subr.mxu0 0.0
      %1009 = vmatpush1.msra.mxu0 0.0
      %1010 = vmatprep.subr.mxu0 0.0
      %1011 = vmatpush1.msra.mxu0 0.0
      %1012 = vmatprep.subr.mxu0 0.0
      %1013 = vmatpush1.msra.mxu0 0.0
      %1014 = vmatprep.subr.mxu0 0.0
      %1015 = vmatpush1.msra.mxu0 0.0
      %1016 = vmatprep.subr.mxu0 0.0
      %1017 = vmatpush1.msra.mxu0 0.0
      %1018 = vmatprep.mubr.f32.mxu0 0.0
      %1019 = vmatmul.mubr.f32.gmra.mrb[0].mxu0 %v952
      %v1020 = vpop.f32.mrb[0].mxu0
      %v1021 = vadd.f32 %v948, %v1020
      %v1022 = vpop.f32.mrb[0].mxu0
      %1023 = vdwg.mxu0
      %1024 = vrot.lane.b32.xlu0 %v456, 112
      %v1025 = vpop.permute.xlu0 %1024
      %1026 = vrot.lane.b32.xlu0 %v540, 112
      %v1027 = vpop.permute.xlu0 %1026
      %v1028 = vsel %vm547, %v1025, 0
      %v1030 = vsel %vm547, %v1027, 0
      %1032 = vmatprep.subr.mxu0 0.0
      %1033 = vmatpush1.xpose.msra.mxu0 %v1030
      %1034 = vmatprep.subr.mxu0 0.0
      %1035 = vmatpush1.xpose.msra.mxu0 0.0
      %1036 = vmatprep.subr.mxu0 0.0
      %1037 = vmatpush1.xpose.msra.mxu0 0.0
      %1038 = vmatprep.subr.mxu0 0.0
      %1039 = vmatpush1.xpose.msra.mxu0 0.0
      %1040 = vmatprep.subr.mxu0 0.0
      %1041 = vmatpush1.xpose.msra.mxu0 0.0
      %1042 = vmatprep.subr.mxu0 0.0
      %1043 = vmatpush1.xpose.msra.mxu0 0.0
      %1044 = vmatprep.subr.mxu0 0.0
      %1045 = vmatpush1.xpose.msra.mxu0 0.0
      %1046 = vmatprep.subr.mxu0 0.0
      %1047 = vmatpush1.xpose.msra.mxu0 0.0
      %1048 = vmatprep.subr.mxu0 0.0
      %1049 = vmatpush1.xpose.msra.mxu0 0.0
      %1050 = vmatprep.subr.mxu0 0.0
      %1051 = vmatpush1.xpose.msra.mxu0 0.0
      %1052 = vmatprep.subr.mxu0 0.0
      %1053 = vmatpush1.xpose.msra.mxu0 0.0
      %1054 = vmatprep.subr.mxu0 0.0
      %1055 = vmatpush1.xpose.msra.mxu0 0.0
      %1056 = vmatprep.subr.mxu0 0.0
      %1057 = vmatpush1.xpose.msra.mxu0 0.0
      %1058 = vmatprep.subr.mxu0 0.0
      %1059 = vmatpush1.xpose.msra.mxu0 0.0
      %1060 = vmatprep.subr.mxu0 0.0
      %1061 = vmatpush1.xpose.msra.mxu0 0.0
      %1062 = vmatprep.subr.mxu0 0.0
      %1063 = vmatpush1.xpose.msra.mxu0 0.0
      %1064 = vmatprep.subr.mxu0 0.0
      %1065 = vmatpush1.xpose.msra.mxu0 0.0
      %1066 = vmatprep.subr.mxu0 0.0
      %1067 = vmatpush1.xpose.msra.mxu0 0.0
      %1068 = vmatprep.subr.mxu0 0.0
      %1069 = vmatpush1.xpose.msra.mxu0 0.0
      %1070 = vmatprep.subr.mxu0 0.0
      %1071 = vmatpush1.xpose.msra.mxu0 0.0
      %1072 = vmatprep.subr.mxu0 0.0
      %1073 = vmatpush1.xpose.msra.mxu0 0.0
      %1074 = vmatprep.subr.mxu0 0.0
      %1075 = vmatpush1.xpose.msra.mxu0 0.0
      %1076 = vmatprep.subr.mxu0 0.0
      %1077 = vmatpush1.xpose.msra.mxu0 0.0
      %1078 = vmatprep.subr.mxu0 0.0
      %1079 = vmatpush1.xpose.msra.mxu0 0.0
      %1080 = vmatprep.subr.mxu0 0.0
      %1081 = vmatpush1.xpose.msra.mxu0 0.0
      %1082 = vmatprep.subr.mxu0 0.0
      %1083 = vmatpush1.xpose.msra.mxu0 0.0
      %1084 = vmatprep.subr.mxu0 0.0
      %1085 = vmatpush1.xpose.msra.mxu0 0.0
      %1086 = vmatprep.subr.mxu0 0.0
      %1087 = vmatpush1.xpose.msra.mxu0 0.0
      %1088 = vmatprep.subr.mxu0 0.0
      %1089 = vmatpush1.xpose.msra.mxu0 0.0
      %1090 = vmatprep.subr.mxu0 0.0
      %1091 = vmatpush1.xpose.msra.mxu0 0.0
      %1092 = vmatprep.subr.mxu0 0.0
      %1093 = vmatpush1.xpose.msra.mxu0 0.0
      %1094 = vmatprep.subr.mxu0 0.0
      %1095 = vmatpush1.xpose.msra.mxu0 0.0
      %1096 = vmatprep.mubr.f32.mxu0 0.0
      %1097 = vmatmul.mubr.f32.gmra.mrb[0].mxu0 %v1028
      %v1098 = vpop.f32.mrb[0].mxu0
      %v1099 = vadd.f32 0.0, %v1098
      %v1100 = vpop.f32.mrb[0].mxu0
      %1101 = vdwg.mxu0
      %v1102 = vmul.f32 %v1099, 0.35355338
      %v1103 = vsel %vm547, %v1102, -inf
      %1104 = vmax.xlane.f32.xlu0 %v1103
      %v1105 = vpop.xlane.xlu0 %1104
      %v1106 = vsub.f32 %v1102, %v1105
      %v1107 = vmul.f32 %v1106, 1.442695
      %v1108 = vpow.pop %v1107
      %v1109 = vsel %vm547, %v1108, 0.0
      %1110 = vadd.xlane.f32.xlu0 %v1109
      %v1111 = vpop.xlane.xlu0 %1110
      %v1112 = vrcp.pop %v1111
      %v1113 = vmul.f32 %v1108, %v1112
      %1114 = vrot.lane.b32.xlu0 %v540, 80
      %v1115 = vpop.permute.xlu0 %1114
      %v1118 = vsel %vm547, %v1113, 0
      %1120 = vmatprep.subr.mxu0 0.0
      %1121 = vmatpush1.msra.mxu0 %v1115
      %1122 = vmatprep.subr.mxu0 0.0
      %1123 = vmatpush1.msra.mxu0 0.0
      %1124 = vmatprep.subr.mxu0 0.0
      %1125 = vmatpush1.msra.mxu0 0.0
      %1126 = vmatprep.subr.mxu0 0.0
      %1127 = vmatpush1.msra.mxu0 0.0
      %1128 = vmatprep.subr.mxu0 0.0
      %1129 = vmatpush1.msra.mxu0 0.0
      %1130 = vmatprep.subr.mxu0 0.0
      %1131 = vmatpush1.msra.mxu0 0.0
      %1132 = vmatprep.subr.mxu0 0.0
      %1133 = vmatpush1.msra.mxu0 0.0
      %1134 = vmatprep.subr.mxu0 0.0
      %1135 = vmatpush1.msra.mxu0 0.0
      %1136 = vmatprep.subr.mxu0 0.0
      %1137 = vmatpush1.msra.mxu0 0.0
      %1138 = vmatprep.subr.mxu0 0.0
      %1139 = vmatpush1.msra.mxu0 0.0
      %1140 = vmatprep.subr.mxu0 0.0
      %1141 = vmatpush1.msra.mxu0 0.0
      %1142 = vmatprep.subr.mxu0 0.0
      %1143 = vmatpush1.msra.mxu0 0.0
      %1144 = vmatprep.subr.mxu0 0.0
      %1145 = vmatpush1.msra.mxu0 0.0
      %1146 = vmatprep.subr.mxu0 0.0
      %1147 = vmatpush1.msra.mxu0 0.0
      %1148 = vmatprep.subr.mxu0 0.0
      %1149 = vmatpush1.msra.mxu0 0.0
      %1150 = vmatprep.subr.mxu0 0.0
      %1151 = vmatpush1.msra.mxu0 0.0
      %1152 = vmatprep.subr.mxu0 0.0
      %1153 = vmatpush1.msra.mxu0 0.0
      %1154 = vmatprep.subr.mxu0 0.0
      %1155 = vmatpush1.msra.mxu0 0.0
      %1156 = vmatprep.subr.mxu0 0.0
      %1157 = vmatpush1.msra.mxu0 0.0
      %1158 = vmatprep.subr.mxu0 0.0
      %1159 = vmatpush1.msra.mxu0 0.0
      %1160 = vmatprep.subr.mxu0 0.0
      %1161 = vmatpush1.msra.mxu0 0.0
      %1162 = vmatprep.subr.mxu0 0.0
      %1163 = vmatpush1.msra.mxu0 0.0
      %1164 = vmatprep.subr.mxu0 0.0
      %1165 = vmatpush1.msra.mxu0 0.0
      %1166 = vmatprep.subr.mxu0 0.0
      %1167 = vmatpush1.msra.mxu0 0.0
      %1168 = vmatprep.subr.mxu0 0.0
      %1169 = vmatpush1.msra.mxu0 0.0
      %1170 = vmatprep.subr.mxu0 0.0
      %1171 = vmatpush1.msra.mxu0 0.0
      %1172 = vmatprep.subr.mxu0 0.0
      %1173 = vmatpush1.msra.mxu0 0.0
      %1174 = vmatprep.subr.mxu0 0.0
      %1175 = vmatpush1.msra.mxu0 0.0
      %1176 = vmatprep.subr.mxu0 0.0
      %1177 = vmatpush1.msra.mxu0 0.0
      %1178 = vmatprep.subr.mxu0 0.0
      %1179 = vmatpush1.msra.mxu0 0.0
      %1180 = vmatprep.subr.mxu0 0.0
      %1181 = vmatpush1.msra.mxu0 0.0
      %1182 = vmatprep.subr.mxu0 0.0
      %1183 = vmatpush1.msra.mxu0 0.0
      %1184 = vmatprep.mubr.f32.mxu0 0.0
      %1185 = vmatmul.mubr.f32.gmra.mrb[0].mxu0 %v1118
      %v1186 = vpop.f32.mrb[0].mxu0
      %v1187 = vadd.f32 0.0, %v1186
      %v1188 = vpop.f32.mrb[0].mxu0
      %1189 = vdwg.mxu0
      %v1191 = vsel %vm547, %v1187, 0
      %1193 = vmatprep.subr.mxu0 0.0
      %1194 = vmatpush1.msra.mxu0 %v545
      %1195 = vmatprep.subr.mxu0 0.0
      %1196 = vmatpush1.msra.mxu0 0.0
      %1197 = vmatprep.subr.mxu0 0.0
      %1198 = vmatpush1.msra.mxu0 0.0
      %1199 = vmatprep.subr.mxu0 0.0
      %1200 = vmatpush1.msra.mxu0 0.0
      %1201 = vmatprep.subr.mxu0 0.0
      %1202 = vmatpush1.msra.mxu0 0.0
      %1203 = vmatprep.subr.mxu0 0.0
      %1204 = vmatpush1.msra.mxu0 0.0
      %1205 = vmatprep.subr.mxu0 0.0
      %1206 = vmatpush1.msra.mxu0 0.0
      %1207 = vmatprep.subr.mxu0 0.0
      %1208 = vmatpush1.msra.mxu0 0.0
      %1209 = vmatprep.subr.mxu0 0.0
      %1210 = vmatpush1.msra.mxu0 0.0
      %1211 = vmatprep.subr.mxu0 0.0
      %1212 = vmatpush1.msra.mxu0 0.0
      %1213 = vmatprep.subr.mxu0 0.0
      %1214 = vmatpush1.msra.mxu0 0.0
      %1215 = vmatprep.subr.mxu0 0.0
      %1216 = vmatpush1.msra.mxu0 0.0
      %1217 = vmatprep.subr.mxu0 0.0
      %1218 = vmatpush1.msra.mxu0 0.0
      %1219 = vmatprep.subr.mxu0 0.0
      %1220 = vmatpush1.msra.mxu0 0.0
      %1221 = vmatprep.subr.mxu0 0.0
      %1222 = vmatpush1.msra.mxu0 0.0
      %1223 = vmatprep.subr.mxu0 0.0
      %1224 = vmatpush1.msra.mxu0 0.0
      %1225 = vmatprep.subr.mxu0 0.0
      %1226 = vmatpush1.msra.mxu0 0.0
      %1227 = vmatprep.subr.mxu0 0.0
      %1228 = vmatpush1.msra.mxu0 0.0
      %1229 = vmatprep.subr.mxu0 0.0
      %1230 = vmatpush1.msra.mxu0 0.0
      %1231 = vmatprep.subr.mxu0 0.0
      %1232 = vmatpush1.msra.mxu0 0.0
      %1233 = vmatprep.subr.mxu0 0.0
      %1234 = vmatpush1.msra.mxu0 0.0
      %1235 = vmatprep.subr.mxu0 0.0
      %1236 = vmatpush1.msra.mxu0 0.0
      %1237 = vmatprep.subr.mxu0 0.0
      %1238 = vmatpush1.msra.mxu0 0.0
      %1239 = vmatprep.subr.mxu0 0.0
      %1240 = vmatpush1.msra.mxu0 0.0
      %1241 = vmatprep.subr.mxu0 0.0
      %1242 = vmatpush1.msra.mxu0 0.0
      %1243 = vmatprep.subr.mxu0 0.0
      %1244 = vmatpush1.msra.mxu0 0.0
      %1245 = vmatprep.subr.mxu0 0.0
      %1246 = vmatpush1.msra.mxu0 0.0
      %1247 = vmatprep.subr.mxu0 0.0
      %1248 = vmatpush1.msra.mxu0 0.0
      %1249 = vmatprep.subr.mxu0 0.0
      %1250 = vmatpush1.msra.mxu0 0.0
      %1251 = vmatprep.subr.mxu0 0.0
      %1252 = vmatpush1.msra.mxu0 0.0
      %1253 = vmatprep.subr.mxu0 0.0
      %1254 = vmatpush1.msra.mxu0 0.0
      %1255 = vmatprep.subr.mxu0 0.0
      %1256 = vmatpush1.msra.mxu0 0.0
      %1257 = vmatprep.mubr.f32.mxu0 0.0
      %1258 = vmatmul.mubr.f32.gmra.mrb[0].mxu0 %v1191
      %v1259 = vpop.f32.mrb[0].mxu0
      %v1260 = vadd.f32 0.0, %v1259
      %v1261 = vpop.f32.mrb[0].mxu0
      %1262 = vdwg.mxu0
      %v1263 = vadd.f32 %v1021, %v1260
      %1264 = vrot.lane.b32.xlu0 %v456, 104
      %v1265 = vpop.permute.xlu0 %1264
      %1266 = vrot.lane.b32.xlu0 %v540, 104
      %v1267 = vpop.permute.xlu0 %1266
      %v1268 = vsel %vm547, %v1265, 0
      %v1270 = vsel %vm547, %v1267, 0
      %1272 = vmatprep.subr.mxu0 0.0
      %1273 = vmatpush1.xpose.msra.mxu0 %v1270
      %1274 = vmatprep.subr.mxu0 0.0
      %1275 = vmatpush1.xpose.msra.mxu0 0.0
      %1276 = vmatprep.subr.mxu0 0.0
      %1277 = vmatpush1.xpose.msra.mxu0 0.0
      %1278 = vmatprep.subr.mxu0 0.0
      %1279 = vmatpush1.xpose.msra.mxu0 0.0
      %1280 = vmatprep.subr.mxu0 0.0
      %1281 = vmatpush1.xpose.msra.mxu0 0.0
      %1282 = vmatprep.subr.mxu0 0.0
      %1283 = vmatpush1.xpose.msra.mxu0 0.0
      %1284 = vmatprep.subr.mxu0 0.0
      %1285 = vmatpush1.xpose.msra.mxu0 0.0
      %1286 = vmatprep.subr.mxu0 0.0
      %1287 = vmatpush1.xpose.msra.mxu0 0.0
      %1288 = vmatprep.subr.mxu0 0.0
      %1289 = vmatpush1.xpose.msra.mxu0 0.0
      %1290 = vmatprep.subr.mxu0 0.0
      %1291 = vmatpush1.xpose.msra.mxu0 0.0
      %1292 = vmatprep.subr.mxu0 0.0
      %1293 = vmatpush1.xpose.msra.mxu0 0.0
      %1294 = vmatprep.subr.mxu0 0.0
      %1295 = vmatpush1.xpose.msra.mxu0 0.0
      %1296 = vmatprep.subr.mxu0 0.0
      %1297 = vmatpush1.xpose.msra.mxu0 0.0
      %1298 = vmatprep.subr.mxu0 0.0
      %1299 = vmatpush1.xpose.msra.mxu0 0.0
      %1300 = vmatprep.subr.mxu0 0.0
      %1301 = vmatpush1.xpose.msra.mxu0 0.0
      %1302 = vmatprep.subr.mxu0 0.0
      %1303 = vmatpush1.xpose.msra.mxu0 0.0
      %1304 = vmatprep.subr.mxu0 0.0
      %1305 = vmatpush1.xpose.msra.mxu0 0.0
      %1306 = vmatprep.subr.mxu0 0.0
      %1307 = vmatpush1.xpose.msra.mxu0 0.0
      %1308 = vmatprep.subr.mxu0 0.0
      %1309 = vmatpush1.xpose.msra.mxu0 0.0
      %1310 = vmatprep.subr.mxu0 0.0
      %1311 = vmatpush1.xpose.msra.mxu0 0.0
      %1312 = vmatprep.subr.mxu0 0.0
      %1313 = vmatpush1.xpose.msra.mxu0 0.0
      %1314 = vmatprep.subr.mxu0 0.0
      %1315 = vmatpush1.xpose.msra.mxu0 0.0
      %1316 = vmatprep.subr.mxu0 0.0
      %1317 = vmatpush1.xpose.msra.mxu0 0.0
      %1318 = vmatprep.subr.mxu0 0.0
      %1319 = vmatpush1.xpose.msra.mxu0 0.0
      %1320 = vmatprep.subr.mxu0 0.0
      %1321 = vmatpush1.xpose.msra.mxu0 0.0
      %1322 = vmatprep.subr.mxu0 0.0
      %1323 = vmatpush1.xpose.msra.mxu0 0.0
      %1324 = vmatprep.subr.mxu0 0.0
      %1325 = vmatpush1.xpose.msra.mxu0 0.0
      %1326 = vmatprep.subr.mxu0 0.0
      %1327 = vmatpush1.xpose.msra.mxu0 0.0
      %1328 = vmatprep.subr.mxu0 0.0
      %1329 = vmatpush1.xpose.msra.mxu0 0.0
      %1330 = vmatprep.subr.mxu0 0.0
      %1331 = vmatpush1.xpose.msra.mxu0 0.0
      %1332 = vmatprep.subr.mxu0 0.0
      %1333 = vmatpush1.xpose.msra.mxu0 0.0
      %1334 = vmatprep.subr.mxu0 0.0
      %1335 = vmatpush1.xpose.msra.mxu0 0.0
      %1336 = vmatprep.mubr.f32.mxu0 0.0
      %1337 = vmatmul.mubr.f32.gmra.mrb[0].mxu0 %v1268
      %v1338 = vpop.f32.mrb[0].mxu0
      %v1339 = vadd.f32 0.0, %v1338
      %v1340 = vpop.f32.mrb[0].mxu0
      %1341 = vdwg.mxu0
      %v1342 = vmul.f32 %v1339, 0.35355338
      %v1343 = vsel %vm547, %v1342, -inf
      %1344 = vmax.xlane.f32.xlu0 %v1343
      %v1345 = vpop.xlane.xlu0 %1344
      %v1346 = vsub.f32 %v1342, %v1345
      %v1347 = vmul.f32 %v1346, 1.442695
      %v1348 = vpow.pop %v1347
      %v1349 = vsel %vm547, %v1348, 0.0
      %1350 = vadd.xlane.f32.xlu0 %v1349
      %v1351 = vpop.xlane.xlu0 %1350
      %v1352 = vrcp.pop %v1351
      %v1353 = vmul.f32 %v1348, %v1352
      %1354 = vrot.lane.b32.xlu0 %v540, 72
      %v1355 = vpop.permute.xlu0 %1354
      %v1358 = vsel %vm547, %v1353, 0
      %1360 = vmatprep.subr.mxu0 0.0
      %1361 = vmatpush1.msra.mxu0 %v1355
      %1362 = vmatprep.subr.mxu0 0.0
      %1363 = vmatpush1.msra.mxu0 0.0
      %1364 = vmatprep.subr.mxu0 0.0
      %1365 = vmatpush1.msra.mxu0 0.0
      %1366 = vmatprep.subr.mxu0 0.0
      %1367 = vmatpush1.msra.mxu0 0.0
      %1368 = vmatprep.subr.mxu0 0.0
      %1369 = vmatpush1.msra.mxu0 0.0
      %1370 = vmatprep.subr.mxu0 0.0
      %1371 = vmatpush1.msra.mxu0 0.0
      %1372 = vmatprep.subr.mxu0 0.0
      %1373 = vmatpush1.msra.mxu0 0.0
      %1374 = vmatprep.subr.mxu0 0.0
      %1375 = vmatpush1.msra.mxu0 0.0
      %1376 = vmatprep.subr.mxu0 0.0
      %1377 = vmatpush1.msra.mxu0 0.0
      %1378 = vmatprep.subr.mxu0 0.0
      %1379 = vmatpush1.msra.mxu0 0.0
      %1380 = vmatprep.subr.mxu0 0.0
      %1381 = vmatpush1.msra.mxu0 0.0
      %1382 = vmatprep.subr.mxu0 0.0
      %1383 = vmatpush1.msra.mxu0 0.0
      %1384 = vmatprep.subr.mxu0 0.0
      %1385 = vmatpush1.msra.mxu0 0.0
      %1386 = vmatprep.subr.mxu0 0.0
      %1387 = vmatpush1.msra.mxu0 0.0
      %1388 = vmatprep.subr.mxu0 0.0
      %1389 = vmatpush1.msra.mxu0 0.0
      %1390 = vmatprep.subr.mxu0 0.0
      %1391 = vmatpush1.msra.mxu0 0.0
      %1392 = vmatprep.subr.mxu0 0.0
      %1393 = vmatpush1.msra.mxu0 0.0
      %1394 = vmatprep.subr.mxu0 0.0
      %1395 = vmatpush1.msra.mxu0 0.0
      %1396 = vmatprep.subr.mxu0 0.0
      %1397 = vmatpush1.msra.mxu0 0.0
      %1398 = vmatprep.subr.mxu0 0.0
      %1399 = vmatpush1.msra.mxu0 0.0
      %1400 = vmatprep.subr.mxu0 0.0
      %1401 = vmatpush1.msra.mxu0 0.0
      %1402 = vmatprep.subr.mxu0 0.0
      %1403 = vmatpush1.msra.mxu0 0.0
      %1404 = vmatprep.subr.mxu0 0.0
      %1405 = vmatpush1.msra.mxu0 0.0
      %1406 = vmatprep.subr.mxu0 0.0
      %1407 = vmatpush1.msra.mxu0 0.0
      %1408 = vmatprep.subr.mxu0 0.0
      %1409 = vmatpush1.msra.mxu0 0.0
      %1410 = vmatprep.subr.mxu0 0.0
      %1411 = vmatpush1.msra.mxu0 0.0
      %1412 = vmatprep.subr.mxu0 0.0
      %1413 = vmatpush1.msra.mxu0 0.0
      %1414 = vmatprep.subr.mxu0 0.0
      %1415 = vmatpush1.msra.mxu0 0.0
      %1416 = vmatprep.subr.mxu0 0.0
      %1417 = vmatpush1.msra.mxu0 0.0
      %1418 = vmatprep.subr.mxu0 0.0
      %1419 = vmatpush1.msra.mxu0 0.0
      %1420 = vmatprep.subr.mxu0 0.0
      %1421 = vmatpush1.msra.mxu0 0.0
      %1422 = vmatprep.subr.mxu0 0.0
      %1423 = vmatpush1.msra.mxu0 0.0
      %1424 = vmatprep.mubr.f32.mxu0 0.0
      %1425 = vmatmul.mubr.f32.gmra.mrb[0].mxu0 %v1358
      %v1426 = vpop.f32.mrb[0].mxu0
      %v1427 = vadd.f32 0.0, %v1426
      %v1428 = vpop.f32.mrb[0].mxu0
      %1429 = vdwg.mxu0
      %v1431 = vsel %vm547, %v1427, 0
      %1433 = vmatprep.subr.mxu0 0.0
      %1434 = vmatpush1.msra.mxu0 %v546
      %1435 = vmatprep.subr.mxu0 0.0
      %1436 = vmatpush1.msra.mxu0 0.0
      %1437 = vmatprep.subr.mxu0 0.0
      %1438 = vmatpush1.msra.mxu0 0.0
      %1439 = vmatprep.subr.mxu0 0.0
      %1440 = vmatpush1.msra.mxu0 0.0
      %1441 = vmatprep.subr.mxu0 0.0
      %1442 = vmatpush1.msra.mxu0 0.0
      %1443 = vmatprep.subr.mxu0 0.0
      %1444 = vmatpush1.msra.mxu0 0.0
      %1445 = vmatprep.subr.mxu0 0.0
      %1446 = vmatpush1.msra.mxu0 0.0
      %1447 = vmatprep.subr.mxu0 0.0
      %1448 = vmatpush1.msra.mxu0 0.0
      %1449 = vmatprep.subr.mxu0 0.0
      %1450 = vmatpush1.msra.mxu0 0.0
      %1451 = vmatprep.subr.mxu0 0.0
      %1452 = vmatpush1.msra.mxu0 0.0
      %1453 = vmatprep.subr.mxu0 0.0
      %1454 = vmatpush1.msra.mxu0 0.0
      %1455 = vmatprep.subr.mxu0 0.0
      %1456 = vmatpush1.msra.mxu0 0.0
      %1457 = vmatprep.subr.mxu0 0.0
      %1458 = vmatpush1.msra.mxu0 0.0
      %1459 = vmatprep.subr.mxu0 0.0
      %1460 = vmatpush1.msra.mxu0 0.0
      %1461 = vmatprep.subr.mxu0 0.0
      %1462 = vmatpush1.msra.mxu0 0.0
      %1463 = vmatprep.subr.mxu0 0.0
      %1464 = vmatpush1.msra.mxu0 0.0
      %1465 = vmatprep.subr.mxu0 0.0
      %1466 = vmatpush1.msra.mxu0 0.0
      %1467 = vmatprep.subr.mxu0 0.0
      %1468 = vmatpush1.msra.mxu0 0.0
      %1469 = vmatprep.subr.mxu0 0.0
      %1470 = vmatpush1.msra.mxu0 0.0
      %1471 = vmatprep.subr.mxu0 0.0
      %1472 = vmatpush1.msra.mxu0 0.0
      %1473 = vmatprep.subr.mxu0 0.0
      %1474 = vmatpush1.msra.mxu0 0.0
      %1475 = vmatprep.subr.mxu0 0.0
      %1476 = vmatpush1.msra.mxu0 0.0
      %1477 = vmatprep.subr.mxu0 0.0
      %1478 = vmatpush1.msra.mxu0 0.0
      %1479 = vmatprep.subr.mxu0 0.0
      %1480 = vmatpush1.msra.mxu0 0.0
      %1481 = vmatprep.subr.mxu0 0.0
      %1482 = vmatpush1.msra.mxu0 0.0
      %1483 = vmatprep.subr.mxu0 0.0
      %1484 = vmatpush1.msra.mxu0 0.0
      %1485 = vmatprep.subr.mxu0 0.0
      %1486 = vmatpush1.msra.mxu0 0.0
      %1487 = vmatprep.subr.mxu0 0.0
      %1488 = vmatpush1.msra.mxu0 0.0
      %1489 = vmatprep.subr.mxu0 0.0
      %1490 = vmatpush1.msra.mxu0 0.0
      %1491 = vmatprep.subr.mxu0 0.0
      %1492 = vmatpush1.msra.mxu0 0.0
      %1493 = vmatprep.subr.mxu0 0.0
      %1494 = vmatpush1.msra.mxu0 0.0
      %1495 = vmatprep.subr.mxu0 0.0
      %1496 = vmatpush1.msra.mxu0 0.0
      %1497 = vmatprep.mubr.f32.mxu0 0.0
      %1498 = vmatmul.mubr.f32.gmra.mrb[0].mxu0 %v1431
      %v1499 = vpop.f32.mrb[0].mxu0
      %v1500 = vadd.f32 0.0, %v1499
      %v1501 = vpop.f32.mrb[0].mxu0
      %1502 = vdwg.mxu0
      %v1503 = vadd.f32 %v1263, %v1500
      %v1504 = vadd.f32 %v372, %v1503
      %v1505 = vld [vmem:[%s7] sm:$0x1]
      %v1507 = vlaneseq
      %v1508 = vshrl.u32 %v1507, 7
      %v1509 = vsub.s32 0, %v1508
      %v1510 = vrot.slane %v1505, %v1509
      %v1512 = vadd.f32 %v1504, %v1510
      %v1513 = vld [vmem:[%s8] sm:$0x1]
      %v1514 = vld [vmem:[%s9] sm:$0x1]
      %v1515 = vsel %vm385, %v1512, 0.0
      %1516 = vadd.xlane.f32.xlu0 %v1515
      %v1517 = vpop.xlane.xlu0 %1516
      %v1518 = vrcp.pop 32.0
      %v1519 = vmul.f32 %v1517, %v1518
      %v1520 = vsub.f32 %v1512, %v1519
      %v1521 = vmul.f32 %v1520, %v1520
      %v1522 = vsel %vm385, %v1521, 0.0
      %1523 = vadd.xlane.f32.xlu0 %v1522
      %v1524 = vpop.xlane.xlu0 %1523
      %v1525 = vmul.f32 %v1524, %v1518
      %v1526 = vadd.f32 %v1525, 1e-05
      %v1527 = vrsqrt.pop %v1526
      %v1528 = vmul.f32 %v1520, %v1527
      %v1530 = vlaneseq
      %v1531 = vshrl.u32 %v1530, 7
      %v1532 = vsub.s32 0, %v1531
      %v1533 = vrot.slane %v1513, %v1532
      %v1535 = vmul.f32 %v1528, %v1533
      %v1537 = vlaneseq
      %v1538 = vshrl.u32 %v1537, 7
      %v1539 = vsub.s32 0, %v1538
      %v1540 = vrot.slane %v1514, %v1539
      %v1542 = vadd.f32 %v1535, %v1540
      %1543 = vst.msk [vmem:[%s371] sm:$0xff] %vm385, %v1542
      %p1544 = scmp.lt.s32.totalorder %s21, 1
      %s1545 = scalar_select %p1544, %s21, 1
      %s1546 = smul.addr %s1545, 8
      %s1547 = scalar_lea.vmem %s10, %s1546
      // Predicated region
      $region61: #{transformer_forward.17} parent=59 // pred_check
        %p1548 = pneg %p259
      $region62: #{transformer_forward.17} parent=59 // pred_check_branch
        %1550 = sbr.rel (%p1548) target = $region64
      $region63: #{transformer_forward.17} parent=59 // pred_region
        _
      $region64: #{transformer_forward.17} parent=59 // pred_fallthru
        _
    $region60: #{transformer_forward.17} parent=5 // pred_fallthru
      _
    %p1551 = scmp.le.s32.totalorder 2, %s16
    // Predicated region
    $region65: #{transformer_forward.17} parent=5 // pred_check
      %p1552 = pneg %p1551
    $region66: #{transformer_forward.17} parent=5 // pred_check_branch
      %1554 = sbr.rel (%p1552) target = $region68
    $region67: #{transformer_forward.17} parent=5 // pred_region
      %s1555 = ssub.s32 %s16, 2
      // Predicated region
      $region69: #{transformer_forward.17} parent=67 // pred_check
        %p1556 = pneg %p265
      $region70: #{transformer_forward.17} parent=67 // pred_check_branch
        %1558 = sbr.rel (%p1556) target = $region72
      $region71: #{transformer_forward.17} parent=67 // pred_region
        %p1559 = scmp.lt.s32.totalorder %s22, 1
        %s1560 = scalar_select %p1559, %s22, 1
        %s1561 = smul.addr %s1560, 8
        %s1562 = scalar_lea.vmem %s10, %s1561
      $region72: #{transformer_forward.17} parent=67 // pred_fallthru
        _
    $region68: #{transformer_forward.17} parent=5 // pred_fallthru
      _
  $region6: #{transformer_forward.17} parent=0 // loop_footer
    %s20 = sadd.s32 1, %s16
  $region7: #{transformer_forward.17} parent=0 // loop_footer_branch
    %15 = sbr.rel target = $region3
  $region8: #{transformer_forward.17} parent=0 // loop_exit
    _

// kernel: transformer_forward.24
$region0: #{transformer_forward.24}
  #allocation0 [shape = 'u32[]', space=smem, size = 0x4, offset = 0x4, fixed_abs, tag = 'smem constant byte address 0x4 - core index']
  #allocation1 [shape = 'u32[144,128]{1,0:T(1,128)}', space=vmem, size = 0x12000, scoped, tag = 'internal scratch']
  %s0 = inlined_call_operand.vmem [shape: f32[2,8,32], index: 0, kind: input, shape index: {}, may-alias: {0,1}]
  %s1 = inlined_call_operand.vmem [shape: f32[2,8,32], index: 1, kind: input, shape index: {}, may-alias: {0,1}]
  %s2 = inlined_call_operand.vmem [shape: f32[32,32], index: 2, kind: input, shape index: {}]
  %s3 = inlined_call_operand.vmem [shape: f32[1,32], index: 3, kind: input, shape index: {}]
  %s4 = inlined_call_operand.vmem [shape: f32[32,64], index: 4, kind: input, shape index: {}]
  %s5 = inlined_call_operand.vmem [shape: f32[1,64], index: 5, kind: input, shape index: {}]
  %s6 = inlined_call_operand.vmem [shape: f32[32,32], index: 6, kind: input, shape index: {}]
  %s7 = inlined_call_operand.vmem [shape: f32[1,32], index: 7, kind: input, shape index: {}]
  %s8 = inlined_call_operand.vmem [shape: f32[1,32], index: 8, kind: input, shape index: {}]
  %s9 = inlined_call_operand.vmem [shape: f32[1,32], index: 9, kind: input, shape index: {}]
  %s10 = inlined_call_operand.vmem [shape: f32[2,8,32], index: 10, kind: output, shape index: {}]
  %s11 = sld [smem:[#allocation0]]
  $region73: #{transformer_forward.24} parent=0
    _
  %s13 = ssub.s32 1, %s11
  %s14 = scalar_select 0, %s13, %s11
  loop: start=0, step=1, limit=4
  $region2: #{transformer_forward.24} parent=0 // loop_pre_header
    _
  $region3: #{transformer_forward.24} parent=0 // loop_header
    %s16 = sphi 0, %s20
    %p17 = scmp.ge.s32.totalorder %s16, 4
    %s26 = sphi 0, %s28
    %s29 = sphi 0, %s26
    %s30 = sphi 0, %s29
    %s46 = sphi 0, %s30
    %s52 = sphi 0, %s54
    %s55 = sphi 0, %s52
    %s56 = sphi 0, %s55
    %s72 = sphi 0, %s56
    %s76 = sphi 0, %s76
    %s78 = sphi 0, %s76
    %s79 = sphi 0, %s78
    %s93 = sphi 0, %s79
    %s97 = sphi 0, %s97
    %s99 = sphi 0, %s97
    %s100 = sphi 0, %s99
    %s114 = sphi 0, %s100
    %s118 = sphi 0, %s118
    %s120 = sphi 0, %s118
    %s121 = sphi 0, %s120
    %s135 = sphi 0, %s121
    %s139 = sphi 0, %s139
    %s141 = sphi 0, %s139
    %s142 = sphi 0, %s141
    %s156 = sphi 0, %s142
    %s160 = sphi 0, %s160
    %s162 = sphi 0, %s160
    %s163 = sphi 0, %s162
    %s177 = sphi 0, %s163
    %s181 = sphi 0, %s181
    %s183 = sphi 0, %s181
    %s184 = sphi 0, %s183
    %s198 = sphi 0, %s184
    %s202 = sphi 0, %s202
    %s204 = sphi 0, %s202
    %s205 = sphi 0, %s204
    %s219 = sphi 0, %s205
    %s223 = sphi 0, %s223
    %s225 = sphi 0, %s223
    %s226 = sphi 0, %s225
    %s240 = sphi 0, %s226
    %s246 = sphi 0, %s248
    %s249 = sphi 0, %s246
    %s250 = sphi 0, %s249
    %s266 = sphi 0, %s250
  $region4: #{transformer_forward.24} parent=0 // loop_header_branch
    %19 = sbr.rel (%p17) target = $region8
  $region5: #{transformer_forward.24} parent=0 // loop_body
    %s21 = ssub.s32 %s16, 1
    %s22 = ssub.s32 %s16, 2
    %s23 = sadd.s32 %s16, 1
    %s24 = ssub.s32 %s16, %s23
    %p25 = scmp.eq.s32.totalorder %s24, 0
    %s27 = sadd.s32 %s26, 1
    %s28 = scalar_select %p25, %s26, %s27
    %p31 = pneg %p25
    %p32 = scmp.eq.s32.totalorder %s16, 1
    %p33 = por %p31, %p32
    %p34 = scmp.ne.s32.totalorder %s26, %s29
    %p35 = scmp.eq.s32.totalorder %s16, 0
    %p36 = por %p34, %p35
    %p37 = scmp.ne.s32.totalorder %s26, %s29
    %p38 = scmp.eq.s32.totalorder %s21, 1
    %p39 = por %p37, %p38
    %p40 = scmp.ne.s32.totalorder %s29, %s30
    %p41 = scmp.eq.s32.totalorder %s21, 0
    %p42 = por %p40, %p41
    %p43 = scmp.ne.s32.totalorder %s29, %s30
    %p44 = scmp.eq.s32.totalorder %s22, 1
    %p45 = por %p43, %p44
    %p47 = scmp.ne.s32.totalorder %s30, %s46
    %p48 = scmp.eq.s32.totalorder %s22, 0
    %p49 = por %p47, %p48
    %s50 = ssub.s32 %s16, %s23
    %p51 = scmp.eq.s32.totalorder %s50, 0
    %s53 = sadd.s32 %s52, 1
    %s54 = scalar_select %p51, %s52, %s53
    %p57 = pneg %p51
    %p58 = scmp.eq.s32.totalorder %s16, 1
    %p59 = por %p57, %p58
    %p60 = scmp.ne.s32.totalorder %s52, %s55
    %p61 = scmp.eq.s32.totalorder %s16, 0
    %p62 = por %p60, %p61
    %p63 = scmp.ne.s32.totalorder %s52, %s55
    %p64 = scmp.eq.s32.totalorder %s21, 1
    %p65 = por %p63, %p64
    %p66 = scmp.ne.s32.totalorder %s55, %s56
    %p67 = scmp.eq.s32.totalorder %s21, 0
    %p68 = por %p66, %p67
    %p69 = scmp.ne.s32.totalorder %s55, %s56
    %p70 = scmp.eq.s32.totalorder %s22, 1
    %p71 = por %p69, %p70
    %p73 = scmp.ne.s32.totalorder %s56, %s72
    %p74 = scmp.eq.s32.totalorder %s22, 0
    %p75 = por %p73, %p74
    %s77 = sadd.s32 %s76, 1
    %p80 = scmp.eq.s32.totalorder %s16, 1
    %p81 = scmp.ne.s32.totalorder %s76, %s78
    %p82 = scmp.eq.s32.totalorder %s16, 0
    %p83 = por %p81, %p82
    %p84 = scmp.ne.s32.totalorder %s76, %s78
    %p85 = scmp.eq.s32.totalorder %s21, 1
    %p86 = por %p84, %p85
    %p87 = scmp.ne.s32.totalorder %s78, %s79
    %p88 = scmp.eq.s32.totalorder %s21, 0
    %p89 = por %p87, %p88
    %p90 = scmp.ne.s32.totalorder %s78, %s79
    %p91 = scmp.eq.s32.totalorder %s22, 1
    %p92 = por %p90, %p91
    %p94 = scmp.ne.s32.totalorder %s79, %s93
    %p95 = scmp.eq.s32.totalorder %s22, 0
    %p96 = por %p94, %p95
    %s98 = sadd.s32 %s97, 1
    %p101 = scmp.eq.s32.totalorder %s16, 1
    %p102 = scmp.ne.s32.totalorder %s97, %s99
    %p103 = scmp.eq.s32.totalorder %s16, 0
    %p104 = por %p102, %p103
    %p105 = scmp.ne.s32.totalorder %s97, %s99
    %p106 = scmp.eq.s32.totalorder %s21, 1
    %p107 = por %p105, %p106
    %p108 = scmp.ne.s32.totalorder %s99, %s100
    %p109 = scmp.eq.s32.totalorder %s21, 0
    %p110 = por %p108, %p109
    %p111 = scmp.ne.s32.totalorder %s99, %s100
    %p112 = scmp.eq.s32.totalorder %s22, 1
    %p113 = por %p111, %p112
    %p115 = scmp.ne.s32.totalorder %s100, %s114
    %p116 = scmp.eq.s32.totalorder %s22, 0
    %p117 = por %p115, %p116
    %s119 = sadd.s32 %s118, 1
    %p122 = scmp.eq.s32.totalorder %s16, 1
    %p123 = scmp.ne.s32.totalorder %s118, %s120
    %p124 = scmp.eq.s32.totalorder %s16, 0
    %p125 = por %p123, %p124
    %p126 = scmp.ne.s32.totalorder %s118, %s120
    %p127 = scmp.eq.s32.totalorder %s21, 1
    %p128 = por %p126, %p127
    %p129 = scmp.ne.s32.totalorder %s120, %s121
    %p130 = scmp.eq.s32.totalorder %s21, 0
    %p131 = por %p129, %p130
    %p132 = scmp.ne.s32.totalorder %s120, %s121
    %p133 = scmp.eq.s32.totalorder %s22, 1
    %p134 = por %p132, %p133
    %p136 = scmp.ne.s32.totalorder %s121, %s135
    %p137 = scmp.eq.s32.totalorder %s22, 0
    %p138 = por %p136, %p137
    %s140 = sadd.s32 %s139, 1
    %p143 = scmp.eq.s32.totalorder %s16, 1
    %p144 = scmp.ne.s32.totalorder %s139, %s141
    %p145 = scmp.eq.s32.totalorder %s16, 0
    %p146 = por %p144, %p145
    %p147 = scmp.ne.s32.totalorder %s139, %s141
    %p148 = scmp.eq.s32.totalorder %s21, 1
    %p149 = por %p147, %p148
    %p150 = scmp.ne.s32.totalorder %s141, %s142
    %p151 = scmp.eq.s32.totalorder %s21, 0
    %p152 = por %p150, %p151
    %p153 = scmp.ne.s32.totalorder %s141, %s142
    %p154 = scmp.eq.s32.totalorder %s22, 1
    %p155 = por %p153, %p154
    %p157 = scmp.ne.s32.totalorder %s142, %s156
    %p158 = scmp.eq.s32.totalorder %s22, 0
    %p159 = por %p157, %p158
    %s161 = sadd.s32 %s160, 1
    %p164 = scmp.eq.s32.totalorder %s16, 1
    %p165 = scmp.ne.s32.totalorder %s160, %s162
    %p166 = scmp.eq.s32.totalorder %s16, 0
    %p167 = por %p165, %p166
    %p168 = scmp.ne.s32.totalorder %s160, %s162
    %p169 = scmp.eq.s32.totalorder %s21, 1
    %p170 = por %p168, %p169
    %p171 = scmp.ne.s32.totalorder %s162, %s163
    %p172 = scmp.eq.s32.totalorder %s21, 0
    %p173 = por %p171, %p172
    %p174 = scmp.ne.s32.totalorder %s162, %s163
    %p175 = scmp.eq.s32.totalorder %s22, 1
    %p176 = por %p174, %p175
    %p178 = scmp.ne.s32.totalorder %s163, %s177
    %p179 = scmp.eq.s32.totalorder %s22, 0
    %p180 = por %p178, %p179
    %s182 = sadd.s32 %s181, 1
    %p185 = scmp.eq.s32.totalorder %s16, 1
    %p186 = scmp.ne.s32.totalorder %s181, %s183
    %p187 = scmp.eq.s32.totalorder %s16, 0
    %p188 = por %p186, %p187
    %p189 = scmp.ne.s32.totalorder %s181, %s183
    %p190 = scmp.eq.s32.totalorder %s21, 1
    %p191 = por %p189, %p190
    %p192 = scmp.ne.s32.totalorder %s183, %s184
    %p193 = scmp.eq.s32.totalorder %s21, 0
    %p194 = por %p192, %p193
    %p195 = scmp.ne.s32.totalorder %s183, %s184
    %p196 = scmp.eq.s32.totalorder %s22, 1
    %p197 = por %p195, %p196
    %p199 = scmp.ne.s32.totalorder %s184, %s198
    %p200 = scmp.eq.s32.totalorder %s22, 0
    %p201 = por %p199, %p200
    %s203 = sadd.s32 %s202, 1
    %p206 = scmp.eq.s32.totalorder %s16, 1
    %p207 = scmp.ne.s32.totalorder %s202, %s204
    %p208 = scmp.eq.s32.totalorder %s16, 0
    %p209 = por %p207, %p208
    %p210 = scmp.ne.s32.totalorder %s202, %s204
    %p211 = scmp.eq.s32.totalorder %s21, 1
    %p212 = por %p210, %p211
    %p213 = scmp.ne.s32.totalorder %s204, %s205
    %p214 = scmp.eq.s32.totalorder %s21, 0
    %p215 = por %p213, %p214
    %p216 = scmp.ne.s32.totalorder %s204, %s205
    %p217 = scmp.eq.s32.totalorder %s22, 1
    %p218 = por %p216, %p217
    %p220 = scmp.ne.s32.totalorder %s205, %s219
    %p221 = scmp.eq.s32.totalorder %s22, 0
    %p222 = por %p220, %p221
    %s224 = sadd.s32 %s223, 1
    %p227 = scmp.eq.s32.totalorder %s16, 1
    %p228 = scmp.ne.s32.totalorder %s223, %s225
    %p229 = scmp.eq.s32.totalorder %s16, 0
    %p230 = por %p228, %p229
    %p231 = scmp.ne.s32.totalorder %s223, %s225
    %p232 = scmp.eq.s32.totalorder %s21, 1
    %p233 = por %p231, %p232
    %p234 = scmp.ne.s32.totalorder %s225, %s226
    %p235 = scmp.eq.s32.totalorder %s21, 0
    %p236 = por %p234, %p235
    %p237 = scmp.ne.s32.totalorder %s225, %s226
    %p238 = scmp.eq.s32.totalorder %s22, 1
    %p239 = por %p237, %p238
    %p241 = scmp.ne.s32.totalorder %s226, %s240
    %p242 = scmp.eq.s32.totalorder %s22, 0
    %p243 = por %p241, %p242
    %s244 = ssub.s32 %s16, %s23
    %p245 = scmp.eq.s32.totalorder %s244, 0
    %s247 = sadd.s32 %s246, 1
    %s248 = scalar_select %p245, %s246, %s247
    %p251 = pneg %p245
    %p252 = scmp.eq.s32.totalorder %s16, 1
    %p253 = por %p251, %p252
    %p254 = scmp.ne.s32.totalorder %s246, %s249
    %p255 = scmp.eq.s32.totalorder %s16, 0
    %p256 = por %p254, %p255
    %p257 = scmp.ne.s32.totalorder %s246, %s249
    %p258 = scmp.eq.s32.totalorder %s21, 1
    %p259 = por %p257, %p258
    %p260 = scmp.ne.s32.totalorder %s249, %s250
    %p261 = scmp.eq.s32.totalorder %s21, 0
    %p262 = por %p260, %p261
    %p263 = scmp.ne.s32.totalorder %s249, %s250
    %p264 = scmp.eq.s32.totalorder %s22, 1
    %p265 = por %p263, %p264
    %p267 = scmp.ne.s32.totalorder %s250, %s266
    %p268 = scmp.eq.s32.totalorder %s22, 0
    %p269 = por %p267, %p268
    %p270 = scmp.le.s32.totalorder 1, %s16
    %p271 = scmp.lt.s32.totalorder %s16, 3
    %p272 = pnand %p270, %p271
    %p273 = pneg %p272
    // Predicated region
    $region9: #{transformer_forward.24} parent=5 // pred_check
      _
    $region10: #{transformer_forward.24} parent=5 // pred_check_branch
      %275 = sbr.rel (%p272) target = $region12
    $region11: #{transformer_forward.24} parent=5 // pred_region
      %s276 = ssub.s32 %s16, 1
      // Predicated region
      $region13: #{transformer_forward.24} parent=11 // pred_check
        %p277 = pneg %p89
      $region14: #{transformer_forward.24} parent=11 // pred_check_branch
        %279 = sbr.rel (%p277) target = $region16
      $region15: #{transformer_forward.24} parent=11 // pred_region
        _
      $region16: #{transformer_forward.24} parent=11 // pred_fallthru
        _
      // Predicated region
      $region17: #{transformer_forward.24} parent=11 // pred_check
        %p280 = pneg %p110
      $region18: #{transformer_forward.24} parent=11 // pred_check_branch
        %282 = sbr.rel (%p280) target = $region20
      $region19: #{transformer_forward.24} parent=11 // pred_region
        _
      $region20: #{transformer_forward.24} parent=11 // pred_fallthru
        _
      // Predicated region
      $region21: #{transformer_forward.24} parent=11 // pred_check
        %p283 = pneg %p131
      $region22: #{transformer_forward.24} parent=11 // pred_check_branch
        %285 = sbr.rel (%p283) target = $region24
      $region23: #{transformer_forward.24} parent=11 // pred_region
        _
      $region24: #{transformer_forward.24} parent=11 // pred_fallthru
        _
      // Predicated region
      $region25: #{transformer_forward.24} parent=11 // pred_check
        %p286 = pneg %p152
      $region26: #{transformer_forward.24} parent=11 // pred_check_branch
        %288 = sbr.rel (%p286) target = $region28
      $region27: #{transformer_forward.24} parent=11 // pred_region
        _
      $region28: #{transformer_forward.24} parent=11 // pred_fallthru
        _
      // Predicated region
      $region29: #{transformer_forward.24} parent=11 // pred_check
        %p289 = pneg %p173
      $region30: #{transformer_forward.24} parent=11 // pred_check_branch
        %291 = sbr.rel (%p289) target = $region32
      $region31: #{transformer_forward.24} parent=11 // pred_region
        _
      $region32: #{transformer_forward.24} parent=11 // pred_fallthru
        _
      // Predicated region
      $region33: #{transformer_forward.24} parent=11 // pred_check
        %p292 = pneg %p194
      $region34: #{transformer_forward.24} parent=11 // pred_check_branch
        %294 = sbr.rel (%p292) target = $region36
      $region35: #{transformer_forward.24} parent=11 // pred_region
        _
      $region36: #{transformer_forward.24} parent=11 // pred_fallthru
        _
      // Predicated region
      $region37: #{transformer_forward.24} parent=11 // pred_check
        %p295 = pneg %p215
      $region38: #{transformer_forward.24} parent=11 // pred_check_branch
        %297 = sbr.rel (%p295) target = $region40
      $region39: #{transformer_forward.24} parent=11 // pred_region
        _
      $region40: #{transformer_forward.24} parent=11 // pred_fallthru
        _
      // Predicated region
      $region41: #{transformer_forward.24} parent=11 // pred_check
        %p298 = pneg %p236
      $region42: #{transformer_forward.24} parent=11 // pred_check_branch
        %300 = sbr.rel (%p298) target = $region44
      $region43: #{transformer_forward.24} parent=11 // pred_region
        _
      $region44: #{transformer_forward.24} parent=11 // pred_fallthru
        _
    $region12: #{transformer_forward.24} parent=5 // pred_fallthru
      _
    %p301 = scmp.lt.s32.totalorder %s16, 2
    // Predicated region
    $region45: #{transformer_forward.24} parent=5 // pred_check
      %p302 = pneg %p301
    $region46: #{transformer_forward.24} parent=5 // pred_check_branch
      %304 = sbr.rel (%p302) target = $region48
    $region47: #{transformer_forward.24} parent=5 // pred_region
      // Predicated region
      $region49: #{transformer_forward.24} parent=47 // pred_check
        %p305 = pneg %p36
      $region50: #{transformer_forward.24} parent=47 // pred_check_branch
        %307 = sbr.rel (%p305) target = $region52
      $region51: #{transformer_forward.24} parent=47 // pred_region
        %p308 = scmp.lt.s32.totalorder %s16, 1
        %s309 = scalar_select %p308, %s16, 1
        %s310 = smul.addr %s309, 8
        %s311 = scalar_lea.vmem %s0, %s310
      $region52: #{transformer_forward.24} parent=47 // pred_fallthru
        _
      // Predicated region
      $region53: #{transformer_forward.24} parent=47 // pred_check
        %p312 = pneg %p62
      $region54: #{transformer_forward.24} parent=47 // pred_check_branch
        %314 = sbr.rel (%p312) target = $region56
      $region55: #{transformer_forward.24} parent=47 // pred_region
        %p315 = scmp.lt.s32.totalorder %s16, 1
        %s316 = scalar_select %p315, %s16, 1
        %s317 = smul.addr %s316, 8
        %s318 = scalar_lea.vmem %s1, %s317
      $region56: #{transformer_forward.24} parent=47 // pred_fallthru
        _
    $region48: #{transformer_forward.24} parent=5 // pred_fallthru
      _
    %p319 = scmp.le.s32.totalorder 1, %s16
    %p320 = scmp.lt.s32.totalorder %s16, 3
    %p321 = pnand %p319, %p320
    %p322 = pneg %p321
    // Predicated region
    $region57: #{transformer_forward.24} parent=5 // pred_check
      _
    $region58: #{transformer_forward.24} parent=5 // pred_check_branch
      %324 = sbr.rel (%p321) target = $region60
    $region59: #{transformer_forward.24} parent=5 // pred_region
      %s325 = ssub.s32 %s16, 1
      %p326 = scmp.lt.s32.totalorder %s21, 1
      %s327 = scalar_select %p326, %s21, 1
      %s328 = smul.addr %s327, 8
      %s329 = scalar_lea.vmem %s0, %s328
      %p330 = pneg %p42
      %p331 = pneg %p39
      %p332 = scmp.lt.s32.totalorder %s21, 1
      %s333 = scalar_select %p332, %s21, 1
      %s334 = smul.addr %s333, 8
      %s335 = scalar_lea.vmem %s1, %s334
      %p336 = pneg %p68
      %p337 = pneg %p65
      %p338 = pneg %p89
      %p339 = pneg %p86
      %p340 = pneg %p110
      %p341 = pneg %p107
      %p342 = pneg %p131
      %p343 = pneg %p128
      %p344 = pneg %p152
      %p345 = pneg %p149
      %p346 = pneg %p173
      %p347 = pneg %p170
      %p348 = pneg %p194
      %p349 = pneg %p191
      %p350 = pneg %p215
      %p351 = pneg %p212
      %p352 = pneg %p236
      %p353 = pneg %p233
      %p354 = pneg %p262
      %p355 = pneg %p259
      %p356 = scmp.lt.s32.totalorder %s21, 1
      %s357 = scalar_select %p356, %s21, 1
      %s358 = smul.addr %s357, 8
      %s359 = scalar_lea.vmem %s10, %s358
      %p360 = scmp.lt.s32.totalorder %s21, 1
      %s361 = scalar_select %p360, %s21, 1
      %s362 = smul.addr %s361, 8
      %s363 = scalar_lea.vmem %s0, %s362
      %p364 = scmp.lt.s32.totalorder %s21, 1
      %s365 = scalar_select %p364, %s21, 1
      %s366 = smul.addr %s365, 8
      %s367 = scalar_lea.vmem %s1, %s366
      %p368 = scmp.lt.s32.totalorder %s21, 1
      %s369 = scalar_select %p368, %s21, 1
      %s370 = smul.addr %s369, 8
      %s371 = scalar_lea.vmem %s10, %s370
      %v372 = vld [vmem:[%s363] sm:$0xff]
      %v373 = vld [vmem:[%s367] sm:$0xff]
      %v374 = vld [vmem:[%s2] sm:$0xff]
      %v375 = vld [vmem:[%s2 + $0x8] sm:$0xff]
      %v376 = vld [vmem:[%s2 + $0x10] sm:$0xff]
      %v377 = vld [vmem:[%s2 + $0x18] sm:$0xff]
      %v378 = vld [vmem:[%s3] sm:$0x1]
      %v380 = vlaneseq
      %v381 = vshrl.u32 %v380, 7
      %v382 = vsub.s32 0, %v381
      %v383 = vrot.slane %v378, %v382
      %vm385 = vcmask 261120
      %v387 = vsel %vm385, %v372, 0
      %389 = vmatprep.subr.mxu0 0.0
      %390 = vmatpush1.msra.mxu0 %v374
      %391 = vmatprep.subr.mxu0 0.0
      %392 = vmatpush1.msra.mxu0 %v375
      %393 = vmatprep.subr.mxu0 0.0
      %394 = vmatpush1.msra.mxu0 %v376
      %395 = vmatprep.subr.mxu0 0.0
      %396 = vmatpush1.msra.mxu0 %v377
      %397 = vmatprep.subr.mxu0 0.0
      %398 = vmatpush1.msra.mxu0 0.0
      %399 = vmatprep.subr.mxu0 0.0
      %400 = vmatpush1.msra.mxu0 0.0
      %401 = vmatprep.subr.mxu0 0.0
      %402 = vmatpush1.msra.mxu0 0.0
      %403 = vmatprep.subr.mxu0 0.0
      %404 = vmatpush1.msra.mxu0 0.0
      %405 = vmatprep.subr.mxu0 0.0
      %406 = vmatpush1.msra.mxu0 0.0
      %407 = vmatprep.subr.mxu0 0.0
      %408 = vmatpush1.msra.mxu0 0.0
      %409 = vmatprep.subr.mxu0 0.0
      %410 = vmatpush1.msra.mxu0 0.0
      %411 = vmatprep.subr.mxu0 0.0
      %412 = vmatpush1.msra.mxu0 0.0
      %413 = vmatprep.subr.mxu0 0.0
      %414 = vmatpush1.msra.mxu0 0.0
      %415 = vmatprep.subr.mxu0 0.0
      %416 = vmatpush1.msra.mxu0 0.0
      %417 = vmatprep.subr.mxu0 0.0
      %418 = vmatpush1.msra.mxu0 0.0
      %419 = vmatprep.subr.mxu0 0.0
      %420 = vmatpush1.msra.mxu0 0.0
      %421 = vmatprep.subr.mxu0 0.0
      %422 = vmatpush1.msra.mxu0 0.0
      %423 = vmatprep.subr.mxu0 0.0
      %424 = vmatpush1.msra.mxu0 0.0
      %425 = vmatprep.subr.mxu0 0.0
      %426 = vmatpush1.msra.mxu0 0.0
      %427 = vmatprep.subr.mxu0 0.0
      %428 = vmatpush1.msra.mxu0 0.0
      %429 = vmatprep.subr.mxu0 0.0
      %430 = vmatpush1.msra.mxu0 0.0
      %431 = vmatprep.subr.mxu0 0.0
      %432 = vmatpush1.msra.mxu0 0.0
      %433 = vmatprep.subr.mxu0 0.0
      %434 = vmatpush1.msra.mxu0 0.0
      %435 = vmatprep.subr.mxu0 0.0
      %436 = vmatpush1.msra.mxu0 0.0
      %437 = vmatprep.subr.mxu0 0.0
      %438 = vmatpush1.msra.mxu0 0.0
      %439 = vmatprep.subr.mxu0 0.0
      %440 = vmatpush1.msra.mxu0 0.0
      %441 = vmatprep.subr.mxu0 0.0
      %442 = vmatpush1.msra.mxu0 0.0
      %443 = vmatprep.subr.mxu0 0.0
      %444 = vmatpush1.msra.mxu0 0.0
      %445 = vmatprep.subr.mxu0 0.0
      %446 = vmatpush1.msra.mxu0 0.0
      %447 = vmatprep.subr.mxu0 0.0
      %448 = vmatpush1.msra.mxu0 0.0
      %449 = vmatprep.subr.mxu0 0.0
      %450 = vmatpush1.msra.mxu0 0.0
      %451 = vmatprep.subr.mxu0 0.0
      %452 = vmatpush1.msra.mxu0 0.0
      %453 = vmatprep.mubr.f32.mxu0 0.0
      %454 = vmatmul.mubr.f32.gmra.mrb[0].mxu0 %v387
      %v455 = vpop.f32.mrb[0].mxu0
      %v456 = vadd.f32 %v383, %v455
      %v457 = vpop.f32.mrb[0].mxu0
      %458 = vdwg.mxu0
      %v459 = vld [vmem:[%s4] sm:$0xff]
      %v460 = vld [vmem:[%s4 + $0x8] sm:$0xff]
      %v461 = vld [vmem:[%s4 + $0x10] sm:$0xff]
      %v462 = vld [vmem:[%s4 + $0x18] sm:$0xff]
      %v463 = vld [vmem:[%s5] sm:$0x1]
      %v465 = vlaneseq
      %v466 = vshrl.u32 %v465, 7
      %v467 = vsub.s32 0, %v466
      %v468 = vrot.slane %v463, %v467
      %v471 = vsel %vm385, %v373, 0
      %473 = vmatprep.subr.mxu0 0.0
      %474 = vmatpush1.msra.mxu0 %v459
      %475 = vmatprep.subr.mxu0 0.0
      %476 = vmatpush1.msra.mxu0 %v460
      %477 = vmatprep.subr.mxu0 0.0
      %478 = vmatpush1.msra.mxu0 %v461
      %479 = vmatprep.subr.mxu0 0.0
      %480 = vmatpush1.msra.mxu0 %v462
      %481 = vmatprep.subr.mxu0 0.0
      %482 = vmatpush1.msra.mxu0 0.0
      %483 = vmatprep.subr.mxu0 0.0
      %484 = vmatpush1.msra.mxu0 0.0
      %485 = vmatprep.subr.mxu0 0.0
      %486 = vmatpush1.msra.mxu0 0.0
      %487 = vmatprep.subr.mxu0 0.0
      %488 = vmatpush1.msra.mxu0 0.0
      %489 = vmatprep.subr.mxu0 0.0
      %490 = vmatpush1.msra.mxu0 0.0
      %491 = vmatprep.subr.mxu0 0.0
      %492 = vmatpush1.msra.mxu0 0.0
      %493 = vmatprep.subr.mxu0 0.0
      %494 = vmatpush1.msra.mxu0 0.0
      %495 = vmatprep.subr.mxu0 0.0
      %496 = vmatpush1.msra.mxu0 0.0
      %497 = vmatprep.subr.mxu0 0.0
      %498 = vmatpush1.msra.mxu0 0.0
      %499 = vmatprep.subr.mxu0 0.0
      %500 = vmatpush1.msra.mxu0 0.0
      %501 = vmatprep.subr.mxu0 0.0
      %502 = vmatpush1.msra.mxu0 0.0
      %503 = vmatprep.subr.mxu0 0.0
      %504 = vmatpush1.msra.mxu0 0.0
      %505 = vmatprep.subr.mxu0 0.0
      %506 = vmatpush1.msra.mxu0 0.0
      %507 = vmatprep.subr.mxu0 0.0
      %508 = vmatpush1.msra.mxu0 0.0
      %509 = vmatprep.subr.mxu0 0.0
      %510 = vmatpush1.msra.mxu0 0.0
      %511 = vmatprep.subr.mxu0 0.0
      %512 = vmatpush1.msra.mxu0 0.0
      %513 = vmatprep.subr.mxu0 0.0
      %514 = vmatpush1.msra.mxu0 0.0
      %515 = vmatprep.subr.mxu0 0.0
      %516 = vmatpush1.msra.mxu0 0.0
      %517 = vmatprep.subr.mxu0 0.0
      %518 = vmatpush1.msra.mxu0 0.0
      %519 = vmatprep.subr.mxu0 0.0
      %520 = vmatpush1.msra.mxu0 0.0
      %521 = vmatprep.subr.mxu0 0.0
      %522 = vmatpush1.msra.mxu0 0.0
      %523 = vmatprep.subr.mxu0 0.0
      %524 = vmatpush1.msra.mxu0 0.0
      %525 = vmatprep.subr.mxu0 0.0
      %526 = vmatpush1.msra.mxu0 0.0
      %527 = vmatprep.subr.mxu0 0.0
      %528 = vmatpush1.msra.mxu0 0.0
      %529 = vmatprep.subr.mxu0 0.0
      %530 = vmatpush1.msra.mxu0 0.0
      %531 = vmatprep.subr.mxu0 0.0
      %532 = vmatpush1.msra.mxu0 0.0
      %533 = vmatprep.subr.mxu0 0.0
      %534 = vmatpush1.msra.mxu0 0.0
      %535 = vmatprep.subr.mxu0 0.0
      %536 = vmatpush1.msra.mxu0 0.0
      %537 = vmatprep.mubr.f32.mxu0 0.0
      %538 = vmatmul.mubr.f32.gmra.mrb[0].mxu0 %v471
      %v539 = vpop.f32.mrb[0].mxu0
      %v540 = vadd.f32 %v468, %v539
      %v541 = vpop.f32.mrb[0].mxu0
      %542 = vdwg.mxu0
      %v543 = vld [vmem:[%s6] sm:$0xff]
      %v544 = vld [vmem:[%s6 + $0x8] sm:$0xff]
      %v545 = vld [vmem:[%s6 + $0x10] sm:$0xff]
      %v546 = vld [vmem:[%s6 + $0x18] sm:$0xff]
      %v547 = vlaneseq
      %v548 = vshrl.u32 %v547, 7
      %v549 = vlaneseq
      %v550 = vand.u32 %v549, 127
      %vm551 = vcmp.le.s32.totalorder %v550, %v548
      %vm552 = vcmask 64512
      %v554 = vsel %vm552, %v456, 0
      %v557 = vsel %vm552, %v540, 0
      %559 = vmatprep.subr.mxu0 0.0
      %560 = vmatpush1.xpose.msra.mxu0 %v557
      %561 = vmatprep.subr.mxu0 0.0
      %562 = vmatpush1.xpose.msra.mxu0 0.0
      %563 = vmatprep.subr.mxu0 0.0
      %564 = vmatpush1.xpose.msra.mxu0 0.0
      %565 = vmatprep.subr.mxu0 0.0
      %566 = vmatpush1.xpose.msra.mxu0 0.0
      %567 = vmatprep.subr.mxu0 0.0
      %568 = vmatpush1.xpose.msra.mxu0 0.0
      %569 = vmatprep.subr.mxu0 0.0
      %570 = vmatpush1.xpose.msra.mxu0 0.0
      %571 = vmatprep.subr.mxu0 0.0
      %572 = vmatpush1.xpose.msra.mxu0 0.0
      %573 = vmatprep.subr.mxu0 0.0
      %574 = vmatpush1.xpose.msra.mxu0 0.0
      %575 = vmatprep.subr.mxu0 0.0
      %576 = vmatpush1.xpose.msra.mxu0 0.0
      %577 = vmatprep.subr.mxu0 0.0
      %578 = vmatpush1.xpose.msra.mxu0 0.0
      %579 = vmatprep.subr.mxu0 0.0
      %580 = vmatpush1.xpose.msra.mxu0 0.0
      %581 = vmatprep.subr.mxu0 0.0
      %582 = vmatpush1.xpose.msra.mxu0 0.0
      %583 = vmatprep.subr.mxu0 0.0
      %584 = vmatpush1.xpose.msra.mxu0 0.0
      %585 = vmatprep.subr.mxu0 0.0
      %586 = vmatpush1.xpose.msra.mxu0 0.0
      %587 = vmatprep.subr.mxu0 0.0
      %588 = vmatpush1.xpose.msra.mxu0 0.0
      %589 = vmatprep.subr.mxu0 0.0
      %590 = vmatpush1.xpose.msra.mxu0 0.0
      %591 = vmatprep.subr.mxu0 0.0
      %592 = vmatpush1.xpose.msra.mxu0 0.0
      %593 = vmatprep.subr.mxu0 0.0
      %594 = vmatpush1.xpose.msra.mxu0 0.0
      %595 = vmatprep.subr.mxu0 0.0
      %596 = vmatpush1.xpose.msra.mxu0 0.0
      %597 = vmatprep.subr.mxu0 0.0
      %598 = vmatpush1.xpose.msra.mxu0 0.0
      %599 = vmatprep.subr.mxu0 0.0
      %600 = vmatpush1.xpose.msra.mxu0 0.0
      %601 = vmatprep.subr.mxu0 0.0
      %602 = vmatpush1.xpose.msra.mxu0 0.0
      %603 = vmatprep.subr.mxu0 0.0
      %604 = vmatpush1.xpose.msra.mxu0 0.0
      %605 = vmatprep.subr.mxu0 0.0
      %606 = vmatpush1.xpose.msra.mxu0 0.0
      %607 = vmatprep.subr.mxu0 0.0
      %608 = vmatpush1.xpose.msra.mxu0 0.0
      %609 = vmatprep.subr.mxu0 0.0
      %610 = vmatpush1.xpose.msra.mxu0 0.0
      %611 = vmatprep.subr.mxu0 0.0
      %612 = vmatpush1.xpose.msra.mxu0 0.0
      %613 = vmatprep.subr.mxu0 0.0
      %614 = vmatpush1.xpose.msra.mxu0 0.0
      %615 = vmatprep.subr.mxu0 0.0
      %616 = vmatpush1.xpose.msra.mxu0 0.0
      %617 = vmatprep.subr.mxu0 0.0
      %618 = vmatpush1.xpose.msra.mxu0 0.0
      %619 = vmatprep.subr.mxu0 0.0
      %620 = vmatpush1.xpose.msra.mxu0 0.0
      %621 = vmatprep.subr.mxu0 0.0
      %622 = vmatpush1.xpose.msra.mxu0 0.0
      %623 = vmatprep.mubr.f32.mxu0 0.0
      %624 = vmatmul.mubr.f32.gmra.mrb[0].mxu0 %v554
      %v625 = vpop.f32.mrb[0].mxu0
      %v626 = vadd.f32 0.0, %v625
      %v627 = vpop.f32.mrb[0].mxu0
      %628 = vdwg.mxu0
      %v629 = vmul.f32 %v626, 0.35355338
      %v630 = vsel %vm551, %v629, -inf
      %v631 = vsel %vm552, %v630, -inf
      %632 = vmax.xlane.f32.xlu0 %v631
      %v633 = vpop.xlane.xlu0 %632
      %v634 = vsub.f32 %v630, %v633
      %v635 = vmul.f32 %v634, 1.442695
      %v636 = vpow.pop %v635
      %v637 = vsel %vm552, %v636, 0.0
      %638 = vadd.xlane.f32.xlu0 %v637
      %v639 = vpop.xlane.xlu0 %638
      %v640 = vrcp.pop %v639
      %v641 = vmul.f32 %v636, %v640
      %642 = vrot.lane.b32.xlu0 %v540, 96
      %v643 = vpop.permute.xlu0 %642
      %v646 = vsel %vm552, %v641, 0
      %648 = vmatprep.subr.mxu0 0.0
      %649 = vmatpush1.msra.mxu0 %v643
      %650 = vmatprep.subr.mxu0 0.0
      %651 = vmatpush1.msra.mxu0 0.0
      %652 = vmatprep.subr.mxu0 0.0
      %653 = vmatpush1.msra.mxu0 0.0
      %654 = vmatprep.subr.mxu0 0.0
      %655 = vmatpush1.msra.mxu0 0.0
      %656 = vmatprep.subr.mxu0 0.0
      %657 = vmatpush1.msra.mxu0 0.0
      %658 = vmatprep.subr.mxu0 0.0
      %659 = vmatpush1.msra.mxu0 0.0
      %660 = vmatprep.subr.mxu0 0.0
      %661 = vmatpush1.msra.mxu0 0.0
      %662 = vmatprep.subr.mxu0 0.0
      %663 = vmatpush1.msra.mxu0 0.0
      %664 = vmatprep.subr.mxu0 0.0
      %665 = vmatpush1.msra.mxu0 0.0
      %666 = vmatprep.subr.mxu0 0.0
      %667 = vmatpush1.msra.mxu0 0.0
      %668 = vmatprep.subr.mxu0 0.0
      %669 = vmatpush1.msra.mxu0 0.0
      %670 = vmatprep.subr.mxu0 0.0
      %671 = vmatpush1.msra.mxu0 0.0
      %672 = vmatprep.subr.mxu0 0.0
      %673 = vmatpush1.msra.mxu0 0.0
      %674 = vmatprep.subr.mxu0 0.0
      %675 = vmatpush1.msra.mxu0 0.0
      %676 = vmatprep.subr.mxu0 0.0
      %677 = vmatpush1.msra.mxu0 0.0
      %678 = vmatprep.subr.mxu0 0.0
      %679 = vmatpush1.msra.mxu0 0.0
      %680 = vmatprep.subr.mxu0 0.0
      %681 = vmatpush1.msra.mxu0 0.0
      %682 = vmatprep.subr.mxu0 0.0
      %683 = vmatpush1.msra.mxu0 0.0
      %684 = vmatprep.subr.mxu0 0.0
      %685 = vmatpush1.msra.mxu0 0.0
      %686 = vmatprep.subr.mxu0 0.0
      %687 = vmatpush1.msra.mxu0 0.0
      %688 = vmatprep.subr.mxu0 0.0
      %689 = vmatpush1.msra.mxu0 0.0
      %690 = vmatprep.subr.mxu0 0.0
      %691 = vmatpush1.msra.mxu0 0.0
      %692 = vmatprep.subr.mxu0 0.0
      %693 = vmatpush1.msra.mxu0 0.0
      %694 = vmatprep.subr.mxu0 0.0
      %695 = vmatpush1.msra.mxu0 0.0
      %696 = vmatprep.subr.mxu0 0.0
      %697 = vmatpush1.msra.mxu0 0.0
      %698 = vmatprep.subr.mxu0 0.0
      %699 = vmatpush1.msra.mxu0 0.0
      %700 = vmatprep.subr.mxu0 0.0
      %701 = vmatpush1.msra.mxu0 0.0
      %702 = vmatprep.subr.mxu0 0.0
      %703 = vmatpush1.msra.mxu0 0.0
      %704 = vmatprep.subr.mxu0 0.0
      %705 = vmatpush1.msra.mxu0 0.0
      %706 = vmatprep.subr.mxu0 0.0
      %707 = vmatpush1.msra.mxu0 0.0
      %708 = vmatprep.subr.mxu0 0.0
      %709 = vmatpush1.msra.mxu0 0.0
      %710 = vmatprep.subr.mxu0 0.0
      %711 = vmatpush1.msra.mxu0 0.0
      %712 = vmatprep.mubr.f32.mxu0 0.0
      %713 = vmatmul.mubr.f32.gmra.mrb[0].mxu0 %v646
      %v714 = vpop.f32.mrb[0].mxu0
      %v715 = vadd.f32 0.0, %v714
      %v716 = vpop.f32.mrb[0].mxu0
      %717 = vdwg.mxu0
      %718 = vrot.lane.b32.xlu0 %v456, 120
      %v719 = vpop.permute.xlu0 %718
      %720 = vrot.lane.b32.xlu0 %v540, 120
      %v721 = vpop.permute.xlu0 %720
      %v722 = vsel %vm552, %v719, 0
      %v724 = vsel %vm552, %v721, 0
      %726 = vmatprep.subr.mxu0 0.0
      %727 = vmatpush1.xpose.msra.mxu0 %v724
      %728 = vmatprep.subr.mxu0 0.0
      %729 = vmatpush1.xpose.msra.mxu0 0.0
      %730 = vmatprep.subr.mxu0 0.0
      %731 = vmatpush1.xpose.msra.mxu0 0.0
      %732 = vmatprep.subr.mxu0 0.0
      %733 = vmatpush1.xpose.msra.mxu0 0.0
      %734 = vmatprep.subr.mxu0 0.0
      %735 = vmatpush1.xpose.msra.mxu0 0.0
      %736 = vmatprep.subr.mxu0 0.0
      %737 = vmatpush1.xpose.msra.mxu0 0.0
      %738 = vmatprep.subr.mxu0 0.0
      %739 = vmatpush1.xpose.msra.mxu0 0.0
      %740 = vmatprep.subr.mxu0 0.0
      %741 = vmatpush1.xpose.msra.mxu0 0.0
      %742 = vmatprep.subr.mxu0 0.0
      %743 = vmatpush1.xpose.msra.mxu0 0.0
      %744 = vmatprep.subr.mxu0 0.0
      %745 = vmatpush1.xpose.msra.mxu0 0.0
      %746 = vmatprep.subr.mxu0 0.0
      %747 = vmatpush1.xpose.msra.mxu0 0.0
      %748 = vmatprep.subr.mxu0 0.0
      %749 = vmatpush1.xpose.msra.mxu0 0.0
      %750 = vmatprep.subr.mxu0 0.0
      %751 = vmatpush1.xpose.msra.mxu0 0.0
      %752 = vmatprep.subr.mxu0 0.0
      %753 = vmatpush1.xpose.msra.mxu0 0.0
      %754 = vmatprep.subr.mxu0 0.0
      %755 = vmatpush1.xpose.msra.mxu0 0.0
      %756 = vmatprep.subr.mxu0 0.0
      %757 = vmatpush1.xpose.msra.mxu0 0.0
      %758 = vmatprep.subr.mxu0 0.0
      %759 = vmatpush1.xpose.msra.mxu0 0.0
      %760 = vmatprep.subr.mxu0 0.0
      %761 = vmatpush1.xpose.msra.mxu0 0.0
      %762 = vmatprep.subr.mxu0 0.0
      %763 = vmatpush1.xpose.msra.mxu0 0.0
      %764 = vmatprep.subr.mxu0 0.0
      %765 = vmatpush1.xpose.msra.mxu0 0.0
      %766 = vmatprep.subr.mxu0 0.0
      %767 = vmatpush1.xpose.msra.mxu0 0.0
      %768 = vmatprep.subr.mxu0 0.0
      %769 = vmatpush1.xpose.msra.mxu0 0.0
      %770 = vmatprep.subr.mxu0 0.0
      %771 = vmatpush1.xpose.msra.mxu0 0.0
      %772 = vmatprep.subr.mxu0 0.0
      %773 = vmatpush1.xpose.msra.mxu0 0.0
      %774 = vmatprep.subr.mxu0 0.0
      %775 = vmatpush1.xpose.msra.mxu0 0.0
      %776 = vmatprep.subr.mxu0 0.0
      %777 = vmatpush1.xpose.msra.mxu0 0.0
      %778 = vmatprep.subr.mxu0 0.0
      %779 = vmatpush1.xpose.msra.mxu0 0.0
      %780 = vmatprep.subr.mxu0 0.0
      %781 = vmatpush1.xpose.msra.mxu0 0.0
      %782 = vmatprep.subr.mxu0 0.0
      %783 = vmatpush1.xpose.msra.mxu0 0.0
      %784 = vmatprep.subr.mxu0 0.0
      %785 = vmatpush1.xpose.msra.mxu0 0.0
      %786 = vmatprep.subr.mxu0 0.0
      %787 = vmatpush1.xpose.msra.mxu0 0.0
      %788 = vmatprep.subr.mxu0 0.0
      %789 = vmatpush1.xpose.msra.mxu0 0.0
      %790 = vmatprep.mubr.f32.mxu0 0.0
      %791 = vmatmul.mubr.f32.gmra.mrb[0].mxu0 %v722
      %v792 = vpop.f32.mrb[0].mxu0
      %v793 = vadd.f32 0.0, %v792
      %v794 = vpop.f32.mrb[0].mxu0
      %795 = vdwg.mxu0
      %v796 = vmul.f32 %v793, 0.35355338
      %v797 = vsel %vm551, %v796, -inf
      %v798 = vsel %vm552, %v797, -inf
      %799 = vmax.xlane.f32.xlu0 %v798
      %v800 = vpop.xlane.xlu0 %799
      %v801 = vsub.f32 %v797, %v800
      %v802 = vmul.f32 %v801, 1.442695
      %v803 = vpow.pop %v802
      %v804 = vsel %vm552, %v803, 0.0
      %805 = vadd.xlane.f32.xlu0 %v804
      %v806 = vpop.xlane.xlu0 %805
      %v807 = vrcp.pop %v806
      %v808 = vmul.f32 %v803, %v807
      %809 = vrot.lane.b32.xlu0 %v540, 88
      %v810 = vpop.permute.xlu0 %809
      %v813 = vsel %vm552, %v808, 0
      %815 = vmatprep.subr.mxu0 0.0
      %816 = vmatpush1.msra.mxu0 %v810
      %817 = vmatprep.subr.mxu0 0.0
      %818 = vmatpush1.msra.mxu0 0.0
      %819 = vmatprep.subr.mxu0 0.0
      %820 = vmatpush1.msra.mxu0 0.0
      %821 = vmatprep.subr.mxu0 0.0
      %822 = vmatpush1.msra.mxu0 0.0
      %823 = vmatprep.subr.mxu0 0.0
      %824 = vmatpush1.msra.mxu0 0.0
      %825 = vmatprep.subr.mxu0 0.0
      %826 = vmatpush1.msra.mxu0 0.0
      %827 = vmatprep.subr.mxu0 0.0
      %828 = vmatpush1.msra.mxu0 0.0
      %829 = vmatprep.subr.mxu0 0.0
      %830 = vmatpush1.msra.mxu0 0.0
      %831 = vmatprep.subr.mxu0 0.0
      %832 = vmatpush1.msra.mxu0 0.0
      %833 = vmatprep.subr.mxu0 0.0
      %834 = vmatpush1.msra.mxu0 0.0
      %835 = vmatprep.subr.mxu0 0.0
      %836 = vmatpush1.msra.mxu0 0.0
      %837 = vmatprep.subr.mxu0 0.0
      %838 = vmatpush1.msra.mxu0 0.0
      %839 = vmatprep.subr.mxu0 0.0
      %840 = vmatpush1.msra.mxu0 0.0
      %841 = vmatprep.subr.mxu0 0.0
      %842 = vmatpush1.msra.mxu0 0.0
      %843 = vmatprep.subr.mxu0 0.0
      %844 = vmatpush1.msra.mxu0 0.0
      %845 = vmatprep.subr.mxu0 0.0
      %846 = vmatpush1.msra.mxu0 0.0
      %847 = vmatprep.subr.mxu0 0.0
      %848 = vmatpush1.msra.mxu0 0.0
      %849 = vmatprep.subr.mxu0 0.0
      %850 = vmatpush1.msra.mxu0 0.0
      %851 = vmatprep.subr.mxu0 0.0
      %852 = vmatpush1.msra.mxu0 0.0
      %853 = vmatprep.subr.mxu0 0.0
      %854 = vmatpush1.msra.mxu0 0.0
      %855 = vmatprep.subr.mxu0 0.0
      %856 = vmatpush1.msra.mxu0 0.0
      %857 = vmatprep.subr.mxu0 0.0
      %858 = vmatpush1.msra.mxu0 0.0
      %859 = vmatprep.subr.mxu0 0.0
      %860 = vmatpush1.msra.mxu0 0.0
      %861 = vmatprep.subr.mxu0 0.0
      %862 = vmatpush1.msra.mxu0 0.0
      %863 = vmatprep.subr.mxu0 0.0
      %864 = vmatpush1.msra.mxu0 0.0
      %865 = vmatprep.subr.mxu0 0.0
      %866 = vmatpush1.msra.mxu0 0.0
      %867 = vmatprep.subr.mxu0 0.0
      %868 = vmatpush1.msra.mxu0 0.0
      %869 = vmatprep.subr.mxu0 0.0
      %870 = vmatpush1.msra.mxu0 0.0
      %871 = vmatprep.subr.mxu0 0.0
      %872 = vmatpush1.msra.mxu0 0.0
      %873 = vmatprep.subr.mxu0 0.0
      %874 = vmatpush1.msra.mxu0 0.0
      %875 = vmatprep.subr.mxu0 0.0
      %876 = vmatpush1.msra.mxu0 0.0
      %877 = vmatprep.subr.mxu0 0.0
      %878 = vmatpush1.msra.mxu0 0.0
      %879 = vmatprep.mubr.f32.mxu0 0.0
      %880 = vmatmul.mubr.f32.gmra.mrb[0].mxu0 %v813
      %v881 = vpop.f32.mrb[0].mxu0
      %v882 = vadd.f32 0.0, %v881
      %v883 = vpop.f32.mrb[0].mxu0
      %884 = vdwg.mxu0
      %v886 = vsel %vm552, %v882, 0
      %888 = vmatprep.subr.mxu0 0.0
      %889 = vmatpush1.msra.mxu0 %v544
      %890 = vmatprep.subr.mxu0 0.0
      %891 = vmatpush1.msra.mxu0 0.0
      %892 = vmatprep.subr.mxu0 0.0
      %893 = vmatpush1.msra.mxu0 0.0
      %894 = vmatprep.subr.mxu0 0.0
      %895 = vmatpush1.msra.mxu0 0.0
      %896 = vmatprep.subr.mxu0 0.0
      %897 = vmatpush1.msra.mxu0 0.0
      %898 = vmatprep.subr.mxu0 0.0
      %899 = vmatpush1.msra.mxu0 0.0
      %900 = vmatprep.subr.mxu0 0.0
      %901 = vmatpush1.msra.mxu0 0.0
      %902 = vmatprep.subr.mxu0 0.0
      %903 = vmatpush1.msra.mxu0 0.0
      %904 = vmatprep.subr.mxu0 0.0
      %905 = vmatpush1.msra.mxu0 0.0
      %906 = vmatprep.subr.mxu0 0.0
      %907 = vmatpush1.msra.mxu0 0.0
      %908 = vmatprep.subr.mxu0 0.0
      %909 = vmatpush1.msra.mxu0 0.0
      %910 = vmatprep.subr.mxu0 0.0
      %911 = vmatpush1.msra.mxu0 0.0
      %912 = vmatprep.subr.mxu0 0.0
      %913 = vmatpush1.msra.mxu0 0.0
      %914 = vmatprep.subr.mxu0 0.0
      %915 = vmatpush1.msra.mxu0 0.0
      %916 = vmatprep.subr.mxu0 0.0
      %917 = vmatpush1.msra.mxu0 0.0
      %918 = vmatprep.subr.mxu0 0.0
      %919 = vmatpush1.msra.mxu0 0.0
      %920 = vmatprep.subr.mxu0 0.0
      %921 = vmatpush1.msra.mxu0 0.0
      %922 = vmatprep.subr.mxu0 0.0
      %923 = vmatpush1.msra.mxu0 0.0
      %924 = vmatprep.subr.mxu0 0.0
      %925 = vmatpush1.msra.mxu0 0.0
      %926 = vmatprep.subr.mxu0 0.0
      %927 = vmatpush1.msra.mxu0 0.0
      %928 = vmatprep.subr.mxu0 0.0
      %929 = vmatpush1.msra.mxu0 0.0
      %930 = vmatprep.subr.mxu0 0.0
      %931 = vmatpush1.msra.mxu0 0.0
      %932 = vmatprep.subr.mxu0 0.0
      %933 = vmatpush1.msra.mxu0 0.0
      %934 = vmatprep.subr.mxu0 0.0
      %935 = vmatpush1.msra.mxu0 0.0
      %936 = vmatprep.subr.mxu0 0.0
      %937 = vmatpush1.msra.mxu0 0.0
      %938 = vmatprep.subr.mxu0 0.0
      %939 = vmatpush1.msra.mxu0 0.0
      %940 = vmatprep.subr.mxu0 0.0
      %941 = vmatpush1.msra.mxu0 0.0
      %942 = vmatprep.subr.mxu0 0.0
      %943 = vmatpush1.msra.mxu0 0.0
      %944 = vmatprep.subr.mxu0 0.0
      %945 = vmatpush1.msra.mxu0 0.0
      %946 = vmatprep.subr.mxu0 0.0
      %947 = vmatpush1.msra.mxu0 0.0
      %948 = vmatprep.subr.mxu0 0.0
      %949 = vmatpush1.msra.mxu0 0.0
      %950 = vmatprep.subr.mxu0 0.0
      %951 = vmatpush1.msra.mxu0 0.0
      %952 = vmatprep.mubr.f32.mxu0 0.0
      %953 = vmatmul.mubr.f32.gmra.mrb[0].mxu0 %v886
      %v954 = vpop.f32.mrb[0].mxu0
      %v955 = vadd.f32 0.0, %v954
      %v956 = vpop.f32.mrb[0].mxu0
      %957 = vdwg.mxu0
      %v959 = vsel %vm552, %v715, 0
      %961 = vmatprep.subr.mxu0 0.0
      %962 = vmatpush1.msra.mxu0 %v543
      %963 = vmatprep.subr.mxu0 0.0
      %964 = vmatpush1.msra.mxu0 0.0
      %965 = vmatprep.subr.mxu0 0.0
      %966 = vmatpush1.msra.mxu0 0.0
      %967 = vmatprep.subr.mxu0 0.0
      %968 = vmatpush1.msra.mxu0 0.0
      %969 = vmatprep.subr.mxu0 0.0
      %970 = vmatpush1.msra.mxu0 0.0
      %971 = vmatprep.subr.mxu0 0.0
      %972 = vmatpush1.msra.mxu0 0.0
      %973 = vmatprep.subr.mxu0 0.0
      %974 = vmatpush1.msra.mxu0 0.0
      %975 = vmatprep.subr.mxu0 0.0
      %976 = vmatpush1.msra.mxu0 0.0
      %977 = vmatprep.subr.mxu0 0.0
      %978 = vmatpush1.msra.mxu0 0.0
      %979 = vmatprep.subr.mxu0 0.0
      %980 = vmatpush1.msra.mxu0 0.0
      %981 = vmatprep.subr.mxu0 0.0
      %982 = vmatpush1.msra.mxu0 0.0
      %983 = vmatprep.subr.mxu0 0.0
      %984 = vmatpush1.msra.mxu0 0.0
      %985 = vmatprep.subr.mxu0 0.0
      %986 = vmatpush1.msra.mxu0 0.0
      %987 = vmatprep.subr.mxu0 0.0
      %988 = vmatpush1.msra.mxu0 0.0
      %989 = vmatprep.subr.mxu0 0.0
      %990 = vmatpush1.msra.mxu0 0.0
      %991 = vmatprep.subr.mxu0 0.0
      %992 = vmatpush1.msra.mxu0 0.0
      %993 = vmatprep.subr.mxu0 0.0
      %994 = vmatpush1.msra.mxu0 0.0
      %995 = vmatprep.subr.mxu0 0.0
      %996 = vmatpush1.msra.mxu0 0.0
      %997 = vmatprep.subr.mxu0 0.0
      %998 = vmatpush1.msra.mxu0 0.0
      %999 = vmatprep.subr.mxu0 0.0
      %1000 = vmatpush1.msra.mxu0 0.0
      %1001 = vmatprep.subr.mxu0 0.0
      %1002 = vmatpush1.msra.mxu0 0.0
      %1003 = vmatprep.subr.mxu0 0.0
      %1004 = vmatpush1.msra.mxu0 0.0
      %1005 = vmatprep.subr.mxu0 0.0
      %1006 = vmatpush1.msra.mxu0 0.0
      %1007 = vmatprep.subr.mxu0 0.0
      %1008 = vmatpush1.msra.mxu0 0.0
      %1009 = vmatprep.subr.mxu0 0.0
      %1010 = vmatpush1.msra.mxu0 0.0
      %1011 = vmatprep.subr.mxu0 0.0
      %1012 = vmatpush1.msra.mxu0 0.0
      %1013 = vmatprep.subr.mxu0 0.0
      %1014 = vmatpush1.msra.mxu0 0.0
      %1015 = vmatprep.subr.mxu0 0.0
      %1016 = vmatpush1.msra.mxu0 0.0
      %1017 = vmatprep.subr.mxu0 0.0
      %1018 = vmatpush1.msra.mxu0 0.0
      %1019 = vmatprep.subr.mxu0 0.0
      %1020 = vmatpush1.msra.mxu0 0.0
      %1021 = vmatprep.subr.mxu0 0.0
      %1022 = vmatpush1.msra.mxu0 0.0
      %1023 = vmatprep.subr.mxu0 0.0
      %1024 = vmatpush1.msra.mxu0 0.0
      %1025 = vmatprep.mubr.f32.mxu0 0.0
      %1026 = vmatmul.mubr.f32.gmra.mrb[0].mxu0 %v959
      %v1027 = vpop.f32.mrb[0].mxu0
      %v1028 = vadd.f32 %v955, %v1027
      %v1029 = vpop.f32.mrb[0].mxu0
      %1030 = vdwg.mxu0
      %1031 = vrot.lane.b32.xlu0 %v456, 112
      %v1032 = vpop.permute.xlu0 %1031
      %1033 = vrot.lane.b32.xlu0 %v540, 112
      %v1034 = vpop.permute.xlu0 %1033
      %v1035 = vsel %vm552, %v1032, 0
      %v1037 = vsel %vm552, %v1034, 0
      %1039 = vmatprep.subr.mxu0 0.0
      %1040 = vmatpush1.xpose.msra.mxu0 %v1037
      %1041 = vmatprep.subr.mxu0 0.0
      %1042 = vmatpush1.xpose.msra.mxu0 0.0
      %1043 = vmatprep.subr.mxu0 0.0
      %1044 = vmatpush1.xpose.msra.mxu0 0.0
      %1045 = vmatprep.subr.mxu0 0.0
      %1046 = vmatpush1.xpose.msra.mxu0 0.0
      %1047 = vmatprep.subr.mxu0 0.0
      %1048 = vmatpush1.xpose.msra.mxu0 0.0
      %1049 = vmatprep.subr.mxu0 0.0
      %1050 = vmatpush1.xpose.msra.mxu0 0.0
      %1051 = vmatprep.subr.mxu0 0.0
      %1052 = vmatpush1.xpose.msra.mxu0 0.0
      %1053 = vmatprep.subr.mxu0 0.0
      %1054 = vmatpush1.xpose.msra.mxu0 0.0
      %1055 = vmatprep.subr.mxu0 0.0
      %1056 = vmatpush1.xpose.msra.mxu0 0.0
      %1057 = vmatprep.subr.mxu0 0.0
      %1058 = vmatpush1.xpose.msra.mxu0 0.0
      %1059 = vmatprep.subr.mxu0 0.0
      %1060 = vmatpush1.xpose.msra.mxu0 0.0
      %1061 = vmatprep.subr.mxu0 0.0
      %1062 = vmatpush1.xpose.msra.mxu0 0.0
      %1063 = vmatprep.subr.mxu0 0.0
      %1064 = vmatpush1.xpose.msra.mxu0 0.0
      %1065 = vmatprep.subr.mxu0 0.0
      %1066 = vmatpush1.xpose.msra.mxu0 0.0
      %1067 = vmatprep.subr.mxu0 0.0
      %1068 = vmatpush1.xpose.msra.mxu0 0.0
      %1069 = vmatprep.subr.mxu0 0.0
      %1070 = vmatpush1.xpose.msra.mxu0 0.0
      %1071 = vmatprep.subr.mxu0 0.0
      %1072 = vmatpush1.xpose.msra.mxu0 0.0
      %1073 = vmatprep.subr.mxu0 0.0
      %1074 = vmatpush1.xpose.msra.mxu0 0.0
      %1075 = vmatprep.subr.mxu0 0.0
      %1076 = vmatpush1.xpose.msra.mxu0 0.0
      %1077 = vmatprep.subr.mxu0 0.0
      %1078 = vmatpush1.xpose.msra.mxu0 0.0
      %1079 = vmatprep.subr.mxu0 0.0
      %1080 = vmatpush1.xpose.msra.mxu0 0.0
      %1081 = vmatprep.subr.mxu0 0.0
      %1082 = vmatpush1.xpose.msra.mxu0 0.0
      %1083 = vmatprep.subr.mxu0 0.0
      %1084 = vmatpush1.xpose.msra.mxu0 0.0
      %1085 = vmatprep.subr.mxu0 0.0
      %1086 = vmatpush1.xpose.msra.mxu0 0.0
      %1087 = vmatprep.subr.mxu0 0.0
      %1088 = vmatpush1.xpose.msra.mxu0 0.0
      %1089 = vmatprep.subr.mxu0 0.0
      %1090 = vmatpush1.xpose.msra.mxu0 0.0
      %1091 = vmatprep.subr.mxu0 0.0
      %1092 = vmatpush1.xpose.msra.mxu0 0.0
      %1093 = vmatprep.subr.mxu0 0.0
      %1094 = vmatpush1.xpose.msra.mxu0 0.0
      %1095 = vmatprep.subr.mxu0 0.0
      %1096 = vmatpush1.xpose.msra.mxu0 0.0
      %1097 = vmatprep.subr.mxu0 0.0
      %1098 = vmatpush1.xpose.msra.mxu0 0.0
      %1099 = vmatprep.subr.mxu0 0.0
      %1100 = vmatpush1.xpose.msra.mxu0 0.0
      %1101 = vmatprep.subr.mxu0 0.0
      %1102 = vmatpush1.xpose.msra.mxu0 0.0
      %1103 = vmatprep.mubr.f32.mxu0 0.0
      %1104 = vmatmul.mubr.f32.gmra.mrb[0].mxu0 %v1035
      %v1105 = vpop.f32.mrb[0].mxu0
      %v1106 = vadd.f32 0.0, %v1105
      %v1107 = vpop.f32.mrb[0].mxu0
      %1108 = vdwg.mxu0
      %v1109 = vmul.f32 %v1106, 0.35355338
      %v1110 = vsel %vm551, %v1109, -inf
      %v1111 = vsel %vm552, %v1110, -inf
      %1112 = vmax.xlane.f32.xlu0 %v1111
      %v1113 = vpop.xlane.xlu0 %1112
      %v1114 = vsub.f32 %v1110, %v1113
      %v1115 = vmul.f32 %v1114, 1.442695
      %v1116 = vpow.pop %v1115
      %v1117 = vsel %vm552, %v1116, 0.0
      %1118 = vadd.xlane.f32.xlu0 %v1117
      %v1119 = vpop.xlane.xlu0 %1118
      %v1120 = vrcp.pop %v1119
      %v1121 = vmul.f32 %v1116, %v1120
      %1122 = vrot.lane.b32.xlu0 %v540, 80
      %v1123 = vpop.permute.xlu0 %1122
      %v1126 = vsel %vm552, %v1121, 0
      %1128 = vmatprep.subr.mxu0 0.0
      %1129 = vmatpush1.msra.mxu0 %v1123
      %1130 = vmatprep.subr.mxu0 0.0
      %1131 = vmatpush1.msra.mxu0 0.0
      %1132 = vmatprep.subr.mxu0 0.0
      %1133 = vmatpush1.msra.mxu0 0.0
      %1134 = vmatprep.subr.mxu0 0.0
      %1135 = vmatpush1.msra.mxu0 0.0
      %1136 = vmatprep.subr.mxu0 0.0
      %1137 = vmatpush1.msra.mxu0 0.0
      %1138 = vmatprep.subr.mxu0 0.0
      %1139 = vmatpush1.msra.mxu0 0.0
      %1140 = vmatprep.subr.mxu0 0.0
      %1141 = vmatpush1.msra.mxu0 0.0
      %1142 = vmatprep.subr.mxu0 0.0
      %1143 = vmatpush1.msra.mxu0 0.0
      %1144 = vmatprep.subr.mxu0 0.0
      %1145 = vmatpush1.msra.mxu0 0.0
      %1146 = vmatprep.subr.mxu0 0.0
      %1147 = vmatpush1.msra.mxu0 0.0
      %1148 = vmatprep.subr.mxu0 0.0
      %1149 = vmatpush1.msra.mxu0 0.0
      %1150 = vmatprep.subr.mxu0 0.0
      %1151 = vmatpush1.msra.mxu0 0.0
      %1152 = vmatprep.subr.mxu0 0.0
      %1153 = vmatpush1.msra.mxu0 0.0
      %1154 = vmatprep.subr.mxu0 0.0
      %1155 = vmatpush1.msra.mxu0 0.0
      %1156 = vmatprep.subr.mxu0 0.0
      %1157 = vmatpush1.msra.mxu0 0.0
      %1158 = vmatprep.subr.mxu0 0.0
      %1159 = vmatpush1.msra.mxu0 0.0
      %1160 = vmatprep.subr.mxu0 0.0
      %1161 = vmatpush1.msra.mxu0 0.0
      %1162 = vmatprep.subr.mxu0 0.0
      %1163 = vmatpush1.msra.mxu0 0.0
      %1164 = vmatprep.subr.mxu0 0.0
      %1165 = vmatpush1.msra.mxu0 0.0
      %1166 = vmatprep.subr.mxu0 0.0
      %1167 = vmatpush1.msra.mxu0 0.0
      %1168 = vmatprep.subr.mxu0 0.0
      %1169 = vmatpush1.msra.mxu0 0.0
      %1170 = vmatprep.subr.mxu0 0.0
      %1171 = vmatpush1.msra.mxu0 0.0
      %1172 = vmatprep.subr.mxu0 0.0
      %1173 = vmatpush1.msra.mxu0 0.0
      %1174 = vmatprep.subr.mxu0 0.0
      %1175 = vmatpush1.msra.mxu0 0.0
      %1176 = vmatprep.subr.mxu0 0.0
      %1177 = vmatpush1.msra.mxu0 0.0
      %1178 = vmatprep.subr.mxu0 0.0
      %1179 = vmatpush1.msra.mxu0 0.0
      %1180 = vmatprep.subr.mxu0 0.0
      %1181 = vmatpush1.msra.mxu0 0.0
      %1182 = vmatprep.subr.mxu0 0.0
      %1183 = vmatpush1.msra.mxu0 0.0
      %1184 = vmatprep.subr.mxu0 0.0
      %1185 = vmatpush1.msra.mxu0 0.0
      %1186 = vmatprep.subr.mxu0 0.0
      %1187 = vmatpush1.msra.mxu0 0.0
      %1188 = vmatprep.subr.mxu0 0.0
      %1189 = vmatpush1.msra.mxu0 0.0
      %1190 = vmatprep.subr.mxu0 0.0
      %1191 = vmatpush1.msra.mxu0 0.0
      %1192 = vmatprep.mubr.f32.mxu0 0.0
      %1193 = vmatmul.mubr.f32.gmra.mrb[0].mxu0 %v1126
      %v1194 = vpop.f32.mrb[0].mxu0
      %v1195 = vadd.f32 0.0, %v1194
      %v1196 = vpop.f32.mrb[0].mxu0
      %1197 = vdwg.mxu0
      %v1199 = vsel %vm552, %v1195, 0
      %1201 = vmatprep.subr.mxu0 0.0
      %1202 = vmatpush1.msra.mxu0 %v545
      %1203 = vmatprep.subr.mxu0 0.0
      %1204 = vmatpush1.msra.mxu0 0.0
      %1205 = vmatprep.subr.mxu0 0.0
      %1206 = vmatpush1.msra.mxu0 0.0
      %1207 = vmatprep.subr.mxu0 0.0
      %1208 = vmatpush1.msra.mxu0 0.0
      %1209 = vmatprep.subr.mxu0 0.0
      %1210 = vmatpush1.msra.mxu0 0.0
      %1211 = vmatprep.subr.mxu0 0.0
      %1212 = vmatpush1.msra.mxu0 0.0
      %1213 = vmatprep.subr.mxu0 0.0
      %1214 = vmatpush1.msra.mxu0 0.0
      %1215 = vmatprep.subr.mxu0 0.0
      %1216 = vmatpush1.msra.mxu0 0.0
      %1217 = vmatprep.subr.mxu0 0.0
      %1218 = vmatpush1.msra.mxu0 0.0
      %1219 = vmatprep.subr.mxu0 0.0
      %1220 = vmatpush1.msra.mxu0 0.0
      %1221 = vmatprep.subr.mxu0 0.0
      %1222 = vmatpush1.msra.mxu0 0.0
      %1223 = vmatprep.subr.mxu0 0.0
      %1224 = vmatpush1.msra.mxu0 0.0
      %1225 = vmatprep.subr.mxu0 0.0
      %1226 = vmatpush1.msra.mxu0 0.0
      %1227 = vmatprep.subr.mxu0 0.0
      %1228 = vmatpush1.msra.mxu0 0.0
      %1229 = vmatprep.subr.mxu0 0.0
      %1230 = vmatpush1.msra.mxu0 0.0
      %1231 = vmatprep.subr.mxu0 0.0
      %1232 = vmatpush1.msra.mxu0 0.0
      %1233 = vmatprep.subr.mxu0 0.0
      %1234 = vmatpush1.msra.mxu0 0.0
      %1235 = vmatprep.subr.mxu0 0.0
      %1236 = vmatpush1.msra.mxu0 0.0
      %1237 = vmatprep.subr.mxu0 0.0
      %1238 = vmatpush1.msra.mxu0 0.0
      %1239 = vmatprep.subr.mxu0 0.0
      %1240 = vmatpush1.msra.mxu0 0.0
      %1241 = vmatprep.subr.mxu0 0.0
      %1242 = vmatpush1.msra.mxu0 0.0
      %1243 = vmatprep.subr.mxu0 0.0
      %1244 = vmatpush1.msra.mxu0 0.0
      %1245 = vmatprep.subr.mxu0 0.0
      %1246 = vmatpush1.msra.mxu0 0.0
      %1247 = vmatprep.subr.mxu0 0.0
      %1248 = vmatpush1.msra.mxu0 0.0
      %1249 = vmatprep.subr.mxu0 0.0
      %1250 = vmatpush1.msra.mxu0 0.0
      %1251 = vmatprep.subr.mxu0 0.0
      %1252 = vmatpush1.msra.mxu0 0.0
      %1253 = vmatprep.subr.mxu0 0.0
      %1254 = vmatpush1.msra.mxu0 0.0
      %1255 = vmatprep.subr.mxu0 0.0
      %1256 = vmatpush1.msra.mxu0 0.0
      %1257 = vmatprep.subr.mxu0 0.0
      %1258 = vmatpush1.msra.mxu0 0.0
      %1259 = vmatprep.subr.mxu0 0.0
      %1260 = vmatpush1.msra.mxu0 0.0
      %1261 = vmatprep.subr.mxu0 0.0
      %1262 = vmatpush1.msra.mxu0 0.0
      %1263 = vmatprep.subr.mxu0 0.0
      %1264 = vmatpush1.msra.mxu0 0.0
      %1265 = vmatprep.mubr.f32.mxu0 0.0
      %1266 = vmatmul.mubr.f32.gmra.mrb[0].mxu0 %v1199
      %v1267 = vpop.f32.mrb[0].mxu0
      %v1268 = vadd.f32 0.0, %v1267
      %v1269 = vpop.f32.mrb[0].mxu0
      %1270 = vdwg.mxu0
      %v1271 = vadd.f32 %v1028, %v1268
      %1272 = vrot.lane.b32.xlu0 %v456, 104
      %v1273 = vpop.permute.xlu0 %1272
      %1274 = vrot.lane.b32.xlu0 %v540, 104
      %v1275 = vpop.permute.xlu0 %1274
      %v1276 = vsel %vm552, %v1273, 0
      %v1278 = vsel %vm552, %v1275, 0
      %1280 = vmatprep.subr.mxu0 0.0
      %1281 = vmatpush1.xpose.msra.mxu0 %v1278
      %1282 = vmatprep.subr.mxu0 0.0
      %1283 = vmatpush1.xpose.msra.mxu0 0.0
      %1284 = vmatprep.subr.mxu0 0.0
      %1285 = vmatpush1.xpose.msra.mxu0 0.0
      %1286 = vmatprep.subr.mxu0 0.0
      %1287 = vmatpush1.xpose.msra.mxu0 0.0
      %1288 = vmatprep.subr.mxu0 0.0
      %1289 = vmatpush1.xpose.msra.mxu0 0.0
      %1290 = vmatprep.subr.mxu0 0.0
      %1291 = vmatpush1.xpose.msra.mxu0 0.0
      %1292 = vmatprep.subr.mxu0 0.0
      %1293 = vmatpush1.xpose.msra.mxu0 0.0
      %1294 = vmatprep.subr.mxu0 0.0
      %1295 = vmatpush1.xpose.msra.mxu0 0.0
      %1296 = vmatprep.subr.mxu0 0.0
      %1297 = vmatpush1.xpose.msra.mxu0 0.0
      %1298 = vmatprep.subr.mxu0 0.0
      %1299 = vmatpush1.xpose.msra.mxu0 0.0
      %1300 = vmatprep.subr.mxu0 0.0
      %1301 = vmatpush1.xpose.msra.mxu0 0.0
      %1302 = vmatprep.subr.mxu0 0.0
      %1303 = vmatpush1.xpose.msra.mxu0 0.0
      %1304 = vmatprep.subr.mxu0 0.0
      %1305 = vmatpush1.xpose.msra.mxu0 0.0
      %1306 = vmatprep.subr.mxu0 0.0
      %1307 = vmatpush1.xpose.msra.mxu0 0.0
      %1308 = vmatprep.subr.mxu0 0.0
      %1309 = vmatpush1.xpose.msra.mxu0 0.0
      %1310 = vmatprep.subr.mxu0 0.0
      %1311 = vmatpush1.xpose.msra.mxu0 0.0
      %1312 = vmatprep.subr.mxu0 0.0
      %1313 = vmatpush1.xpose.msra.mxu0 0.0
      %1314 = vmatprep.subr.mxu0 0.0
      %1315 = vmatpush1.xpose.msra.mxu0 0.0
      %1316 = vmatprep.subr.mxu0 0.0
      %1317 = vmatpush1.xpose.msra.mxu0 0.0
      %1318 = vmatprep.subr.mxu0 0.0
      %1319 = vmatpush1.xpose.msra.mxu0 0.0
      %1320 = vmatprep.subr.mxu0 0.0
      %1321 = vmatpush1.xpose.msra.mxu0 0.0
      %1322 = vmatprep.subr.mxu0 0.0
      %1323 = vmatpush1.xpose.msra.mxu0 0.0
      %1324 = vmatprep.subr.mxu0 0.0
      %1325 = vmatpush1.xpose.msra.mxu0 0.0
      %1326 = vmatprep.subr.mxu0 0.0
      %1327 = vmatpush1.xpose.msra.mxu0 0.0
      %1328 = vmatprep.subr.mxu0 0.0
      %1329 = vmatpush1.xpose.msra.mxu0 0.0
      %1330 = vmatprep.subr.mxu0 0.0
      %1331 = vmatpush1.xpose.msra.mxu0 0.0
      %1332 = vmatprep.subr.mxu0 0.0
      %1333 = vmatpush1.xpose.msra.mxu0 0.0
      %1334 = vmatprep.subr.mxu0 0.0
      %1335 = vmatpush1.xpose.msra.mxu0 0.0
      %1336 = vmatprep.subr.mxu0 0.0
      %1337 = vmatpush1.xpose.msra.mxu0 0.0
      %1338 = vmatprep.subr.mxu0 0.0
      %1339 = vmatpush1.xpose.msra.mxu0 0.0
      %1340 = vmatprep.subr.mxu0 0.0
      %1341 = vmatpush1.xpose.msra.mxu0 0.0
      %1342 = vmatprep.subr.mxu0 0.0
      %1343 = vmatpush1.xpose.msra.mxu0 0.0
      %1344 = vmatprep.mubr.f32.mxu0 0.0
      %1345 = vmatmul.mubr.f32.gmra.mrb[0].mxu0 %v1276
      %v1346 = vpop.f32.mrb[0].mxu0
      %v1347 = vadd.f32 0.0, %v1346
      %v1348 = vpop.f32.mrb[0].mxu0
      %1349 = vdwg.mxu0
      %v1350 = vmul.f32 %v1347, 0.35355338
      %v1351 = vsel %vm551, %v1350, -inf
      %v1352 = vsel %vm552, %v1351, -inf
      %1353 = vmax.xlane.f32.xlu0 %v1352
      %v1354 = vpop.xlane.xlu0 %1353
      %v1355 = vsub.f32 %v1351, %v1354
      %v1356 = vmul.f32 %v1355, 1.442695
      %v1357 = vpow.pop %v1356
      %v1358 = vsel %vm552, %v1357, 0.0
      %1359 = vadd.xlane.f32.xlu0 %v1358
      %v1360 = vpop.xlane.xlu0 %1359
      %v1361 = vrcp.pop %v1360
      %v1362 = vmul.f32 %v1357, %v1361
      %1363 = vrot.lane.b32.xlu0 %v540, 72
      %v1364 = vpop.permute.xlu0 %1363
      %v1367 = vsel %vm552, %v1362, 0
      %1369 = vmatprep.subr.mxu0 0.0
      %1370 = vmatpush1.msra.mxu0 %v1364
      %1371 = vmatprep.subr.mxu0 0.0
      %1372 = vmatpush1.msra.mxu0 0.0
      %1373 = vmatprep.subr.mxu0 0.0
      %1374 = vmatpush1.msra.mxu0 0.0
      %1375 = vmatprep.subr.mxu0 0.0
      %1376 = vmatpush1.msra.mxu0 0.0
      %1377 = vmatprep.subr.mxu0 0.0
      %1378 = vmatpush1.msra.mxu0 0.0
      %1379 = vmatprep.subr.mxu0 0.0
      %1380 = vmatpush1.msra.mxu0 0.0
      %1381 = vmatprep.subr.mxu0 0.0
      %1382 = vmatpush1.msra.mxu0 0.0
      %1383 = vmatprep.subr.mxu0 0.0
      %1384 = vmatpush1.msra.mxu0 0.0
      %1385 = vmatprep.subr.mxu0 0.0
      %1386 = vmatpush1.msra.mxu0 0.0
      %1387 = vmatprep.subr.mxu0 0.0
      %1388 = vmatpush1.msra.mxu0 0.0
      %1389 = vmatprep.subr.mxu0 0.0
      %1390 = vmatpush1.msra.mxu0 0.0
      %1391 = vmatprep.subr.mxu0 0.0
      %1392 = vmatpush1.msra.mxu0 0.0
      %1393 = vmatprep.subr.mxu0 0.0
      %1394 = vmatpush1.msra.mxu0 0.0
      %1395 = vmatprep.subr.mxu0 0.0
      %1396 = vmatpush1.msra.mxu0 0.0
      %1397 = vmatprep.subr.mxu0 0.0
      %1398 = vmatpush1.msra.mxu0 0.0
      %1399 = vmatprep.subr.mxu0 0.0
      %1400 = vmatpush1.msra.mxu0 0.0
      %1401 = vmatprep.subr.mxu0 0.0
      %1402 = vmatpush1.msra.mxu0 0.0
      %1403 = vmatprep.subr.mxu0 0.0
      %1404 = vmatpush1.msra.mxu0 0.0
      %1405 = vmatprep.subr.mxu0 0.0
      %1406 = vmatpush1.msra.mxu0 0.0
      %1407 = vmatprep.subr.mxu0 0.0
      %1408 = vmatpush1.msra.mxu0 0.0
      %1409 = vmatprep.subr.mxu0 0.0
      %1410 = vmatpush1.msra.mxu0 0.0
      %1411 = vmatprep.subr.mxu0 0.0
      %1412 = vmatpush1.msra.mxu0 0.0
      %1413 = vmatprep.subr.mxu0 0.0
      %1414 = vmatpush1.msra.mxu0 0.0
      %1415 = vmatprep.subr.mxu0 0.0
      %1416 = vmatpush1.msra.mxu0 0.0
      %1417 = vmatprep.subr.mxu0 0.0
      %1418 = vmatpush1.msra.mxu0 0.0
      %1419 = vmatprep.subr.mxu0 0.0
      %1420 = vmatpush1.msra.mxu0 0.0
      %1421 = vmatprep.subr.mxu0 0.0
      %1422 = vmatpush1.msra.mxu0 0.0
      %1423 = vmatprep.subr.mxu0 0.0
      %1424 = vmatpush1.msra.mxu0 0.0
      %1425 = vmatprep.subr.mxu0 0.0
      %1426 = vmatpush1.msra.mxu0 0.0
      %1427 = vmatprep.subr.mxu0 0.0
      %1428 = vmatpush1.msra.mxu0 0.0
      %1429 = vmatprep.subr.mxu0 0.0
      %1430 = vmatpush1.msra.mxu0 0.0
      %1431 = vmatprep.subr.mxu0 0.0
      %1432 = vmatpush1.msra.mxu0 0.0
      %1433 = vmatprep.mubr.f32.mxu0 0.0
      %1434 = vmatmul.mubr.f32.gmra.mrb[0].mxu0 %v1367
      %v1435 = vpop.f32.mrb[0].mxu0
      %v1436 = vadd.f32 0.0, %v1435
      %v1437 = vpop.f32.mrb[0].mxu0
      %1438 = vdwg.mxu0
      %v1440 = vsel %vm552, %v1436, 0
      %1442 = vmatprep.subr.mxu0 0.0
      %1443 = vmatpush1.msra.mxu0 %v546
      %1444 = vmatprep.subr.mxu0 0.0
      %1445 = vmatpush1.msra.mxu0 0.0
      %1446 = vmatprep.subr.mxu0 0.0
      %1447 = vmatpush1.msra.mxu0 0.0
      %1448 = vmatprep.subr.mxu0 0.0
      %1449 = vmatpush1.msra.mxu0 0.0
      %1450 = vmatprep.subr.mxu0 0.0
      %1451 = vmatpush1.msra.mxu0 0.0
      %1452 = vmatprep.subr.mxu0 0.0
      %1453 = vmatpush1.msra.mxu0 0.0
      %1454 = vmatprep.subr.mxu0 0.0
      %1455 = vmatpush1.msra.mxu0 0.0
      %1456 = vmatprep.subr.mxu0 0.0
      %1457 = vmatpush1.msra.mxu0 0.0
      %1458 = vmatprep.subr.mxu0 0.0
      %1459 = vmatpush1.msra.mxu0 0.0
      %1460 = vmatprep.subr.mxu0 0.0
      %1461 = vmatpush1.msra.mxu0 0.0
      %1462 = vmatprep.subr.mxu0 0.0
      %1463 = vmatpush1.msra.mxu0 0.0
      %1464 = vmatprep.subr.mxu0 0.0
      %1465 = vmatpush1.msra.mxu0 0.0
      %1466 = vmatprep.subr.mxu0 0.0
      %1467 = vmatpush1.msra.mxu0 0.0
      %1468 = vmatprep.subr.mxu0 0.0
      %1469 = vmatpush1.msra.mxu0 0.0
      %1470 = vmatprep.subr.mxu0 0.0
      %1471 = vmatpush1.msra.mxu0 0.0
      %1472 = vmatprep.subr.mxu0 0.0
      %1473 = vmatpush1.msra.mxu0 0.0
      %1474 = vmatprep.subr.mxu0 0.0
      %1475 = vmatpush1.msra.mxu0 0.0
      %1476 = vmatprep.subr.mxu0 0.0
      %1477 = vmatpush1.msra.mxu0 0.0
      %1478 = vmatprep.subr.mxu0 0.0
      %1479 = vmatpush1.msra.mxu0 0.0
      %1480 = vmatprep.subr.mxu0 0.0
      %1481 = vmatpush1.msra.mxu0 0.0
      %1482 = vmatprep.subr.mxu0 0.0
      %1483 = vmatpush1.msra.mxu0 0.0
      %1484 = vmatprep.subr.mxu0 0.0
      %1485 = vmatpush1.msra.mxu0 0.0
      %1486 = vmatprep.subr.mxu0 0.0
      %1487 = vmatpush1.msra.mxu0 0.0
      %1488 = vmatprep.subr.mxu0 0.0
      %1489 = vmatpush1.msra.mxu0 0.0
      %1490 = vmatprep.subr.mxu0 0.0
      %1491 = vmatpush1.msra.mxu0 0.0
      %1492 = vmatprep.subr.mxu0 0.0
      %1493 = vmatpush1.msra.mxu0 0.0
      %1494 = vmatprep.subr.mxu0 0.0
      %1495 = vmatpush1.msra.mxu0 0.0
      %1496 = vmatprep.subr.mxu0 0.0
      %1497 = vmatpush1.msra.mxu0 0.0
      %1498 = vmatprep.subr.mxu0 0.0
      %1499 = vmatpush1.msra.mxu0 0.0
      %1500 = vmatprep.subr.mxu0 0.0
      %1501 = vmatpush1.msra.mxu0 0.0
      %1502 = vmatprep.subr.mxu0 0.0
      %1503 = vmatpush1.msra.mxu0 0.0
      %1504 = vmatprep.subr.mxu0 0.0
      %1505 = vmatpush1.msra.mxu0 0.0
      %1506 = vmatprep.mubr.f32.mxu0 0.0
      %1507 = vmatmul.mubr.f32.gmra.mrb[0].mxu0 %v1440
      %v1508 = vpop.f32.mrb[0].mxu0
      %v1509 = vadd.f32 0.0, %v1508
      %v1510 = vpop.f32.mrb[0].mxu0
      %1511 = vdwg.mxu0
      %v1512 = vadd.f32 %v1271, %v1509
      %v1513 = vadd.f32 %v372, %v1512
      %v1514 = vld [vmem:[%s7] sm:$0x1]
      %v1516 = vlaneseq
      %v1517 = vshrl.u32 %v1516, 7
      %v1518 = vsub.s32 0, %v1517
      %v1519 = vrot.slane %v1514, %v1518
      %v1521 = vadd.f32 %v1513, %v1519
      %v1522 = vld [vmem:[%s8] sm:$0x1]
      %v1523 = vld [vmem:[%s9] sm:$0x1]
      %v1524 = vsel %vm385, %v1521, 0.0
      %1525 = vadd.xlane.f32.xlu0 %v1524
      %v1526 = vpop.xlane.xlu0 %1525
      %v1527 = vrcp.pop 32.0
      %v1528 = vmul.f32 %v1526, %v1527
      %v1529 = vsub.f32 %v1521, %v1528
      %v1530 = vmul.f32 %v1529, %v1529
      %v1531 = vsel %vm385, %v1530, 0.0
      %1532 = vadd.xlane.f32.xlu0 %v1531
      %v1533 = vpop.xlane.xlu0 %1532
      %v1534 = vmul.f32 %v1533, %v1527
      %v1535 = vadd.f32 %v1534, 1e-05
      %v1536 = vrsqrt.pop %v1535
      %v1537 = vmul.f32 %v1529, %v1536
      %v1539 = vlaneseq
      %v1540 = vshrl.u32 %v1539, 7
      %v1541 = vsub.s32 0, %v1540
      %v1542 = vrot.slane %v1522, %v1541
      %v1544 = vmul.f32 %v1537, %v1542
      %v1546 = vlaneseq
      %v1547 = vshrl.u32 %v1546, 7
      %v1548 = vsub.s32 0, %v1547
      %v1549 = vrot.slane %v1523, %v1548
      %v1551 = vadd.f32 %v1544, %v1549
      %1552 = vst.msk [vmem:[%s371] sm:$0xff] %vm385, %v1551
      %p1553 = scmp.lt.s32.totalorder %s21, 1
      %s1554 = scalar_select %p1553, %s21, 1
      %s1555 = smul.addr %s1554, 8
      %s1556 = scalar_lea.vmem %s10, %s1555
      // Predicated region
      $region61: #{transformer_forward.24} parent=59 // pred_check
        %p1557 = pneg %p259
      $region62: #{transformer_forward.24} parent=59 // pred_check_branch
        %1559 = sbr.rel (%p1557) target = $region64
      $region63: #{transformer_forward.24} parent=59 // pred_region
        _
      $region64: #{transformer_forward.24} parent=59 // pred_fallthru
        _
    $region60: #{transformer_forward.24} parent=5 // pred_fallthru
      _
    %p1560 = scmp.le.s32.totalorder 2, %s16
    // Predicated region
    $region65: #{transformer_forward.24} parent=5 // pred_check
      %p1561 = pneg %p1560
    $region66: #{transformer_forward.24} parent=5 // pred_check_branch
      %1563 = sbr.rel (%p1561) target = $region68
    $region67: #{transformer_forward.24} parent=5 // pred_region
      %s1564 = ssub.s32 %s16, 2
      // Predicated region
      $region69: #{transformer_forward.24} parent=67 // pred_check
        %p1565 = pneg %p265
      $region70: #{transformer_forward.24} parent=67 // pred_check_branch
        %1567 = sbr.rel (%p1565) target = $region72
      $region71: #{transformer_forward.24} parent=67 // pred_region
        %p1568 = scmp.lt.s32.totalorder %s22, 1
        %s1569 = scalar_select %p1568, %s22, 1
        %s1570 = smul.addr %s1569, 8
        %s1571 = scalar_lea.vmem %s10, %s1570
      $region72: #{transformer_forward.24} parent=67 // pred_fallthru
        _
    $region68: #{transformer_forward.24} parent=5 // pred_fallthru
      _
  $region6: #{transformer_forward.24} parent=0 // loop_footer
    %s20 = sadd.s32 1, %s16
  $region7: #{transformer_forward.24} parent=0 // loop_footer_branch
    %15 = sbr.rel target = $region3
  $region8: #{transformer_forward.24} parent=0 // loop_exit
    _

// kernel: transformer_forward.33
$region0: #{transformer_forward.33}
  #allocation0 [shape = 'u32[]', space=smem, size = 0x4, offset = 0x4, fixed_abs, tag = 'smem constant byte address 0x4 - core index']
  #allocation1 [shape = 'u32[144,128]{1,0:T(1,128)}', space=vmem, size = 0x12000, scoped, tag = 'internal scratch']
  %s0 = inlined_call_operand.vmem [shape: f32[2,8,32], index: 0, kind: input, shape index: {}]
  %s1 = inlined_call_operand.vmem [shape: f32[1,32], index: 1, kind: input, shape index: {}]
  %s2 = inlined_call_operand.vmem [shape: f32[1,32], index: 2, kind: input, shape index: {}]
  %s3 = inlined_call_operand.vmem [shape: f32[32,50], index: 3, kind: input, shape index: {}]
  %s4 = inlined_call_operand.vmem [shape: f32[1,50], index: 4, kind: input, shape index: {}]
  %s5 = inlined_call_operand.hbm [shape: f32[2,8,50], index: 5, kind: output, shape index: {}]
  %s6 = sld [smem:[#allocation0]]
  $region53: #{transformer_forward.33} parent=0
    _
  %s8 = ssub.s32 1, %s6
  %s9 = scalar_select 0, %s8, %s6
  $region1: #{transformer_forward.33} parent=0
    #allocation2 [shape = 'u8[8192]{0}', space=vmem, size = 0x2000, scoped, tag = 'output window, operand 0']
    #allocation3 [shape = 's32[2]{0}', space=sflag, size = 0x8, scoped, tag = 'scoped memory for transformer_forward.33']
    %10 = vsyncpa [#allocation3], 0
    %s11 = scalar_lea.sflag [#allocation3], 1
    %12 = vsyncpa %s11, 0
    loop: start=0, step=1, limit=4
    $region2: #{transformer_forward.33} parent=1 // loop_pre_header
      _
    $region3: #{transformer_forward.33} parent=1 // loop_header
      %s14 = sphi 0, %s18
      %p15 = scmp.ge.s32.totalorder %s14, 4
      %s24 = sphi 0, %s26
      %s27 = sphi 0, %s24
      %s28 = sphi 0, %s27
      %s44 = sphi 0, %s28
      %s48 = sphi 0, %s48
      %s50 = sphi 0, %s48
      %s51 = sphi 0, %s50
      %s65 = sphi 0, %s51
      %s69 = sphi 0, %s69
      %s71 = sphi 0, %s69
      %s72 = sphi 0, %s71
      %s86 = sphi 0, %s72
      %s90 = sphi 0, %s90
      %s92 = sphi 0, %s90
      %s93 = sphi 0, %s92
      %s107 = sphi 0, %s93
      %s111 = sphi 0, %s111
      %s113 = sphi 0, %s111
      %s114 = sphi 0, %s113
      %s128 = sphi 0, %s114
      %s134 = sphi 0, %s136
      %s137 = sphi 0, %s134
      %s138 = sphi 0, %s137
      %s154 = sphi 0, %s138
    $region4: #{transformer_forward.33} parent=1 // loop_header_branch
      %17 = sbr.rel (%p15) target = $region8
    $region5: #{transformer_forward.33} parent=1 // loop_body
      %s19 = ssub.s32 %s14, 1
      %s20 = ssub.s32 %s14, 2
      %s21 = sadd.s32 %s14, 1
      %s22 = ssub.s32 %s14, %s21
      %p23 = scmp.eq.s32.totalorder %s22, 0
      %s25 = sadd.s32 %s24, 1
      %s26 = scalar_select %p23, %s24, %s25
      %p29 = pneg %p23
      %p30 = scmp.eq.s32.totalorder %s14, 1
      %p31 = por %p29, %p30
      %p32 = scmp.ne.s32.totalorder %s24, %s27
      %p33 = scmp.eq.s32.totalorder %s14, 0
      %p34 = por %p32, %p33
      %p35 = scmp.ne.s32.totalorder %s24, %s27
      %p36 = scmp.eq.s32.totalorder %s19, 1
      %p37 = por %p35, %p36
      %p38 = scmp.ne.s32.totalorder %s27, %s28
      %p39 = scmp.eq.s32.totalorder %s19, 0
      %p40 = por %p38, %p39
      %p41 = scmp.ne.s32.totalorder %s27, %s28
      %p42 = scmp.eq.s32.totalorder %s20, 1
      %p43 = por %p41, %p42
      %p45 = scmp.ne.s32.totalorder %s28, %s44
      %p46 = scmp.eq.s32.totalorder %s20, 0
      %p47 = por %p45, %p46
      %s49 = sadd.s32 %s48, 1
      %p52 = scmp.eq.s32.totalorder %s14, 1
      %p53 = scmp.ne.s32.totalorder %s48, %s50
      %p54 = scmp.eq.s32.totalorder %s14, 0
      %p55 = por %p53, %p54
      %p56 = scmp.ne.s32.totalorder %s48, %s50
      %p57 = scmp.eq.s32.totalorder %s19, 1
      %p58 = por %p56, %p57
      %p59 = scmp.ne.s32.totalorder %s50, %s51
      %p60 = scmp.eq.s32.totalorder %s19, 0
      %p61 = por %p59, %p60
      %p62 = scmp.ne.s32.totalorder %s50, %s51
      %p63 = scmp.eq.s32.totalorder %s20, 1
      %p64 = por %p62, %p63
      %p66 = scmp.ne.s32.totalorder %s51, %s65
      %p67 = scmp.eq.s32.totalorder %s20, 0
      %p68 = por %p66, %p67
      %s70 = sadd.s32 %s69, 1
      %p73 = scmp.eq.s32.totalorder %s14, 1
      %p74 = scmp.ne.s32.totalorder %s69, %s71
      %p75 = scmp.eq.s32.totalorder %s14, 0
      %p76 = por %p74, %p75
      %p77 = scmp.ne.s32.totalorder %s69, %s71
      %p78 = scmp.eq.s32.totalorder %s19, 1
      %p79 = por %p77, %p78
      %p80 = scmp.ne.s32.totalorder %s71, %s72
      %p81 = scmp.eq.s32.totalorder %s19, 0
      %p82 = por %p80, %p81
      %p83 = scmp.ne.s32.totalorder %s71, %s72
      %p84 = scmp.eq.s32.totalorder %s20, 1
      %p85 = por %p83, %p84
      %p87 = scmp.ne.s32.totalorder %s72, %s86
      %p88 = scmp.eq.s32.totalorder %s20, 0
      %p89 = por %p87, %p88
      %s91 = sadd.s32 %s90, 1
      %p94 = scmp.eq.s32.totalorder %s14, 1
      %p95 = scmp.ne.s32.totalorder %s90, %s92
      %p96 = scmp.eq.s32.totalorder %s14, 0
      %p97 = por %p95, %p96
      %p98 = scmp.ne.s32.totalorder %s90, %s92
      %p99 = scmp.eq.s32.totalorder %s19, 1
      %p100 = por %p98, %p99
      %p101 = scmp.ne.s32.totalorder %s92, %s93
      %p102 = scmp.eq.s32.totalorder %s19, 0
      %p103 = por %p101, %p102
      %p104 = scmp.ne.s32.totalorder %s92, %s93
      %p105 = scmp.eq.s32.totalorder %s20, 1
      %p106 = por %p104, %p105
      %p108 = scmp.ne.s32.totalorder %s93, %s107
      %p109 = scmp.eq.s32.totalorder %s20, 0
      %p110 = por %p108, %p109
      %s112 = sadd.s32 %s111, 1
      %p115 = scmp.eq.s32.totalorder %s14, 1
      %p116 = scmp.ne.s32.totalorder %s111, %s113
      %p117 = scmp.eq.s32.totalorder %s14, 0
      %p118 = por %p116, %p117
      %p119 = scmp.ne.s32.totalorder %s111, %s113
      %p120 = scmp.eq.s32.totalorder %s19, 1
      %p121 = por %p119, %p120
      %p122 = scmp.ne.s32.totalorder %s113, %s114
      %p123 = scmp.eq.s32.totalorder %s19, 0
      %p124 = por %p122, %p123
      %p125 = scmp.ne.s32.totalorder %s113, %s114
      %p126 = scmp.eq.s32.totalorder %s20, 1
      %p127 = por %p125, %p126
      %p129 = scmp.ne.s32.totalorder %s114, %s128
      %p130 = scmp.eq.s32.totalorder %s20, 0
      %p131 = por %p129, %p130
      %s132 = ssub.s32 %s14, %s21
      %p133 = scmp.eq.s32.totalorder %s132, 0
      %s135 = sadd.s32 %s134, 1
      %s136 = scalar_select %p133, %s134, %s135
      %p139 = pneg %p133
      %p140 = scmp.eq.s32.totalorder %s14, 1
      %p141 = por %p139, %p140
      %p142 = scmp.ne.s32.totalorder %s134, %s137
      %p143 = scmp.eq.s32.totalorder %s14, 0
      %p144 = por %p142, %p143
      %p145 = scmp.ne.s32.totalorder %s134, %s137
      %p146 = scmp.eq.s32.totalorder %s19, 1
      %p147 = por %p145, %p146
      %p148 = scmp.ne.s32.totalorder %s137, %s138
      %p149 = scmp.eq.s32.totalorder %s19, 0
      %p150 = por %p148, %p149
      %p151 = scmp.ne.s32.totalorder %s137, %s138
      %p152 = scmp.eq.s32.totalorder %s20, 1
      %p153 = por %p151, %p152
      %p155 = scmp.ne.s32.totalorder %s138, %s154
      %p156 = scmp.eq.s32.totalorder %s20, 0
      %p157 = por %p155, %p156
      %p158 = scmp.le.s32.totalorder 1, %s14
      %p159 = scmp.lt.s32.totalorder %s14, 3
      %p160 = pnand %p158, %p159
      %p161 = pneg %p160
      // Predicated region
      $region9: #{transformer_forward.33} parent=5 // pred_check
        _
      $region10: #{transformer_forward.33} parent=5 // pred_check_branch
        %163 = sbr.rel (%p160) target = $region12
      $region11: #{transformer_forward.33} parent=5 // pred_region
        %s164 = ssub.s32 %s14, 1
        // Predicated region
        $region13: #{transformer_forward.33} parent=11 // pred_check
          %p165 = pneg %p61
        $region14: #{transformer_forward.33} parent=11 // pred_check_branch
          %167 = sbr.rel (%p165) target = $region16
        $region15: #{transformer_forward.33} parent=11 // pred_region
          _
        $region16: #{transformer_forward.33} parent=11 // pred_fallthru
          _
        // Predicated region
        $region17: #{transformer_forward.33} parent=11 // pred_check
          %p168 = pneg %p82
        $region18: #{transformer_forward.33} parent=11 // pred_check_branch
          %170 = sbr.rel (%p168) target = $region20
        $region19: #{transformer_forward.33} parent=11 // pred_region
          _
        $region20: #{transformer_forward.33} parent=11 // pred_fallthru
          _
        // Predicated region
        $region21: #{transformer_forward.33} parent=11 // pred_check
          %p171 = pneg %p103
        $region22: #{transformer_forward.33} parent=11 // pred_check_branch
          %173 = sbr.rel (%p171) target = $region24
        $region23: #{transformer_forward.33} parent=11 // pred_region
          _
        $region24: #{transformer_forward.33} parent=11 // pred_fallthru
          _
        // Predicated region
        $region25: #{transformer_forward.33} parent=11 // pred_check
          %p174 = pneg %p124
        $region26: #{transformer_forward.33} parent=11 // pred_check_branch
          %176 = sbr.rel (%p174) target = $region28
        $region27: #{transformer_forward.33} parent=11 // pred_region
          _
        $region28: #{transformer_forward.33} parent=11 // pred_fallthru
          _
      $region12: #{transformer_forward.33} parent=5 // pred_fallthru
        _
      %p177 = scmp.lt.s32.totalorder %s14, 2
      // Predicated region
      $region29: #{transformer_forward.33} parent=5 // pred_check
        %p178 = pneg %p177
      $region30: #{transformer_forward.33} parent=5 // pred_check_branch
        %180 = sbr.rel (%p178) target = $region32
      $region31: #{transformer_forward.33} parent=5 // pred_region
        // Predicated region
        $region33: #{transformer_forward.33} parent=31 // pred_check
          %p181 = pneg %p34
        $region34: #{transformer_forward.33} parent=31 // pred_check_branch
          %183 = sbr.rel (%p181) target = $region36
        $region35: #{transformer_forward.33} parent=31 // pred_region
          %p184 = scmp.lt.s32.totalorder %s14, 1
          %s185 = scalar_select %p184, %s14, 1
          %s186 = smul.addr %s185, 8
          %s187 = scalar_lea.vmem %s0, %s186
        $region36: #{transformer_forward.33} parent=31 // pred_fallthru
          _
      $region32: #{transformer_forward.33} parent=5 // pred_fallthru
        _
      %p188 = scmp.le.s32.totalorder 1, %s14
      %p189 = scmp.lt.s32.totalorder %s14, 3
      %p190 = pnand %p188, %p189
      %p191 = pneg %p190
      // Predicated region
      $region37: #{transformer_forward.33} parent=5 // pred_check
        _
      $region38: #{transformer_forward.33} parent=5 // pred_check_branch
        %193 = sbr.rel (%p190) target = $region40
      $region39: #{transformer_forward.33} parent=5 // pred_region
        %s194 = ssub.s32 %s14, 1
        %p195 = scmp.lt.s32.totalorder %s19, 1
        %s196 = scalar_select %p195, %s19, 1
        %s197 = smul.addr %s196, 8
        %s198 = scalar_lea.vmem %s0, %s197
        %p199 = pneg %p40
        %p200 = pneg %p37
        %p201 = pneg %p61
        %p202 = pneg %p58
        %p203 = pneg %p82
        %p204 = pneg %p79
        %p205 = pneg %p103
        %p206 = pneg %p100
        %p207 = pneg %p124
        %p208 = pneg %p121
        %p209 = pneg %p150
        %p210 = pneg %p147
        %s211 = sand.u32 %s137, 1
        %s212 = scalar_lea.sflag [#allocation3], %s211
        %s213 = sand.u32 %s137, 1
        %s214 = smul.addr %s213, 8
        %s215 = scalar_lea.vmem [#allocation2], %s214
        %p216 = scmp.lt.s32.totalorder %s19, 1
        %s217 = scalar_select %p216, %s19, 1
        %s218 = smul.addr %s217, 8
        %s219 = scalar_lea.vmem %s0, %s218
        %v220 = vld [vmem:[%s219] sm:$0xff]
        %v221 = vld [vmem:[%s1] sm:$0x1]
        %v222 = vld [vmem:[%s2] sm:$0x1]
        %vm223 = vcmask 261120
        %v224 = vsel %vm223, %v220, 0.0
        %225 = vadd.xlane.f32.xlu0 %v224
        %v226 = vpop.xlane.xlu0 %225
        %v227 = vrcp.pop 32.0
        %v228 = vmul.f32 %v226, %v227
        %v229 = vsub.f32 %v220, %v228
        %v230 = vmul.f32 %v229, %v229
        %v231 = vsel %vm223, %v230, 0.0
        %232 = vadd.xlane.f32.xlu0 %v231
        %v233 = vpop.xlane.xlu0 %232
        %v234 = vmul.f32 %v233, %v227
        %v235 = vadd.f32 %v234, 1e-05
        %v236 = vrsqrt.pop %v235
        %v237 = vmul.f32 %v229, %v236
        %v239 = vlaneseq
        %v240 = vshrl.u32 %v239, 7
        %v241 = vsub.s32 0, %v240
        %v242 = vrot.slane %v221, %v241
        %v244 = vmul.f32 %v237, %v242
        %v246 = vlaneseq
        %v247 = vshrl.u32 %v246, 7
        %v248 = vsub.s32 0, %v247
        %v249 = vrot.slane %v222, %v248
        %v251 = vadd.f32 %v244, %v249
        %v252 = vld [vmem:[%s3] sm:$0xff]
        %v253 = vld [vmem:[%s3 + $0x8] sm:$0xff]
        %v254 = vld [vmem:[%s3 + $0x10] sm:$0xff]
        %v255 = vld [vmem:[%s3 + $0x18] sm:$0xff]
        %v256 = vld [vmem:[%s4] sm:$0x1]
        %v258 = vlaneseq
        %v259 = vshrl.u32 %v258, 7
        %v260 = vsub.s32 0, %v259
        %v261 = vrot.slane %v256, %v260
        %v264 = vsel %vm223, %v251, 0
        %266 = vmatprep.subr.mxu0 0.0
        %267 = vmatpush1.msra.mxu0 %v252
        %268 = vmatprep.subr.mxu0 0.0
        %269 = vmatpush1.msra.mxu0 %v253
        %270 = vmatprep.subr.mxu0 0.0
        %271 = vmatpush1.msra.mxu0 %v254
        %272 = vmatprep.subr.mxu0 0.0
        %273 = vmatpush1.msra.mxu0 %v255
        %274 = vmatprep.subr.mxu0 0.0
        %275 = vmatpush1.msra.mxu0 0.0
        %276 = vmatprep.subr.mxu0 0.0
        %277 = vmatpush1.msra.mxu0 0.0
        %278 = vmatprep.subr.mxu0 0.0
        %279 = vmatpush1.msra.mxu0 0.0
        %280 = vmatprep.subr.mxu0 0.0
        %281 = vmatpush1.msra.mxu0 0.0
        %282 = vmatprep.subr.mxu0 0.0
        %283 = vmatpush1.msra.mxu0 0.0
        %284 = vmatprep.subr.mxu0 0.0
        %285 = vmatpush1.msra.mxu0 0.0
        %286 = vmatprep.subr.mxu0 0.0
        %287 = vmatpush1.msra.mxu0 0.0
        %288 = vmatprep.subr.mxu0 0.0
        %289 = vmatpush1.msra.mxu0 0.0
        %290 = vmatprep.subr.mxu0 0.0
        %291 = vmatpush1.msra.mxu0 0.0
        %292 = vmatprep.subr.mxu0 0.0
        %293 = vmatpush1.msra.mxu0 0.0
        %294 = vmatprep.subr.mxu0 0.0
        %295 = vmatpush1.msra.mxu0 0.0
        %296 = vmatprep.subr.mxu0 0.0
        %297 = vmatpush1.msra.mxu0 0.0
        %298 = vmatprep.subr.mxu0 0.0
        %299 = vmatpush1.msra.mxu0 0.0
        %300 = vmatprep.subr.mxu0 0.0
        %301 = vmatpush1.msra.mxu0 0.0
        %302 = vmatprep.subr.mxu0 0.0
        %303 = vmatpush1.msra.mxu0 0.0
        %304 = vmatprep.subr.mxu0 0.0
        %305 = vmatpush1.msra.mxu0 0.0
        %306 = vmatprep.subr.mxu0 0.0
        %307 = vmatpush1.msra.mxu0 0.0
        %308 = vmatprep.subr.mxu0 0.0
        %309 = vmatpush1.msra.mxu0 0.0
        %310 = vmatprep.subr.mxu0 0.0
        %311 = vmatpush1.msra.mxu0 0.0
        %312 = vmatprep.subr.mxu0 0.0
        %313 = vmatpush1.msra.mxu0 0.0
        %314 = vmatprep.subr.mxu0 0.0
        %315 = vmatpush1.msra.mxu0 0.0
        %316 = vmatprep.subr.mxu0 0.0
        %317 = vmatpush1.msra.mxu0 0.0
        %318 = vmatprep.subr.mxu0 0.0
        %319 = vmatpush1.msra.mxu0 0.0
        %320 = vmatprep.subr.mxu0 0.0
        %321 = vmatpush1.msra.mxu0 0.0
        %322 = vmatprep.subr.mxu0 0.0
        %323 = vmatpush1.msra.mxu0 0.0
        %324 = vmatprep.subr.mxu0 0.0
        %325 = vmatpush1.msra.mxu0 0.0
        %326 = vmatprep.subr.mxu0 0.0
        %327 = vmatpush1.msra.mxu0 0.0
        %328 = vmatprep.subr.mxu0 0.0
        %329 = vmatpush1.msra.mxu0 0.0
        %330 = vmatprep.mubr.f32.mxu0 0.0
        %331 = vmatmul.mubr.f32.gmra.mrb[0].mxu0 %v264
        %v332 = vpop.f32.mrb[0].mxu0
        %v333 = vadd.f32 %v261, %v332
        %v334 = vpop.f32.mrb[0].mxu0
        %335 = vdwg.mxu0
        %vm336 = vcmask 408576
        %337 = vst.msk [vmem:[%s215] sm:$0xff] %vm336, %v333
        %s338 = sand.u32 %s137, 1
        %s339 = scalar_lea.sflag [#allocation3], %s338
        %s340 = sand.u32 %s137, 1
        %s341 = smul.addr %s340, 8
        %s342 = scalar_lea.vmem [#allocation2], %s341
        // Predicated region
        $region41: #{transformer_forward.33} parent=39 // pred_check
          %p343 = pneg %p147
        $region42: #{transformer_forward.33} parent=39 // pred_check_branch
          %345 = sbr.rel (%p343) target = $region44
        $region43: #{transformer_forward.33} parent=39 // pred_region
          %s347 = ssub.s32 128, 128
          %348 = vsyncadd %s339, %s347
          %s349 = smul.addr %s19, 128
          %s350 = scalar_lea.hbm %s5, %s349
          %s352 = sshll.u32 %s342, 4
          %s353 = int_to_ptr.vmem [resolvable:$true] %s352
          %355 = dma.vmem_to_hbm [thread:$0]  %s353, 128, %s350, %s339
        $region44: #{transformer_forward.33} parent=39 // pred_fallthru
          _
      $region40: #{transformer_forward.33} parent=5 // pred_fallthru
        _
      %p356 = scmp.le.s32.totalorder 2, %s14
      // Predicated region
      $region45: #{transformer_forward.33} parent=5 // pred_check
        %p357 = pneg %p356
      $region46: #{transformer_forward.33} parent=5 // pred_check_branch
        %359 = sbr.rel (%p357) target = $region48
      $region47: #{transformer_forward.33} parent=5 // pred_region
        %s360 = ssub.s32 %s14, 2
        // Predicated region
        $region49: #{transformer_forward.33} parent=47 // pred_check
          %p361 = pneg %p153
        $region50: #{transformer_forward.33} parent=47 // pred_check_branch
          %363 = sbr.rel (%p361) target = $region52
        $region51: #{transformer_forward.33} parent=47 // pred_region
          %s364 = sand.u32 %s138, 1
          %s365 = scalar_lea.sflag [#allocation3], %s364
          %s366 = sand.u32 %s138, 1
          %s367 = smul.addr %s366, 8
          %s368 = scalar_lea.vmem [#allocation2], %s367
          %369 = dma.done %s365, 128
        $region52: #{transformer_forward.33} parent=47 // pred_fallthru
          _
      $region48: #{transformer_forward.33} parent=5 // pred_fallthru
        _
    $region6: #{transformer_forward.33} parent=1 // loop_footer
      %s18 = sadd.s32 1, %s14
    $region7: #{transformer_forward.33} parent=1 // loop_footer_branch
      %13 = sbr.rel target = $region3
    $region8: #{transformer_forward.33} parent=1 // loop_exit
      _
    %370 = vsyncpa [#allocation3], 1
    %s371 = scalar_lea.sflag [#allocation3], 1
    %372 = vsyncpa %s371, 1

</llo_original>
